<compile_context>
chip_gen: v7x
topology: tpu7x:2x2x1
jax: 0.10.0
libtpu: 0.0.40
codegen_flags: <defaults>
</compile_context>

<pallas_src>
import jax
import jax.numpy as jnp
from jax import lax
from jax.experimental import pallas as pl
from jax.experimental.pallas import tpu as pltpu

# Small synthetic sizes consistent with the module's forward.
L = 2    # num_layers (== stm.memory.size(0))
B = 2    # batch
M = 8    # STM slots per layer (query length)
S = 8    # sequence length of encoded data (key/value length)
D = 32   # embed dim
H = 2    # attention heads
DH = D // H
EPS = 1e-5
_PREC = lax.Precision.HIGHEST


def _stm_attn_kernel(mask_ref, x_ref, mem_ref,
                     wqkv_ref, wo_ref, g_ref, beta_ref, out_ref):
    mem = mem_ref[0]             # (B, M, D)  layer-i STM (all batch elements)
    xk = x_ref[0]                # (B, S, D)  encoded layer data
    maskb = mask_ref[...] > 0.5  # (B, 1, S)
    w_qkv = wqkv_ref[0]          # (D, 3D)    [Wq | Wk | Wv]
    wo = wo_ref[0]               # (D, D)
    gamma = g_ref[0]             # (1, D)
    beta = beta_ref[0]           # (1, D)

    # --- memory_norm_layers[i]: LayerNorm over embed dim (f32) ---
    mu = jnp.mean(mem, axis=-1, keepdims=True)
    var = jnp.mean((mem - mu) ** 2, axis=-1, keepdims=True)
    norm = (mem - mu) * lax.rsqrt(var + EPS) * gamma + beta        # (B, M, D)

    # --- fused Q/K/V projection: one MXU dot instead of three ---
    comb = jnp.concatenate([norm, xk], axis=1)                     # (B, M+S, D)
    comb2 = comb.reshape(B * (M + S), D)                           # leading-dim merge
    proj = jnp.dot(comb2, w_qkv,
                   preferred_element_type=jnp.float32, precision=_PREC)
    proj = proj.reshape(B, M + S, 3 * D)                           # (B, M+S, 3D)
    q = proj[:, :M, 0:D]                                           # norm @ Wq  (B, M, D)
    k = proj[:, M:, D:2 * D]                                       # x    @ Wk  (B, S, D)
    v = proj[:, M:, 2 * D:3 * D]                                   # x    @ Wv  (B, S, D)

    scale = jnp.float32(1.0 / (DH ** 0.5))
    neg = jnp.float32(-1e9)

    # --- multi-head attention; heads accumulated through Wo row-slices ---
    out_flat = None
    for h in range(H):                       # static loop, H=2
        sl = slice(h * DH, (h + 1) * DH)
        qh = q[:, :, sl]                     # (B, M, DH)
        kh = k[:, :, sl]                     # (B, S, DH)
        vh = v[:, :, sl]                     # (B, S, DH)
        # contract on last dim (no kh.T materialization)
        s = jnp.einsum('bmd,bsd->bms', qh, kh,
                       preferred_element_type=jnp.float32,
                       precision=_PREC) * scale                    # (B, M, S)
        s = jnp.where(maskb, s, neg)
        s = s - jnp.max(s, axis=-1, keepdims=True)
        p = jnp.exp(s)
        p = p / jnp.sum(p, axis=-1, keepdims=True)                 # exact softmax
        oh = jnp.einsum('bms,bsd->bmd', p, vh,
                        preferred_element_type=jnp.float32,
                        precision=_PREC)                           # (B, M, DH)
        contrib = jnp.dot(oh.reshape(B * M, DH), wo[sl, :],
                          preferred_element_type=jnp.float32,
                          precision=_PREC)                         # (B*M, D)
        out_flat = contrib if out_flat is None else out_flat + contrib

    # residual: new_stm[i] = new_layer_stm + layer_stm
    new_mem = out_flat.reshape(B, M, D) + mem                      # (B, M, D)

    # lane-dense output slab (B, M*D = 256): unmasked 128-lane stores.
    out_ref[0] = jnp.concatenate([new_mem[:, m, :] for m in range(M)], axis=-1)


def stm_memory_attention(x, memory, attention_mask, params):
    """Returns the updated STM memory of shape (L, B, M, D)."""
    # Fuse the three projection weights once at the call boundary.
    w_qkv = jnp.concatenate([params["wq"], params["wk"], params["wv"]], axis=-1)
    wo = params["wo"]
    gamma3 = params["gamma"].reshape(L, 1, D)
    beta3 = params["beta"].reshape(L, 1, D)
    mask3 = attention_mask.reshape(B, 1, S).astype(jnp.float32)

    out_flat = pl.pallas_call(
        _stm_attn_kernel,
        out_shape=jax.ShapeDtypeStruct((L, B, M * D), jnp.float32),
        grid_spec=pl.GridSpec(
            grid=(L,),
            in_specs=[
                pl.BlockSpec((B, 1, S), lambda l: (0, 0, 0)),          # mask (layer-invariant)
                pl.BlockSpec((1, B, S, D), lambda l: (l, 0, 0, 0)),    # x
                pl.BlockSpec((1, B, M, D), lambda l: (l, 0, 0, 0)),    # memory
                pl.BlockSpec((1, D, 3 * D), lambda l: (l, 0, 0)),      # [Wq|Wk|Wv]
                pl.BlockSpec((1, D, D), lambda l: (l, 0, 0)),          # Wo
                pl.BlockSpec((1, 1, D), lambda l: (l, 0, 0)),          # gamma
                pl.BlockSpec((1, 1, D), lambda l: (l, 0, 0)),          # beta
            ],
            out_specs=pl.BlockSpec((1, B, M * D), lambda l: (l, 0, 0)),
        ),
        compiler_params=pltpu.CompilerParams(
            dimension_semantics=("parallel",)),
    )(mask3, x, memory, w_qkv, wo, gamma3, beta3)

    return out_flat.reshape(L, B, M, D)


def _reference(x, memory, attention_mask, p):
    """Pure-JAX reference mirroring the PyTorch forward semantics."""
    mask = attention_mask[:, None, None, :]  # (B,1,1,S) like unsqueeze(1).unsqueeze(1)
    outs = []
    for i in range(L):
        layer_stm = memory[i]                                   # (B, M, D)
        mu = jnp.mean(layer_stm, -1, keepdims=True)
        var = jnp.mean((layer_stm - mu) ** 2, -1, keepdims=True)
        norm = (layer_stm - mu) / jnp.sqrt(var + EPS) * p["gamma"][i] + p["beta"][i]
        q = jnp.einsum('bmd,de->bme', norm, p["wq"][i], precision=_PREC)
        k = jnp.einsum('bsd,de->bse', x[i], p["wk"][i], precision=_PREC)
        v = jnp.einsum('bsd,de->bse', x[i], p["wv"][i], precision=_PREC)
        qh = q.reshape(B, M, H, DH).transpose(0, 2, 1, 3)
        kh = k.reshape(B, S, H, DH).transpose(0, 2, 1, 3)
        vh = v.reshape(B, S, H, DH).transpose(0, 2, 1, 3)
        s = jnp.einsum('bhmd,bhsd->bhms', qh, kh,
                       precision=_PREC) / jnp.sqrt(jnp.float32(DH))
        s = jnp.where(mask > 0.5, s, -1e9)
        att = jax.nn.softmax(s, axis=-1)
        o = jnp.einsum('bhms,bhsd->bhmd', att, vh,
                       precision=_PREC).transpose(0, 2, 1, 3).reshape(B, M, D)
        o = jnp.einsum('bmd,de->bme', o, p["wo"][i], precision=_PREC)
        outs.append(o + layer_stm)                              # residual
    return jnp.stack(outs)                                      # stm.update_all(new_stm)


if __name__ == "__main__":
    key = jax.random.PRNGKey(0)
    ks = jax.random.split(key, 9)

    x = jax.random.normal(ks[0], (L, B, S, D), jnp.float32)
    memory = jax.random.normal(ks[1], (L, B, M, D), jnp.float32)

    # attention_mask: batch 0 fully visible, batch 1 masks the last 3 keys.
    attention_mask = jnp.ones((B, S), jnp.float32)
    attention_mask = attention_mask.at[1, S - 3:].set(0.0)

    # Deterministic per-layer parameter init (synthetic, no checkpoint).
    scale = 1.0 / (D ** 0.5)
    params = {
        "wq": jax.random.normal(ks[2], (L, D, D), jnp.float32) * scale,
        "wk": jax.random.normal(ks[3], (L, D, D), jnp.float32) * scale,
        "wv": jax.random.normal(ks[4], (L, D, D), jnp.float32) * scale,
        "wo": jax.random.normal(ks[5], (L, D, D), jnp.float32) * scale,
        "gamma": jnp.ones((L, D), jnp.float32)
                 + 0.1 * jax.random.normal(ks[6], (L, D), jnp.float32),
        "beta": 0.1 * jax.random.normal(ks[7], (L, D), jnp.float32),
    }

    # Pin matmul precision for both paths (guards against default bf16 MXU
    # passes on f32 inputs skewing the comparison on the TPU backend).
    with jax.default_matmul_precision("highest"):
        out = stm_memory_attention(x, memory, attention_mask, params)
        out = jax.block_until_ready(out)
        ref = jax.block_until_ready(_reference(x, memory, attention_mask, params))

    assert out.shape == (L, B, M, D)
    assert jnp.allclose(out, ref, atol=1e-3, rtol=1e-3), "mismatch vs reference"

    # TODO(synk): rope (rotary embedding) path is omitted — module allows rope=None.
    print("KERNEL_OK")
</pallas_src>

<mosaic_0001>
module attributes {stable_mosaic.version = 11 : i64} {
  func.func @_stm_attn_kernel(%arg0: i32, %arg1: memref<2x1x8xf32, #tpu.memory_space<vmem>>, %arg2: memref<1x2x8x32xf32, #tpu.memory_space<vmem>>, %arg3: memref<1x2x8x32xf32, #tpu.memory_space<vmem>>, %arg4: memref<1x32x96xf32, #tpu.memory_space<vmem>>, %arg5: memref<1x32x32xf32, #tpu.memory_space<vmem>>, %arg6: memref<1x1x32xf32, #tpu.memory_space<vmem>>, %arg7: memref<1x1x32xf32, #tpu.memory_space<vmem>>, %arg8: memref<1x2x256xf32, #tpu.memory_space<vmem>>) attributes {dimension_semantics = [#tpu.dimension_semantics<parallel>], iteration_bounds = array<i64: 2>, scalar_prefetch = 0 : i64, scratch_operands = 0 : i64, tpu.core_type = #tpu.core_type<tc>, window_params = [{pipeline_mode = #tpu.pipeline_mode<synchronous>, transform_indices = @transform_0, window_bounds = array<i64: 2, 1, 8>}, {transform_indices = @transform_1, window_bounds = array<i64: 1, 2, 8, 32>}, {transform_indices = @transform_2, window_bounds = array<i64: 1, 2, 8, 32>}, {transform_indices = @transform_3, window_bounds = array<i64: 1, 32, 96>}, {transform_indices = @transform_4, window_bounds = array<i64: 1, 32, 32>}, {transform_indices = @transform_5, window_bounds = array<i64: 1, 1, 32>}, {transform_indices = @transform_6, window_bounds = array<i64: 1, 1, 32>}, {transform_indices = @transform_7, window_bounds = array<i64: 1, 2, 256>}]} {
    %c0 = arith.constant 0 : index
    %c0_0 = arith.constant 0 : index
    %c0_1 = arith.constant 0 : index
    %c0_2 = arith.constant 0 : index
    %0 = vector.load %arg3[%c0, %c0_0, %c0_1, %c0_2] : memref<1x2x8x32xf32, #tpu.memory_space<vmem>>, vector<1x2x8x32xf32>
    %1 = vector.shape_cast %0 : vector<1x2x8x32xf32> to vector<2x8x32xf32>
    %c0_3 = arith.constant 0 : index
    %c0_4 = arith.constant 0 : index
    %c0_5 = arith.constant 0 : index
    %c0_6 = arith.constant 0 : index
    %2 = vector.load %arg2[%c0_3, %c0_4, %c0_5, %c0_6] : memref<1x2x8x32xf32, #tpu.memory_space<vmem>>, vector<1x2x8x32xf32>
    %3 = vector.shape_cast %2 : vector<1x2x8x32xf32> to vector<2x8x32xf32>
    %c0_7 = arith.constant 0 : index
    %c0_8 = arith.constant 0 : index
    %c0_9 = arith.constant 0 : index
    %4 = vector.load %arg1[%c0_7, %c0_8, %c0_9] : memref<2x1x8xf32, #tpu.memory_space<vmem>>, vector<2x1x8xf32>
    %cst = arith.constant 5.000000e-01 : f32
    %5 = vector.broadcast %cst : f32 to vector<2x1x8xf32>
    %6 = arith.cmpf ogt, %4, %5 : vector<2x1x8xf32>
    %c0_10 = arith.constant 0 : index
    %c0_11 = arith.constant 0 : index
    %c0_12 = arith.constant 0 : index
    %7 = vector.load %arg4[%c0_10, %c0_11, %c0_12] : memref<1x32x96xf32, #tpu.memory_space<vmem>>, vector<1x32x96xf32>
    %8 = vector.shape_cast %7 : vector<1x32x96xf32> to vector<32x96xf32>
    %c0_13 = arith.constant 0 : index
    %c0_14 = arith.constant 0 : index
    %c0_15 = arith.constant 0 : index
    %9 = vector.load %arg5[%c0_13, %c0_14, %c0_15] : memref<1x32x32xf32, #tpu.memory_space<vmem>>, vector<1x32x32xf32>
    %10 = vector.shape_cast %9 : vector<1x32x32xf32> to vector<32x32xf32>
    %c0_16 = arith.constant 0 : index
    %c0_17 = arith.constant 0 : index
    %c0_18 = arith.constant 0 : index
    %11 = vector.load %arg6[%c0_16, %c0_17, %c0_18] : memref<1x1x32xf32, #tpu.memory_space<vmem>>, vector<1x1x32xf32>
    %12 = vector.shape_cast %11 : vector<1x1x32xf32> to vector<1x32xf32>
    %c0_19 = arith.constant 0 : index
    %c0_20 = arith.constant 0 : index
    %c0_21 = arith.constant 0 : index
    %13 = vector.load %arg7[%c0_19, %c0_20, %c0_21] : memref<1x1x32xf32, #tpu.memory_space<vmem>>, vector<1x1x32xf32>
    %14 = vector.shape_cast %13 : vector<1x1x32xf32> to vector<1x32xf32>
    %cst_22 = arith.constant dense<0.000000e+00> : vector<2x8xf32>
    %15 = vector.multi_reduction <add>, %1, %cst_22 [2] : vector<2x8x32xf32> to vector<2x8xf32>
    %16 = vector.shape_cast %15 : vector<2x8xf32> to vector<2x8x1xf32>
    %cst_23 = arith.constant 3.200000e+01 : f32
    %17 = vector.broadcast %cst_23 : f32 to vector<2x8x1xf32>
    %18 = arith.divf %16, %17 : vector<2x8x1xf32>
    %19 = vector.broadcast %18 : vector<2x8x1xf32> to vector<2x8x32xf32>
    %20 = arith.subf %1, %19 : vector<2x8x32xf32>
    %21 = arith.mulf %20, %20 : vector<2x8x32xf32>
    %cst_24 = arith.constant dense<0.000000e+00> : vector<2x8xf32>
    %22 = vector.multi_reduction <add>, %21, %cst_24 [2] : vector<2x8x32xf32> to vector<2x8xf32>
    %23 = vector.shape_cast %22 : vector<2x8xf32> to vector<2x8x1xf32>
    %cst_25 = arith.constant 3.200000e+01 : f32
    %24 = vector.broadcast %cst_25 : f32 to vector<2x8x1xf32>
    %25 = arith.divf %23, %24 : vector<2x8x1xf32>
    %26 = vector.broadcast %18 : vector<2x8x1xf32> to vector<2x8x32xf32>
    %27 = arith.subf %1, %26 : vector<2x8x32xf32>
    %cst_26 = arith.constant 9.99999974E-6 : f32
    %28 = vector.broadcast %cst_26 : f32 to vector<2x8x1xf32>
    %29 = arith.addf %25, %28 : vector<2x8x1xf32>
    %30 = math.rsqrt %29 : vector<2x8x1xf32>
    %31 = vector.broadcast %30 : vector<2x8x1xf32> to vector<2x8x32xf32>
    %32 = arith.mulf %27, %31 : vector<2x8x32xf32>
    %33 = vector.shape_cast %12 : vector<1x32xf32> to vector<1x1x32xf32>
    %34 = vector.broadcast %33 : vector<1x1x32xf32> to vector<2x8x32xf32>
    %35 = arith.mulf %32, %34 : vector<2x8x32xf32>
    %36 = vector.shape_cast %14 : vector<1x32xf32> to vector<1x1x32xf32>
    %37 = vector.broadcast %36 : vector<1x1x32xf32> to vector<2x8x32xf32>
    %38 = arith.addf %35, %37 : vector<2x8x32xf32>
    %39 = tpu.concatenate %38, %3 in 1 : vector<2x8x32xf32>, vector<2x8x32xf32> -> vector<2x16x32xf32>
    %40 = vector.shape_cast %39 : vector<2x16x32xf32> to vector<32x32xf32>
    %cst_27 = arith.constant dense<0.000000e+00> : vector<32x96xf32>
    %41 = tpu.matmul %40, %8, %cst_27 {dimension_numbers = #tpu.dot_dimension_numbers<[1], [0], [0], [1], [0, 0, 1, 1], [], []>, precision = #tpu.contract_precision<fp32>} : vector<32x32xf32>, vector<32x96xf32>, vector<32x96xf32> -> vector<32x96xf32>
    %42 = vector.shape_cast %41 : vector<32x96xf32> to vector<2x16x96xf32>
    %43 = vector.extract_strided_slice %42 {offsets = [0, 0, 0], sizes = [2, 8, 32], strides = [1, 1, 1]} : vector<2x16x96xf32> to vector<2x8x32xf32>
    %44 = vector.extract_strided_slice %42 {offsets = [0, 8, 32], sizes = [2, 8, 32], strides = [1, 1, 1]} : vector<2x16x96xf32> to vector<2x8x32xf32>
    %45 = vector.extract_strided_slice %42 {offsets = [0, 8, 64], sizes = [2, 8, 32], strides = [1, 1, 1]} : vector<2x16x96xf32> to vector<2x8x32xf32>
    %46 = vector.extract_strided_slice %43 {offsets = [0, 0, 0], sizes = [2, 8, 16], strides = [1, 1, 1]} : vector<2x8x32xf32> to vector<2x8x16xf32>
    %47 = vector.extract_strided_slice %44 {offsets = [0, 0, 0], sizes = [2, 8, 16], strides = [1, 1, 1]} : vector<2x8x32xf32> to vector<2x8x16xf32>
    %48 = vector.extract_strided_slice %45 {offsets = [0, 0, 0], sizes = [2, 8, 16], strides = [1, 1, 1]} : vector<2x8x32xf32> to vector<2x8x16xf32>
    "tpu.trace_start"() <{level = 10 : i32, message = "bmd,bsd->bms"}> : () -> ()
    %cst_28 = arith.constant dense<0.000000e+00> : vector<2x8x8xf32>
    %49 = tpu.matmul %46, %47, %cst_28 {dimension_numbers = #tpu.dot_dimension_numbers<[2], [2], [1], [1], [0, 0, 0, 1, 1, 1], [0], [0]>, precision = #tpu.contract_precision<fp32>} : vector<2x8x16xf32>, vector<2x8x16xf32>, vector<2x8x8xf32> -> vector<2x8x8xf32>
    "tpu.trace_stop"() : () -> ()
    %cst_29 = arith.constant 2.500000e-01 : f32
    %50 = vector.broadcast %cst_29 : f32 to vector<2x8x8xf32>
    %51 = arith.mulf %49, %50 : vector<2x8x8xf32>
    %cst_30 = arith.constant -1.000000e+09 : f32
    %52 = vector.shape_cast %6 : vector<2x1x8xi1> to vector<2x1x8xi1>
    %53 = vector.broadcast %52 : vector<2x1x8xi1> to vector<2x8x8xi1>
    %54 = vector.broadcast %cst_30 : f32 to vector<2x8x8xf32>
    %55 = arith.select %53, %51, %54 : vector<2x8x8xi1>, vector<2x8x8xf32>
    %cst_31 = arith.constant dense<0xFF800000> : vector<2x8xf32>
    %56 = vector.multi_reduction <maximumf>, %55, %cst_31 [2] : vector<2x8x8xf32> to vector<2x8xf32>
    %57 = vector.shape_cast %56 : vector<2x8xf32> to vector<2x8x1xf32>
    %58 = vector.broadcast %57 : vector<2x8x1xf32> to vector<2x8x8xf32>
    %59 = arith.subf %55, %58 : vector<2x8x8xf32>
    %60 = math.exp %59 : vector<2x8x8xf32>
    %cst_32 = arith.constant dense<0.000000e+00> : vector<2x8xf32>
    %61 = vector.multi_reduction <add>, %60, %cst_32 [2] : vector<2x8x8xf32> to vector<2x8xf32>
    %62 = vector.shape_cast %61 : vector<2x8xf32> to vector<2x8x1xf32>
    %63 = vector.broadcast %62 : vector<2x8x1xf32> to vector<2x8x8xf32>
    %64 = arith.divf %60, %63 : vector<2x8x8xf32>
    "tpu.trace_start"() <{level = 10 : i32, message = "bms,bsd->bmd"}> : () -> ()
    %cst_33 = arith.constant dense<0.000000e+00> : vector<2x8x16xf32>
    %65 = tpu.matmul %64, %48, %cst_33 {dimension_numbers = #tpu.dot_dimension_numbers<[2], [1], [1], [2], [0, 0, 0, 1, 1, 2], [0], [0]>, precision = #tpu.contract_precision<fp32>} : vector<2x8x8xf32>, vector<2x8x16xf32>, vector<2x8x16xf32> -> vector<2x8x16xf32>
    "tpu.trace_stop"() : () -> ()
    %66 = vector.shape_cast %65 : vector<2x8x16xf32> to vector<16x16xf32>
    %67 = vector.extract_strided_slice %10 {offsets = [0, 0], sizes = [16, 32], strides = [1, 1]} : vector<32x32xf32> to vector<16x32xf32>
    %cst_34 = arith.constant dense<0.000000e+00> : vector<16x32xf32>
    %68 = tpu.matmul %66, %67, %cst_34 {dimension_numbers = #tpu.dot_dimension_numbers<[1], [0], [0], [1], [0, 0, 1, 1], [], []>, precision = #tpu.contract_precision<fp32>} : vector<16x16xf32>, vector<16x32xf32>, vector<16x32xf32> -> vector<16x32xf32>
    %69 = vector.extract_strided_slice %43 {offsets = [0, 0, 16], sizes = [2, 8, 16], strides = [1, 1, 1]} : vector<2x8x32xf32> to vector<2x8x16xf32>
    %70 = vector.extract_strided_slice %44 {offsets = [0, 0, 16], sizes = [2, 8, 16], strides = [1, 1, 1]} : vector<2x8x32xf32> to vector<2x8x16xf32>
    %71 = vector.extract_strided_slice %45 {offsets = [0, 0, 16], sizes = [2, 8, 16], strides = [1, 1, 1]} : vector<2x8x32xf32> to vector<2x8x16xf32>
    "tpu.trace_start"() <{level = 10 : i32, message = "bmd,bsd->bms"}> : () -> ()
    %cst_35 = arith.constant dense<0.000000e+00> : vector<2x8x8xf32>
    %72 = tpu.matmul %69, %70, %cst_35 {dimension_numbers = #tpu.dot_dimension_numbers<[2], [2], [1], [1], [0, 0, 0, 1, 1, 1], [0], [0]>, precision = #tpu.contract_precision<fp32>} : vector<2x8x16xf32>, vector<2x8x16xf32>, vector<2x8x8xf32> -> vector<2x8x8xf32>
    "tpu.trace_stop"() : () -> ()
    %cst_36 = arith.constant 2.500000e-01 : f32
    %73 = vector.broadcast %cst_36 : f32 to vector<2x8x8xf32>
    %74 = arith.mulf %72, %73 : vector<2x8x8xf32>
    %cst_37 = arith.constant -1.000000e+09 : f32
    %75 = vector.shape_cast %6 : vector<2x1x8xi1> to vector<2x1x8xi1>
    %76 = vector.broadcast %75 : vector<2x1x8xi1> to vector<2x8x8xi1>
    %77 = vector.broadcast %cst_37 : f32 to vector<2x8x8xf32>
    %78 = arith.select %76, %74, %77 : vector<2x8x8xi1>, vector<2x8x8xf32>
    %cst_38 = arith.constant dense<0xFF800000> : vector<2x8xf32>
    %79 = vector.multi_reduction <maximumf>, %78, %cst_38 [2] : vector<2x8x8xf32> to vector<2x8xf32>
    %80 = vector.shape_cast %79 : vector<2x8xf32> to vector<2x8x1xf32>
    %81 = vector.broadcast %80 : vector<2x8x1xf32> to vector<2x8x8xf32>
    %82 = arith.subf %78, %81 : vector<2x8x8xf32>
    %83 = math.exp %82 : vector<2x8x8xf32>
    %cst_39 = arith.constant dense<0.000000e+00> : vector<2x8xf32>
    %84 = vector.multi_reduction <add>, %83, %cst_39 [2] : vector<2x8x8xf32> to vector<2x8xf32>
    %85 = vector.shape_cast %84 : vector<2x8xf32> to vector<2x8x1xf32>
    %86 = vector.broadcast %85 : vector<2x8x1xf32> to vector<2x8x8xf32>
    %87 = arith.divf %83, %86 : vector<2x8x8xf32>
    "tpu.trace_start"() <{level = 10 : i32, message = "bms,bsd->bmd"}> : () -> ()
    %cst_40 = arith.constant dense<0.000000e+00> : vector<2x8x16xf32>
    %88 = tpu.matmul %87, %71, %cst_40 {dimension_numbers = #tpu.dot_dimension_numbers<[2], [1], [1], [2], [0, 0, 0, 1, 1, 2], [0], [0]>, precision = #tpu.contract_precision<fp32>} : vector<2x8x8xf32>, vector<2x8x16xf32>, vector<2x8x16xf32> -> vector<2x8x16xf32>
    "tpu.trace_stop"() : () -> ()
    %89 = vector.shape_cast %88 : vector<2x8x16xf32> to vector<16x16xf32>
    %90 = vector.extract_strided_slice %10 {offsets = [16, 0], sizes = [16, 32], strides = [1, 1]} : vector<32x32xf32> to vector<16x32xf32>
    %cst_41 = arith.constant dense<0.000000e+00> : vector<16x32xf32>
    %91 = tpu.matmul %89, %90, %cst_41 {dimension_numbers = #tpu.dot_dimension_numbers<[1], [0], [0], [1], [0, 0, 1, 1], [], []>, precision = #tpu.contract_precision<fp32>} : vector<16x16xf32>, vector<16x32xf32>, vector<16x32xf32> -> vector<16x32xf32>
    %92 = arith.addf %68, %91 : vector<16x32xf32>
    %93 = vector.shape_cast %92 : vector<16x32xf32> to vector<2x8x32xf32>
    %94 = arith.addf %93, %1 : vector<2x8x32xf32>
    %95 = vector.extract_strided_slice %94 {offsets = [0, 0, 0], sizes = [2, 1, 32], strides = [1, 1, 1]} : vector<2x8x32xf32> to vector<2x1x32xf32>
    %96 = vector.shape_cast %95 : vector<2x1x32xf32> to vector<2x32xf32>
    %97 = vector.extract_strided_slice %94 {offsets = [0, 1, 0], sizes = [2, 1, 32], strides = [1, 1, 1]} : vector<2x8x32xf32> to vector<2x1x32xf32>
    %98 = vector.shape_cast %97 : vector<2x1x32xf32> to vector<2x32xf32>
    %99 = vector.extract_strided_slice %94 {offsets = [0, 2, 0], sizes = [2, 1, 32], strides = [1, 1, 1]} : vector<2x8x32xf32> to vector<2x1x32xf32>
    %100 = vector.shape_cast %99 : vector<2x1x32xf32> to vector<2x32xf32>
    %101 = vector.extract_strided_slice %94 {offsets = [0, 3, 0], sizes = [2, 1, 32], strides = [1, 1, 1]} : vector<2x8x32xf32> to vector<2x1x32xf32>
    %102 = vector.shape_cast %101 : vector<2x1x32xf32> to vector<2x32xf32>
    %103 = vector.extract_strided_slice %94 {offsets = [0, 4, 0], sizes = [2, 1, 32], strides = [1, 1, 1]} : vector<2x8x32xf32> to vector<2x1x32xf32>
    %104 = vector.shape_cast %103 : vector<2x1x32xf32> to vector<2x32xf32>
    %105 = vector.extract_strided_slice %94 {offsets = [0, 5, 0], sizes = [2, 1, 32], strides = [1, 1, 1]} : vector<2x8x32xf32> to vector<2x1x32xf32>
    %106 = vector.shape_cast %105 : vector<2x1x32xf32> to vector<2x32xf32>
    %107 = vector.extract_strided_slice %94 {offsets = [0, 6, 0], sizes = [2, 1, 32], strides = [1, 1, 1]} : vector<2x8x32xf32> to vector<2x1x32xf32>
    %108 = vector.shape_cast %107 : vector<2x1x32xf32> to vector<2x32xf32>
    %109 = vector.extract_strided_slice %94 {offsets = [0, 7, 0], sizes = [2, 1, 32], strides = [1, 1, 1]} : vector<2x8x32xf32> to vector<2x1x32xf32>
    %110 = vector.shape_cast %109 : vector<2x1x32xf32> to vector<2x32xf32>
    %111 = tpu.concatenate %96, %98, %100, %102, %104, %106, %108, %110 in 1 : vector<2x32xf32>, vector<2x32xf32>, vector<2x32xf32>, vector<2x32xf32>, vector<2x32xf32>, vector<2x32xf32>, vector<2x32xf32>, vector<2x32xf32> -> vector<2x256xf32>
    %c0_42 = arith.constant 0 : index
    %c0_43 = arith.constant 0 : index
    %c0_44 = arith.constant 0 : index
    %112 = vector.load %arg8[%c0_42, %c0_43, %c0_44] : memref<1x2x256xf32, #tpu.memory_space<vmem>>, vector<1x2x256xf32>
    %113 = vector.shape_cast %112 : vector<1x2x256xf32> to vector<2x256xf32>
    %114 = vector.shape_cast %111 : vector<2x256xf32> to vector<1x2x256xf32>
    tpu.vector_store %arg8[%c0_42, %c0_43, %c0_44], %114 {strides = array<i32>} : memref<1x2x256xf32, #tpu.memory_space<vmem>>, vector<1x2x256xf32>,
    return
  }
  func.func @transform_0(%arg0: i32) -> (i32, i32, i32) {
    %c0_i32 = arith.constant 0 : i32
    %c0_i32_0 = arith.constant 0 : i32
    %c0_i32_1 = arith.constant 0 : i32
    %c0_i32_2 = arith.constant 0 : i32
    return %c0_i32, %c0_i32_0, %c0_i32_1 : i32, i32, i32
  }
  func.func @transform_1(%arg0: i32) -> (i32, i32, i32, i32) {
    %c0_i32 = arith.constant 0 : i32
    %c0_i32_0 = arith.constant 0 : i32
    %c0_i32_1 = arith.constant 0 : i32
    %c0_i32_2 = arith.constant 0 : i32
    return %arg0, %c0_i32, %c0_i32_0, %c0_i32_1 : i32, i32, i32, i32
  }
  func.func @transform_2(%arg0: i32) -> (i32, i32, i32, i32) {
    %c0_i32 = arith.constant 0 : i32
    %c0_i32_0 = arith.constant 0 : i32
    %c0_i32_1 = arith.constant 0 : i32
    %c0_i32_2 = arith.constant 0 : i32
    return %arg0, %c0_i32, %c0_i32_0, %c0_i32_1 : i32, i32, i32, i32
  }
  func.func @transform_3(%arg0: i32) -> (i32, i32, i32) {
    %c0_i32 = arith.constant 0 : i32
    %c0_i32_0 = arith.constant 0 : i32
    %c0_i32_1 = arith.constant 0 : i32
    return %arg0, %c0_i32, %c0_i32_0 : i32, i32, i32
  }
  func.func @transform_4(%arg0: i32) -> (i32, i32, i32) {
    %c0_i32 = arith.constant 0 : i32
    %c0_i32_0 = arith.constant 0 : i32
    %c0_i32_1 = arith.constant 0 : i32
    return %arg0, %c0_i32, %c0_i32_0 : i32, i32, i32
  }
  func.func @transform_5(%arg0: i32) -> (i32, i32, i32) {
    %c0_i32 = arith.constant 0 : i32
    %c0_i32_0 = arith.constant 0 : i32
    %c0_i32_1 = arith.constant 0 : i32
    return %arg0, %c0_i32, %c0_i32_0 : i32, i32, i32
  }
  func.func @transform_6(%arg0: i32) -> (i32, i32, i32) {
    %c0_i32 = arith.constant 0 : i32
    %c0_i32_0 = arith.constant 0 : i32
    %c0_i32_1 = arith.constant 0 : i32
    return %arg0, %c0_i32, %c0_i32_0 : i32, i32, i32
  }
  func.func @transform_7(%arg0: i32) -> (i32, i32, i32) {
    %c0_i32 = arith.constant 0 : i32
    %c0_i32_0 = arith.constant 0 : i32
    %c0_i32_1 = arith.constant 0 : i32
    return %arg0, %c0_i32, %c0_i32_0 : i32, i32, i32
  }
}

</mosaic_0001>

<llo_original>
// kernel: tpu_custom_call.1
$region0: #{tpu_custom_call.1}
  #allocation0 [shape = 'u32[]', space=smem, size = 0x4, offset = 0x4, fixed_abs, tag = 'smem constant byte address 0x4 - core index']
  #allocation1 [shape = 'u32[144,128]{1,0:T(1,128)}', space=vmem, size = 0x12000, scoped, tag = 'internal scratch']
  %s0 = inlined_call_operand.hbm [shape: f32[2,1,8], index: 0, kind: input, shape index: {}]
  %s1 = inlined_call_operand.hbm [shape: f32[2,2,8,32], index: 1, kind: input, shape index: {}]
  %s2 = inlined_call_operand.hbm [shape: f32[2,2,8,32], index: 2, kind: input, shape index: {}]
  %s3 = inlined_call_operand.hbm [shape: f32[2,32,96], index: 3, kind: input, shape index: {}]
  %s4 = inlined_call_operand.hbm [shape: f32[2,32,32], index: 4, kind: input, shape index: {}]
  %s5 = inlined_call_operand.vmem [shape: f32[2,1,32], index: 5, kind: input, shape index: {}]
  %s6 = inlined_call_operand.vmem [shape: f32[2,1,32], index: 6, kind: input, shape index: {}]
  %s7 = inlined_call_operand.hbm [shape: f32[2,2,256], index: 7, kind: output, shape index: {}]
  %s8 = sld [smem:[#allocation0]]
  $region81: #{tpu_custom_call.1} parent=0
    _
  %s10 = ssub.s32 1, %s8
  %s11 = scalar_select 0, %s10, %s8
  $region1: #{tpu_custom_call.1} parent=0
    #allocation2 [shape = 'u8[1024]{0}', space=vmem, size = 0x400, scoped, tag = 'input window, operand 0, single buffered']
    #allocation3 [shape = 's32[2]{0}', space=sflag, size = 0x8, scoped, tag = 'scoped memory for tpu_custom_call.1']
    #allocation4 [shape = 's32[2]{0}', space=sflag, size = 0x8, scoped, tag = 'scoped memory for tpu_custom_call.1']
    #allocation5 [shape = 'u8[16384]{0}', space=vmem, size = 0x4000, scoped, tag = 'input window, operand 1']
    #allocation6 [shape = 's32[2]{0}', space=sflag, size = 0x8, scoped, tag = 'scoped memory for tpu_custom_call.1']
    #allocation7 [shape = 'u8[16384]{0}', space=vmem, size = 0x4000, scoped, tag = 'input window, operand 2']
    #allocation8 [shape = 'u8[32768]{0}', space=vmem, size = 0x8000, scoped, tag = 'input window, operand 3']
    #allocation9 [shape = 's32[2]{0}', space=sflag, size = 0x8, scoped, tag = 'scoped memory for tpu_custom_call.1']
    #allocation10 [shape = 'u8[32768]{0}', space=vmem, size = 0x8000, scoped, tag = 'input window, operand 4']
    #allocation11 [shape = 'u8[4096]{0}', space=vmem, size = 0x1000, scoped, tag = 'output window, operand 0']
    %12 = vsyncpa [#allocation3], 0
    %13 = vsyncpa [#allocation6], 0
    %s14 = scalar_lea.sflag [#allocation6], 1
    %15 = vsyncpa %s14, 0
    %16 = vsyncpa [#allocation9], 0
    %s17 = scalar_lea.sflag [#allocation9], 1
    %18 = vsyncpa %s17, 0
    %19 = vsyncpa [#allocation4], 0
    %s20 = scalar_lea.sflag [#allocation4], 1
    %21 = vsyncpa %s20, 0
    loop: start=0, step=1, limit=4
    $region2: #{tpu_custom_call.1} parent=1 // loop_pre_header
      _
    $region3: #{tpu_custom_call.1} parent=1 // loop_header
      %s23 = sphi 0, %s27
      %p24 = scmp.ge.s32.totalorder %s23, 4
      %s31 = sphi 0, %s31
      %s33 = sphi 0, %s31
      %s34 = sphi 0, %s33
      %s48 = sphi 0, %s34
      %s54 = sphi 0, %s56
      %s57 = sphi 0, %s54
      %s58 = sphi 0, %s57
      %s74 = sphi 0, %s58
      %s80 = sphi 0, %s82
      %s83 = sphi 0, %s80
      %s84 = sphi 0, %s83
      %s100 = sphi 0, %s84
      %s106 = sphi 0, %s108
      %s109 = sphi 0, %s106
      %s110 = sphi 0, %s109
      %s126 = sphi 0, %s110
      %s132 = sphi 0, %s134
      %s135 = sphi 0, %s132
      %s136 = sphi 0, %s135
      %s152 = sphi 0, %s136
      %s158 = sphi 0, %s160
      %s161 = sphi 0, %s158
      %s162 = sphi 0, %s161
      %s178 = sphi 0, %s162
      %s184 = sphi 0, %s186
      %s187 = sphi 0, %s184
      %s188 = sphi 0, %s187
      %s204 = sphi 0, %s188
      %s210 = sphi 0, %s212
      %s213 = sphi 0, %s210
      %s214 = sphi 0, %s213
      %s230 = sphi 0, %s214
    $region4: #{tpu_custom_call.1} parent=1 // loop_header_branch
      %26 = sbr.rel (%p24) target = $region8
    $region5: #{tpu_custom_call.1} parent=1 // loop_body
      %s28 = ssub.s32 %s23, 1
      %s29 = ssub.s32 %s23, 2
      %s30 = sadd.s32 %s23, 1
      %s32 = sadd.s32 %s31, 1
      %p35 = scmp.eq.s32.totalorder %s23, 1
      %p36 = scmp.ne.s32.totalorder %s31, %s33
      %p37 = scmp.eq.s32.totalorder %s23, 0
      %p38 = por %p36, %p37
      %p39 = scmp.ne.s32.totalorder %s31, %s33
      %p40 = scmp.eq.s32.totalorder %s28, 1
      %p41 = por %p39, %p40
      %p42 = scmp.ne.s32.totalorder %s33, %s34
      %p43 = scmp.eq.s32.totalorder %s28, 0
      %p44 = por %p42, %p43
      %p45 = scmp.ne.s32.totalorder %s33, %s34
      %p46 = scmp.eq.s32.totalorder %s29, 1
      %p47 = por %p45, %p46
      %p49 = scmp.ne.s32.totalorder %s34, %s48
      %p50 = scmp.eq.s32.totalorder %s29, 0
      %p51 = por %p49, %p50
      %s52 = ssub.s32 %s23, %s30
      %p53 = scmp.eq.s32.totalorder %s52, 0
      %s55 = sadd.s32 %s54, 1
      %s56 = scalar_select %p53, %s54, %s55
      %p59 = pneg %p53
      %p60 = scmp.eq.s32.totalorder %s23, 1
      %p61 = por %p59, %p60
      %p62 = scmp.ne.s32.totalorder %s54, %s57
      %p63 = scmp.eq.s32.totalorder %s23, 0
      %p64 = por %p62, %p63
      %p65 = scmp.ne.s32.totalorder %s54, %s57
      %p66 = scmp.eq.s32.totalorder %s28, 1
      %p67 = por %p65, %p66
      %p68 = scmp.ne.s32.totalorder %s57, %s58
      %p69 = scmp.eq.s32.totalorder %s28, 0
      %p70 = por %p68, %p69
      %p71 = scmp.ne.s32.totalorder %s57, %s58
      %p72 = scmp.eq.s32.totalorder %s29, 1
      %p73 = por %p71, %p72
      %p75 = scmp.ne.s32.totalorder %s58, %s74
      %p76 = scmp.eq.s32.totalorder %s29, 0
      %p77 = por %p75, %p76
      %s78 = ssub.s32 %s23, %s30
      %p79 = scmp.eq.s32.totalorder %s78, 0
      %s81 = sadd.s32 %s80, 1
      %s82 = scalar_select %p79, %s80, %s81
      %p85 = pneg %p79
      %p86 = scmp.eq.s32.totalorder %s23, 1
      %p87 = por %p85, %p86
      %p88 = scmp.ne.s32.totalorder %s80, %s83
      %p89 = scmp.eq.s32.totalorder %s23, 0
      %p90 = por %p88, %p89
      %p91 = scmp.ne.s32.totalorder %s80, %s83
      %p92 = scmp.eq.s32.totalorder %s28, 1
      %p93 = por %p91, %p92
      %p94 = scmp.ne.s32.totalorder %s83, %s84
      %p95 = scmp.eq.s32.totalorder %s28, 0
      %p96 = por %p94, %p95
      %p97 = scmp.ne.s32.totalorder %s83, %s84
      %p98 = scmp.eq.s32.totalorder %s29, 1
      %p99 = por %p97, %p98
      %p101 = scmp.ne.s32.totalorder %s84, %s100
      %p102 = scmp.eq.s32.totalorder %s29, 0
      %p103 = por %p101, %p102
      %s104 = ssub.s32 %s23, %s30
      %p105 = scmp.eq.s32.totalorder %s104, 0
      %s107 = sadd.s32 %s106, 1
      %s108 = scalar_select %p105, %s106, %s107
      %p111 = pneg %p105
      %p112 = scmp.eq.s32.totalorder %s23, 1
      %p113 = por %p111, %p112
      %p114 = scmp.ne.s32.totalorder %s106, %s109
      %p115 = scmp.eq.s32.totalorder %s23, 0
      %p116 = por %p114, %p115
      %p117 = scmp.ne.s32.totalorder %s106, %s109
      %p118 = scmp.eq.s32.totalorder %s28, 1
      %p119 = por %p117, %p118
      %p120 = scmp.ne.s32.totalorder %s109, %s110
      %p121 = scmp.eq.s32.totalorder %s28, 0
      %p122 = por %p120, %p121
      %p123 = scmp.ne.s32.totalorder %s109, %s110
      %p124 = scmp.eq.s32.totalorder %s29, 1
      %p125 = por %p123, %p124
      %p127 = scmp.ne.s32.totalorder %s110, %s126
      %p128 = scmp.eq.s32.totalorder %s29, 0
      %p129 = por %p127, %p128
      %s130 = ssub.s32 %s23, %s30
      %p131 = scmp.eq.s32.totalorder %s130, 0
      %s133 = sadd.s32 %s132, 1
      %s134 = scalar_select %p131, %s132, %s133
      %p137 = pneg %p131
      %p138 = scmp.eq.s32.totalorder %s23, 1
      %p139 = por %p137, %p138
      %p140 = scmp.ne.s32.totalorder %s132, %s135
      %p141 = scmp.eq.s32.totalorder %s23, 0
      %p142 = por %p140, %p141
      %p143 = scmp.ne.s32.totalorder %s132, %s135
      %p144 = scmp.eq.s32.totalorder %s28, 1
      %p145 = por %p143, %p144
      %p146 = scmp.ne.s32.totalorder %s135, %s136
      %p147 = scmp.eq.s32.totalorder %s28, 0
      %p148 = por %p146, %p147
      %p149 = scmp.ne.s32.totalorder %s135, %s136
      %p150 = scmp.eq.s32.totalorder %s29, 1
      %p151 = por %p149, %p150
      %p153 = scmp.ne.s32.totalorder %s136, %s152
      %p154 = scmp.eq.s32.totalorder %s29, 0
      %p155 = por %p153, %p154
      %s156 = ssub.s32 %s23, %s30
      %p157 = scmp.eq.s32.totalorder %s156, 0
      %s159 = sadd.s32 %s158, 1
      %s160 = scalar_select %p157, %s158, %s159
      %p163 = pneg %p157
      %p164 = scmp.eq.s32.totalorder %s23, 1
      %p165 = por %p163, %p164
      %p166 = scmp.ne.s32.totalorder %s158, %s161
      %p167 = scmp.eq.s32.totalorder %s23, 0
      %p168 = por %p166, %p167
      %p169 = scmp.ne.s32.totalorder %s158, %s161
      %p170 = scmp.eq.s32.totalorder %s28, 1
      %p171 = por %p169, %p170
      %p172 = scmp.ne.s32.totalorder %s161, %s162
      %p173 = scmp.eq.s32.totalorder %s28, 0
      %p174 = por %p172, %p173
      %p175 = scmp.ne.s32.totalorder %s161, %s162
      %p176 = scmp.eq.s32.totalorder %s29, 1
      %p177 = por %p175, %p176
      %p179 = scmp.ne.s32.totalorder %s162, %s178
      %p180 = scmp.eq.s32.totalorder %s29, 0
      %p181 = por %p179, %p180
      %s182 = ssub.s32 %s23, %s30
      %p183 = scmp.eq.s32.totalorder %s182, 0
      %s185 = sadd.s32 %s184, 1
      %s186 = scalar_select %p183, %s184, %s185
      %p189 = pneg %p183
      %p190 = scmp.eq.s32.totalorder %s23, 1
      %p191 = por %p189, %p190
      %p192 = scmp.ne.s32.totalorder %s184, %s187
      %p193 = scmp.eq.s32.totalorder %s23, 0
      %p194 = por %p192, %p193
      %p195 = scmp.ne.s32.totalorder %s184, %s187
      %p196 = scmp.eq.s32.totalorder %s28, 1
      %p197 = por %p195, %p196
      %p198 = scmp.ne.s32.totalorder %s187, %s188
      %p199 = scmp.eq.s32.totalorder %s28, 0
      %p200 = por %p198, %p199
      %p201 = scmp.ne.s32.totalorder %s187, %s188
      %p202 = scmp.eq.s32.totalorder %s29, 1
      %p203 = por %p201, %p202
      %p205 = scmp.ne.s32.totalorder %s188, %s204
      %p206 = scmp.eq.s32.totalorder %s29, 0
      %p207 = por %p205, %p206
      %s208 = ssub.s32 %s23, %s30
      %p209 = scmp.eq.s32.totalorder %s208, 0
      %s211 = sadd.s32 %s210, 1
      %s212 = scalar_select %p209, %s210, %s211
      %p215 = pneg %p209
      %p216 = scmp.eq.s32.totalorder %s23, 1
      %p217 = por %p215, %p216
      %p218 = scmp.ne.s32.totalorder %s210, %s213
      %p219 = scmp.eq.s32.totalorder %s23, 0
      %p220 = por %p218, %p219
      %p221 = scmp.ne.s32.totalorder %s210, %s213
      %p222 = scmp.eq.s32.totalorder %s28, 1
      %p223 = por %p221, %p222
      %p224 = scmp.ne.s32.totalorder %s213, %s214
      %p225 = scmp.eq.s32.totalorder %s28, 0
      %p226 = por %p224, %p225
      %p227 = scmp.ne.s32.totalorder %s213, %s214
      %p228 = scmp.eq.s32.totalorder %s29, 1
      %p229 = por %p227, %p228
      %p231 = scmp.ne.s32.totalorder %s214, %s230
      %p232 = scmp.eq.s32.totalorder %s29, 0
      %p233 = por %p231, %p232
      %p234 = scmp.le.s32.totalorder 1, %s23
      %p235 = scmp.lt.s32.totalorder %s23, 3
      %p236 = pnand %p234, %p235
      %p237 = pneg %p236
      // Predicated region
      $region9: #{tpu_custom_call.1} parent=5 // pred_check
        _
      $region10: #{tpu_custom_call.1} parent=5 // pred_check_branch
        %239 = sbr.rel (%p236) target = $region12
      $region11: #{tpu_custom_call.1} parent=5 // pred_region
        %s240 = ssub.s32 %s23, 1
        // Predicated region
        $region13: #{tpu_custom_call.1} parent=11 // pred_check
          %p241 = pneg %p44
        $region14: #{tpu_custom_call.1} parent=11 // pred_check_branch
          %243 = sbr.rel (%p241) target = $region16
        $region15: #{tpu_custom_call.1} parent=11 // pred_region
          %s245 = ssub.s32 32, 32
          %246 = vsyncadd [#allocation3], %s245
          %s247 = sshll.u32 [#allocation2], 4
          %s248 = int_to_ptr.vmem [resolvable:$true] %s247
          %253 = dma.hbm_to_vmem [thread:$0]  %s0, 32, %s248, [#allocation3], 16, 16, 1
        $region16: #{tpu_custom_call.1} parent=11 // pred_fallthru
          _
      $region12: #{tpu_custom_call.1} parent=5 // pred_fallthru
        _
      %p254 = scmp.lt.s32.totalorder %s23, 2
      // Predicated region
      $region17: #{tpu_custom_call.1} parent=5 // pred_check
        %p255 = pneg %p254
      $region18: #{tpu_custom_call.1} parent=5 // pred_check_branch
        %257 = sbr.rel (%p255) target = $region20
      $region19: #{tpu_custom_call.1} parent=5 // pred_region
        // Predicated region
        $region21: #{tpu_custom_call.1} parent=19 // pred_check
          %p258 = pneg %p64
        $region22: #{tpu_custom_call.1} parent=19 // pred_check_branch
          %260 = sbr.rel (%p258) target = $region24
        $region23: #{tpu_custom_call.1} parent=19 // pred_region
          %s261 = sand.u32 %s23, 1
          %s262 = scalar_lea.sflag [#allocation6], %s261
          %s263 = sand.u32 %s54, 1
          %s264 = smul.addr %s263, 16
          %s265 = scalar_lea.vmem [#allocation5], %s264
          %s267 = ssub.s32 256, 256
          %268 = vsyncadd %s262, %s267
          %s269 = smul.addr %s23, 2
          %s270 = smul.addr %s269, 128
          %s271 = scalar_lea.hbm %s1, %s270
          %s272 = sshll.u32 %s265, 4
          %s273 = int_to_ptr.vmem [resolvable:$true] %s272
          %278 = dma.hbm_to_vmem [thread:$0]  %s271, 256, %s273, %s262, 128, 128, 8
        $region24: #{tpu_custom_call.1} parent=19 // pred_fallthru
          _
        // Predicated region
        $region25: #{tpu_custom_call.1} parent=19 // pred_check
          %p279 = pneg %p90
        $region26: #{tpu_custom_call.1} parent=19 // pred_check_branch
          %281 = sbr.rel (%p279) target = $region28
        $region27: #{tpu_custom_call.1} parent=19 // pred_region
          %s282 = sand.u32 %s23, 1
          %s283 = scalar_lea.sflag [#allocation6], %s282
          %s284 = sand.u32 %s80, 1
          %s285 = smul.addr %s284, 16
          %s286 = scalar_lea.vmem [#allocation7], %s285
          %s288 = ssub.s32 256, 256
          %289 = vsyncadd %s283, %s288
          %s290 = smul.addr %s23, 2
          %s291 = smul.addr %s290, 128
          %s292 = scalar_lea.hbm %s2, %s291
          %s293 = sshll.u32 %s286, 4
          %s294 = int_to_ptr.vmem [resolvable:$true] %s293
          %299 = dma.hbm_to_vmem [thread:$0]  %s292, 256, %s294, %s283, 128, 128, 8
        $region28: #{tpu_custom_call.1} parent=19 // pred_fallthru
          _
        // Predicated region
        $region29: #{tpu_custom_call.1} parent=19 // pred_check
          %p300 = pneg %p116
        $region30: #{tpu_custom_call.1} parent=19 // pred_check_branch
          %302 = sbr.rel (%p300) target = $region32
        $region31: #{tpu_custom_call.1} parent=19 // pred_region
          %s303 = sand.u32 %s23, 1
          %s304 = scalar_lea.sflag [#allocation9], %s303
          %s305 = sand.u32 %s106, 1
          %s306 = smul.addr %s305, 32
          %s307 = scalar_lea.vmem [#allocation8], %s306
          %s309 = ssub.s32 512, 512
          %310 = vsyncadd %s304, %s309
          %s311 = smul.addr %s23, 4
          %s312 = smul.addr %s311, 128
          %s313 = scalar_lea.hbm %s3, %s312
          %s314 = sshll.u32 %s307, 4
          %s315 = int_to_ptr.vmem [resolvable:$true] %s314
          %320 = dma.hbm_to_vmem [thread:$0]  %s313, 512, %s315, %s304, 128, 128, 8
        $region32: #{tpu_custom_call.1} parent=19 // pred_fallthru
          _
        // Predicated region
        $region33: #{tpu_custom_call.1} parent=19 // pred_check
          %p321 = pneg %p142
        $region34: #{tpu_custom_call.1} parent=19 // pred_check_branch
          %323 = sbr.rel (%p321) target = $region36
        $region35: #{tpu_custom_call.1} parent=19 // pred_region
          %s324 = sand.u32 %s23, 1
          %s325 = scalar_lea.sflag [#allocation9], %s324
          %s326 = sand.u32 %s132, 1
          %s327 = smul.addr %s326, 32
          %s328 = scalar_lea.vmem [#allocation10], %s327
          %s330 = ssub.s32 512, 512
          %331 = vsyncadd %s325, %s330
          %s332 = smul.addr %s23, 4
          %s333 = smul.addr %s332, 128
          %s334 = scalar_lea.hbm %s4, %s333
          %s335 = sshll.u32 %s328, 4
          %s336 = int_to_ptr.vmem [resolvable:$true] %s335
          %341 = dma.hbm_to_vmem [thread:$0]  %s334, 512, %s336, %s325, 128, 128, 8
        $region36: #{tpu_custom_call.1} parent=19 // pred_fallthru
          _
        // Predicated region
        $region37: #{tpu_custom_call.1} parent=19 // pred_check
          %p342 = pneg %p168
        $region38: #{tpu_custom_call.1} parent=19 // pred_check_branch
          %344 = sbr.rel (%p342) target = $region40
        $region39: #{tpu_custom_call.1} parent=19 // pred_region
          %p345 = scmp.lt.s32.totalorder %s23, 1
          %s346 = scalar_select %p345, %s23, 1
          %s347 = scalar_lea.vmem %s5, %s346
        $region40: #{tpu_custom_call.1} parent=19 // pred_fallthru
          _
        // Predicated region
        $region41: #{tpu_custom_call.1} parent=19 // pred_check
          %p348 = pneg %p194
        $region42: #{tpu_custom_call.1} parent=19 // pred_check_branch
          %350 = sbr.rel (%p348) target = $region44
        $region43: #{tpu_custom_call.1} parent=19 // pred_region
          %p351 = scmp.lt.s32.totalorder %s23, 1
          %s352 = scalar_select %p351, %s23, 1
          %s353 = scalar_lea.vmem %s6, %s352
        $region44: #{tpu_custom_call.1} parent=19 // pred_fallthru
          _
      $region20: #{tpu_custom_call.1} parent=5 // pred_fallthru
        _
      %p354 = scmp.le.s32.totalorder 1, %s23
      %p355 = scmp.lt.s32.totalorder %s23, 3
      %p356 = pnand %p354, %p355
      %p357 = pneg %p356
      // Predicated region
      $region45: #{tpu_custom_call.1} parent=5 // pred_check
        _
      $region46: #{tpu_custom_call.1} parent=5 // pred_check_branch
        %359 = sbr.rel (%p356) target = $region48
      $region47: #{tpu_custom_call.1} parent=5 // pred_region
        %s360 = ssub.s32 %s23, 1
        // Predicated region
        $region49: #{tpu_custom_call.1} parent=47 // pred_check
          %p361 = pneg %p44
        $region50: #{tpu_custom_call.1} parent=47 // pred_check_branch
          %363 = sbr.rel (%p361) target = $region52
        $region51: #{tpu_custom_call.1} parent=47 // pred_region
          %364 = dma.done [#allocation3], 32
        $region52: #{tpu_custom_call.1} parent=47 // pred_fallthru
          _
        %s365 = sand.u32 %s28, 1
        %s366 = scalar_lea.sflag [#allocation6], %s365
        %s367 = sand.u32 %s57, 1
        %s368 = smul.addr %s367, 16
        %s369 = scalar_lea.vmem [#allocation5], %s368
        // Predicated region
        $region53: #{tpu_custom_call.1} parent=47 // pred_check
          %p370 = pneg %p70
        $region54: #{tpu_custom_call.1} parent=47 // pred_check_branch
          %372 = sbr.rel (%p370) target = $region56
        $region55: #{tpu_custom_call.1} parent=47 // pred_region
          %373 = dma.done %s366, 256
        $region56: #{tpu_custom_call.1} parent=47 // pred_fallthru
          _
        %s374 = sand.u32 %s28, 1
        %s375 = scalar_lea.sflag [#allocation6], %s374
        %s376 = sand.u32 %s83, 1
        %s377 = smul.addr %s376, 16
        %s378 = scalar_lea.vmem [#allocation7], %s377
        // Predicated region
        $region57: #{tpu_custom_call.1} parent=47 // pred_check
          %p379 = pneg %p96
        $region58: #{tpu_custom_call.1} parent=47 // pred_check_branch
          %381 = sbr.rel (%p379) target = $region60
        $region59: #{tpu_custom_call.1} parent=47 // pred_region
          %382 = dma.done %s375, 256
        $region60: #{tpu_custom_call.1} parent=47 // pred_fallthru
          _
        %s383 = sand.u32 %s28, 1
        %s384 = scalar_lea.sflag [#allocation9], %s383
        %s385 = sand.u32 %s109, 1
        %s386 = smul.addr %s385, 32
        %s387 = scalar_lea.vmem [#allocation8], %s386
        // Predicated region
        $region61: #{tpu_custom_call.1} parent=47 // pred_check
          %p388 = pneg %p122
        $region62: #{tpu_custom_call.1} parent=47 // pred_check_branch
          %390 = sbr.rel (%p388) target = $region64
        $region63: #{tpu_custom_call.1} parent=47 // pred_region
          %391 = dma.done %s384, 512
        $region64: #{tpu_custom_call.1} parent=47 // pred_fallthru
          _
        %s392 = sand.u32 %s28, 1
        %s393 = scalar_lea.sflag [#allocation9], %s392
        %s394 = sand.u32 %s135, 1
        %s395 = smul.addr %s394, 32
        %s396 = scalar_lea.vmem [#allocation10], %s395
        // Predicated region
        $region65: #{tpu_custom_call.1} parent=47 // pred_check
          %p397 = pneg %p148
        $region66: #{tpu_custom_call.1} parent=47 // pred_check_branch
          %399 = sbr.rel (%p397) target = $region68
        $region67: #{tpu_custom_call.1} parent=47 // pred_region
          %400 = dma.done %s393, 512
        $region68: #{tpu_custom_call.1} parent=47 // pred_fallthru
          _
        %p401 = pneg %p44
        %p402 = pneg %p41
        %s403 = sand.u32 %s28, 1
        %s404 = scalar_lea.sflag [#allocation6], %s403
        %s405 = sand.u32 %s57, 1
        %s406 = smul.addr %s405, 16
        %s407 = scalar_lea.vmem [#allocation5], %s406
        %p408 = pneg %p70
        %p409 = pneg %p67
        %s410 = sand.u32 %s28, 1
        %s411 = scalar_lea.sflag [#allocation6], %s410
        %s412 = sand.u32 %s83, 1
        %s413 = smul.addr %s412, 16
        %s414 = scalar_lea.vmem [#allocation7], %s413
        %p415 = pneg %p96
        %p416 = pneg %p93
        %s417 = sand.u32 %s28, 1
        %s418 = scalar_lea.sflag [#allocation9], %s417
        %s419 = sand.u32 %s109, 1
        %s420 = smul.addr %s419, 32
        %s421 = scalar_lea.vmem [#allocation8], %s420
        %p422 = pneg %p122
        %p423 = pneg %p119
        %s424 = sand.u32 %s28, 1
        %s425 = scalar_lea.sflag [#allocation9], %s424
        %s426 = sand.u32 %s135, 1
        %s427 = smul.addr %s426, 32
        %s428 = scalar_lea.vmem [#allocation10], %s427
        %p429 = pneg %p148
        %p430 = pneg %p145
        %p431 = scmp.lt.s32.totalorder %s28, 1
        %s432 = scalar_select %p431, %s28, 1
        %s433 = scalar_lea.vmem %s5, %s432
        %p434 = pneg %p174
        %p435 = pneg %p171
        %p436 = scmp.lt.s32.totalorder %s28, 1
        %s437 = scalar_select %p436, %s28, 1
        %s438 = scalar_lea.vmem %s6, %s437
        %p439 = pneg %p200
        %p440 = pneg %p197
        %p441 = pneg %p226
        %p442 = pneg %p223
        %s443 = sand.u32 %s213, 1
        %s444 = scalar_lea.sflag [#allocation4], %s443
        %s445 = sand.u32 %s213, 1
        %s446 = smul.addr %s445, 4
        %s447 = scalar_lea.vmem [#allocation11], %s446
        %p448 = scmp.lt.s32.totalorder %s28, 1
        %s449 = scalar_select %p448, %s28, 1
        %s450 = scalar_lea.vmem %s5, %s449
        %p451 = scmp.lt.s32.totalorder %s28, 1
        %s452 = scalar_select %p451, %s28, 1
        %s453 = scalar_lea.vmem %s6, %s452
        %v454 = vld [vmem:[%s378] sm:$0xff]
        %v455 = vld [vmem:[%s378 + $0x8] sm:$0xff]
        %v456 = vld [vmem:[%s369] sm:$0xff]
        %v457 = vld [vmem:[%s369 + $0x8] sm:$0xff]
        %v458 = vld [vmem:[#allocation2] sm:$0x1]
        %v459 = vld [vmem:[#allocation2 + $0x1] sm:$0x1]
        %vm460 = vcmp.gt.f32.partialorder %v458, 0.5
        %vm461 = vcmp.gt.f32.partialorder %v459, 0.5
        %v462 = vld [vmem:[%s387] sm:$0xff]
        %v463 = vld [vmem:[%s387 + $0x8] sm:$0xff]
        %v464 = vld [vmem:[%s387 + $0x10] sm:$0xff]
        %v465 = vld [vmem:[%s387 + $0x18] sm:$0xff]
        %v466 = vld [vmem:[%s396] sm:$0xff]
        %v467 = vld [vmem:[%s396 + $0x8] sm:$0xff]
        %v468 = vld [vmem:[%s396 + $0x10] sm:$0xff]
        %v469 = vld [vmem:[%s396 + $0x18] sm:$0xff]
        %v470 = vld [vmem:[%s450] sm:$0x1]
        %v471 = vld [vmem:[%s453] sm:$0x1]
        %vm472 = vcmask 261120
        %v473 = vsel %vm472, %v454, 0.0
        %474 = vadd.xlane.f32.xlu0 %v473
        %v475 = vpop.xlane.xlu0 %474
        %v476 = vsel %vm472, %v455, 0.0
        %477 = vadd.xlane.f32.xlu0 %v476
        %v478 = vpop.xlane.xlu0 %477
        %v479 = vrcp.pop 32.0
        %v480 = vmul.f32 %v475, %v479
        %v481 = vmul.f32 %v478, %v479
        %v482 = vsub.f32 %v454, %v480
        %v483 = vsub.f32 %v455, %v481
        %v484 = vmul.f32 %v482, %v482
        %v485 = vmul.f32 %v483, %v483
        %v486 = vsel %vm472, %v484, 0.0
        %487 = vadd.xlane.f32.xlu0 %v486
        %v488 = vpop.xlane.xlu0 %487
        %v489 = vsel %vm472, %v485, 0.0
        %490 = vadd.xlane.f32.xlu0 %v489
        %v491 = vpop.xlane.xlu0 %490
        %v492 = vmul.f32 %v488, %v479
        %v493 = vmul.f32 %v491, %v479
        %v494 = vadd.f32 %v492, 1e-05
        %v495 = vadd.f32 %v493, 1e-05
        %v496 = vrsqrt.pop %v494
        %v497 = vrsqrt.pop %v495
        %v498 = vmul.f32 %v482, %v496
        %v499 = vmul.f32 %v483, %v497
        %v501 = vlaneseq
        %v502 = vshrl.u32 %v501, 7
        %v503 = vsub.s32 0, %v502
        %v504 = vrot.slane %v470, %v503
        %v506 = vmul.f32 %v498, %v504
        %v507 = vmul.f32 %v499, %v504
        %v509 = vlaneseq
        %v510 = vshrl.u32 %v509, 7
        %v511 = vsub.s32 0, %v510
        %v512 = vrot.slane %v471, %v511
        %v514 = vadd.f32 %v506, %v512
        %v515 = vadd.f32 %v507, %v512
        %v517 = vsel %vm472, %v514, 0
        %v520 = vsel %vm472, %v456, 0
        %v523 = vsel %vm472, %v515, 0
        %v526 = vsel %vm472, %v457, 0
        %528 = vmatprep.subr.mxu0 0.0
        %v529 = vand.u32 %v462, 4294901760
        %530 = vmatpush1.msra.mxu0 %v529
        %531 = vmatprep.subr.mxu0 0.0
        %v532 = vand.u32 %v463, 4294901760
        %533 = vmatpush1.msra.mxu0 %v532
        %534 = vmatprep.subr.mxu0 0.0
        %v535 = vand.u32 %v464, 4294901760
        %536 = vmatpush1.msra.mxu0 %v535
        %537 = vmatprep.subr.mxu0 0.0
        %v538 = vand.u32 %v465, 4294901760
        %539 = vmatpush1.msra.mxu0 %v538
        %540 = vmatprep.subr.mxu0 0.0
        %541 = vmatpush1.msra.mxu0 0.0
        %542 = vmatprep.subr.mxu0 0.0
        %543 = vmatpush1.msra.mxu0 0.0
        %544 = vmatprep.subr.mxu0 0.0
        %545 = vmatpush1.msra.mxu0 0.0
        %546 = vmatprep.subr.mxu0 0.0
        %547 = vmatpush1.msra.mxu0 0.0
        %548 = vmatprep.subr.mxu0 0.0
        %549 = vmatpush1.msra.mxu0 0.0
        %550 = vmatprep.subr.mxu0 0.0
        %551 = vmatpush1.msra.mxu0 0.0
        %552 = vmatprep.subr.mxu0 0.0
        %553 = vmatpush1.msra.mxu0 0.0
        %554 = vmatprep.subr.mxu0 0.0
        %555 = vmatpush1.msra.mxu0 0.0
        %556 = vmatprep.subr.mxu0 0.0
        %557 = vmatpush1.msra.mxu0 0.0
        %558 = vmatprep.subr.mxu0 0.0
        %559 = vmatpush1.msra.mxu0 0.0
        %560 = vmatprep.subr.mxu0 0.0
        %561 = vmatpush1.msra.mxu0 0.0
        %562 = vmatprep.subr.mxu0 0.0
        %563 = vmatpush1.msra.mxu0 0.0
        %564 = vmatprep.subr.mxu0 0.0
        %565 = vmatpush1.msra.mxu0 0.0
        %566 = vmatprep.subr.mxu0 0.0
        %567 = vmatpush1.msra.mxu0 0.0
        %568 = vmatprep.subr.mxu0 0.0
        %569 = vmatpush1.msra.mxu0 0.0
        %570 = vmatprep.subr.mxu0 0.0
        %571 = vmatpush1.msra.mxu0 0.0
        %572 = vmatprep.subr.mxu0 0.0
        %573 = vmatpush1.msra.mxu0 0.0
        %574 = vmatprep.subr.mxu0 0.0
        %575 = vmatpush1.msra.mxu0 0.0
        %576 = vmatprep.subr.mxu0 0.0
        %577 = vmatpush1.msra.mxu0 0.0
        %578 = vmatprep.subr.mxu0 0.0
        %579 = vmatpush1.msra.mxu0 0.0
        %580 = vmatprep.subr.mxu0 0.0
        %581 = vmatpush1.msra.mxu0 0.0
        %582 = vmatprep.subr.mxu0 0.0
        %583 = vmatpush1.msra.mxu0 0.0
        %584 = vmatprep.subr.mxu0 0.0
        %585 = vmatpush1.msra.mxu0 0.0
        %586 = vmatprep.subr.mxu0 0.0
        %587 = vmatpush1.msra.mxu0 0.0
        %588 = vmatprep.subr.mxu0 0.0
        %589 = vmatpush1.msra.mxu0 0.0
        %590 = vmatprep.subr.mxu0 0.0
        %591 = vmatpush1.msra.mxu0 0.0
        %592 = vmatprep.subr.mxu0 0.0
        %593 = vmatpush1.msra.mxu0 0.0
        %594 = vmatprep.subr.mxu0 0.0
        %595 = vmatpush1.msra.mxu0 0.0
        %596 = vmatprep.mubr.f32.mxu0 0.0
        %v597 = vand.u32 %v517, 4294901760
        %v598 = vsub.f32 %v517, %v597
        %v599 = vand.u32 %v598, 4294901760
        %v600 = vsub.f32 %v598, %v599
        %v601 = vand.u32 %v600, 4294901760
        %602 = vmatmul.mubr.f32.gmra.mrb[0].mxu0 %v601
        %v603 = vpop.f32.mrb[0].mxu0
        %v604 = vadd.f32 0.0, %v603
        %v605 = vpop.f32.mrb[0].mxu0
        %606 = vmatprep.mubr.f32.mxu0 0.0
        %v607 = vand.u32 %v520, 4294901760
        %v608 = vsub.f32 %v520, %v607
        %v609 = vand.u32 %v608, 4294901760
        %v610 = vsub.f32 %v608, %v609
        %v611 = vand.u32 %v610, 4294901760
        %612 = vmatmul.mubr.f32.gmra.mrb[0].mxu0 %v611
        %v613 = vpop.f32.mrb[0].mxu0
        %v614 = vadd.f32 0.0, %v613
        %v615 = vpop.f32.mrb[0].mxu0
        %616 = vmatprep.mubr.f32.mxu0 0.0
        %v617 = vand.u32 %v523, 4294901760
        %v618 = vsub.f32 %v523, %v617
        %v619 = vand.u32 %v618, 4294901760
        %v620 = vsub.f32 %v618, %v619
        %v621 = vand.u32 %v620, 4294901760
        %622 = vmatmul.mubr.f32.gmra.mrb[0].mxu0 %v621
        %v623 = vpop.f32.mrb[0].mxu0
        %v624 = vadd.f32 0.0, %v623
        %v625 = vpop.f32.mrb[0].mxu0
        %626 = vmatprep.mubr.f32.mxu0 0.0
        %v627 = vand.u32 %v526, 4294901760
        %v628 = vsub.f32 %v526, %v627
        %v629 = vand.u32 %v628, 4294901760
        %v630 = vsub.f32 %v628, %v629
        %v631 = vand.u32 %v630, 4294901760
        %632 = vmatmul.mubr.f32.gmra.mrb[0].mxu0 %v631
        %v633 = vpop.f32.mrb[0].mxu0
        %v634 = vadd.f32 0.0, %v633
        %v635 = vpop.f32.mrb[0].mxu0
        %636 = vdwg.mxu0
        %637 = vmatprep.subr.mxu0 0.0
        %v638 = vand.u32 %v462, 4294901760
        %v639 = vsub.f32 %v462, %v638
        %v640 = vand.u32 %v639, 4294901760
        %v641 = vsub.f32 %v639, %v640
        %v642 = vand.u32 %v641, 4294901760
        %643 = vmatpush1.msra.mxu0 %v642
        %644 = vmatprep.subr.mxu0 0.0
        %v645 = vand.u32 %v463, 4294901760
        %v646 = vsub.f32 %v463, %v645
        %v647 = vand.u32 %v646, 4294901760
        %v648 = vsub.f32 %v646, %v647
        %v649 = vand.u32 %v648, 4294901760
        %650 = vmatpush1.msra.mxu0 %v649
        %651 = vmatprep.subr.mxu0 0.0
        %v652 = vand.u32 %v464, 4294901760
        %v653 = vsub.f32 %v464, %v652
        %v654 = vand.u32 %v653, 4294901760
        %v655 = vsub.f32 %v653, %v654
        %v656 = vand.u32 %v655, 4294901760
        %657 = vmatpush1.msra.mxu0 %v656
        %658 = vmatprep.subr.mxu0 0.0
        %v659 = vand.u32 %v465, 4294901760
        %v660 = vsub.f32 %v465, %v659
        %v661 = vand.u32 %v660, 4294901760
        %v662 = vsub.f32 %v660, %v661
        %v663 = vand.u32 %v662, 4294901760
        %664 = vmatpush1.msra.mxu0 %v663
        %665 = vmatprep.subr.mxu0 0.0
        %666 = vmatpush1.msra.mxu0 0.0
        %667 = vmatprep.subr.mxu0 0.0
        %668 = vmatpush1.msra.mxu0 0.0
        %669 = vmatprep.subr.mxu0 0.0
        %670 = vmatpush1.msra.mxu0 0.0
        %671 = vmatprep.subr.mxu0 0.0
        %672 = vmatpush1.msra.mxu0 0.0
        %673 = vmatprep.subr.mxu0 0.0
        %674 = vmatpush1.msra.mxu0 0.0
        %675 = vmatprep.subr.mxu0 0.0
        %676 = vmatpush1.msra.mxu0 0.0
        %677 = vmatprep.subr.mxu0 0.0
        %678 = vmatpush1.msra.mxu0 0.0
        %679 = vmatprep.subr.mxu0 0.0
        %680 = vmatpush1.msra.mxu0 0.0
        %681 = vmatprep.subr.mxu0 0.0
        %682 = vmatpush1.msra.mxu0 0.0
        %683 = vmatprep.subr.mxu0 0.0
        %684 = vmatpush1.msra.mxu0 0.0
        %685 = vmatprep.subr.mxu0 0.0
        %686 = vmatpush1.msra.mxu0 0.0
        %687 = vmatprep.subr.mxu0 0.0
        %688 = vmatpush1.msra.mxu0 0.0
        %689 = vmatprep.subr.mxu0 0.0
        %690 = vmatpush1.msra.mxu0 0.0
        %691 = vmatprep.subr.mxu0 0.0
        %692 = vmatpush1.msra.mxu0 0.0
        %693 = vmatprep.subr.mxu0 0.0
        %694 = vmatpush1.msra.mxu0 0.0
        %695 = vmatprep.subr.mxu0 0.0
        %696 = vmatpush1.msra.mxu0 0.0
        %697 = vmatprep.subr.mxu0 0.0
        %698 = vmatpush1.msra.mxu0 0.0
        %699 = vmatprep.subr.mxu0 0.0
        %700 = vmatpush1.msra.mxu0 0.0
        %701 = vmatprep.subr.mxu0 0.0
        %702 = vmatpush1.msra.mxu0 0.0
        %703 = vmatprep.subr.mxu0 0.0
        %704 = vmatpush1.msra.mxu0 0.0
        %705 = vmatprep.subr.mxu0 0.0
        %706 = vmatpush1.msra.mxu0 0.0
        %707 = vmatprep.subr.mxu0 0.0
        %708 = vmatpush1.msra.mxu0 0.0
        %709 = vmatprep.subr.mxu0 0.0
        %710 = vmatpush1.msra.mxu0 0.0
        %711 = vmatprep.subr.mxu0 0.0
        %712 = vmatpush1.msra.mxu0 0.0
        %713 = vmatprep.subr.mxu0 0.0
        %714 = vmatpush1.msra.mxu0 0.0
        %715 = vmatprep.subr.mxu0 0.0
        %716 = vmatpush1.msra.mxu0 0.0
        %717 = vmatprep.subr.mxu0 0.0
        %718 = vmatpush1.msra.mxu0 0.0
        %719 = vmatprep.subr.mxu0 0.0
        %720 = vmatpush1.msra.mxu0 0.0
        %721 = vmatprep.mubr.f32.mxu0 0.0
        %v722 = vand.u32 %v517, 4294901760
        %723 = vmatmul.mubr.f32.gmra.mrb[0].mxu0 %v722
        %v724 = vpop.f32.mrb[0].mxu0
        %v725 = vadd.f32 %v604, %v724
        %v726 = vpop.f32.mrb[0].mxu0
        %727 = vmatprep.mubr.f32.mxu0 0.0
        %v728 = vand.u32 %v520, 4294901760
        %729 = vmatmul.mubr.f32.gmra.mrb[0].mxu0 %v728
        %v730 = vpop.f32.mrb[0].mxu0
        %v731 = vadd.f32 %v614, %v730
        %v732 = vpop.f32.mrb[0].mxu0
        %733 = vmatprep.mubr.f32.mxu0 0.0
        %v734 = vand.u32 %v523, 4294901760
        %735 = vmatmul.mubr.f32.gmra.mrb[0].mxu0 %v734
        %v736 = vpop.f32.mrb[0].mxu0
        %v737 = vadd.f32 %v624, %v736
        %v738 = vpop.f32.mrb[0].mxu0
        %739 = vmatprep.mubr.f32.mxu0 0.0
        %v740 = vand.u32 %v526, 4294901760
        %741 = vmatmul.mubr.f32.gmra.mrb[0].mxu0 %v740
        %v742 = vpop.f32.mrb[0].mxu0
        %v743 = vadd.f32 %v634, %v742
        %v744 = vpop.f32.mrb[0].mxu0
        %745 = vdwg.mxu0
        %746 = vmatprep.subr.mxu0 0.0
        %v747 = vand.u32 %v462, 4294901760
        %v748 = vsub.f32 %v462, %v747
        %749 = vmatpush1.msra.mxu0 %v748
        %750 = vmatprep.subr.mxu0 0.0
        %v751 = vand.u32 %v463, 4294901760
        %v752 = vsub.f32 %v463, %v751
        %753 = vmatpush1.msra.mxu0 %v752
        %754 = vmatprep.subr.mxu0 0.0
        %v755 = vand.u32 %v464, 4294901760
        %v756 = vsub.f32 %v464, %v755
        %757 = vmatpush1.msra.mxu0 %v756
        %758 = vmatprep.subr.mxu0 0.0
        %v759 = vand.u32 %v465, 4294901760
        %v760 = vsub.f32 %v465, %v759
        %761 = vmatpush1.msra.mxu0 %v760
        %762 = vmatprep.subr.mxu0 0.0
        %763 = vmatpush1.msra.mxu0 0.0
        %764 = vmatprep.subr.mxu0 0.0
        %765 = vmatpush1.msra.mxu0 0.0
        %766 = vmatprep.subr.mxu0 0.0
        %767 = vmatpush1.msra.mxu0 0.0
        %768 = vmatprep.subr.mxu0 0.0
        %769 = vmatpush1.msra.mxu0 0.0
        %770 = vmatprep.subr.mxu0 0.0
        %771 = vmatpush1.msra.mxu0 0.0
        %772 = vmatprep.subr.mxu0 0.0
        %773 = vmatpush1.msra.mxu0 0.0
        %774 = vmatprep.subr.mxu0 0.0
        %775 = vmatpush1.msra.mxu0 0.0
        %776 = vmatprep.subr.mxu0 0.0
        %777 = vmatpush1.msra.mxu0 0.0
        %778 = vmatprep.subr.mxu0 0.0
        %779 = vmatpush1.msra.mxu0 0.0
        %780 = vmatprep.subr.mxu0 0.0
        %781 = vmatpush1.msra.mxu0 0.0
        %782 = vmatprep.subr.mxu0 0.0
        %783 = vmatpush1.msra.mxu0 0.0
        %784 = vmatprep.subr.mxu0 0.0
        %785 = vmatpush1.msra.mxu0 0.0
        %786 = vmatprep.subr.mxu0 0.0
        %787 = vmatpush1.msra.mxu0 0.0
        %788 = vmatprep.subr.mxu0 0.0
        %789 = vmatpush1.msra.mxu0 0.0
        %790 = vmatprep.subr.mxu0 0.0
        %791 = vmatpush1.msra.mxu0 0.0
        %792 = vmatprep.subr.mxu0 0.0
        %793 = vmatpush1.msra.mxu0 0.0
        %794 = vmatprep.subr.mxu0 0.0
        %795 = vmatpush1.msra.mxu0 0.0
        %796 = vmatprep.subr.mxu0 0.0
        %797 = vmatpush1.msra.mxu0 0.0
        %798 = vmatprep.subr.mxu0 0.0
        %799 = vmatpush1.msra.mxu0 0.0
        %800 = vmatprep.subr.mxu0 0.0
        %801 = vmatpush1.msra.mxu0 0.0
        %802 = vmatprep.subr.mxu0 0.0
        %803 = vmatpush1.msra.mxu0 0.0
        %804 = vmatprep.subr.mxu0 0.0
        %805 = vmatpush1.msra.mxu0 0.0
        %806 = vmatprep.subr.mxu0 0.0
        %807 = vmatpush1.msra.mxu0 0.0
        %808 = vmatprep.subr.mxu0 0.0
        %809 = vmatpush1.msra.mxu0 0.0
        %810 = vmatprep.subr.mxu0 0.0
        %811 = vmatpush1.msra.mxu0 0.0
        %812 = vmatprep.subr.mxu0 0.0
        %813 = vmatpush1.msra.mxu0 0.0
        %814 = vmatprep.subr.mxu0 0.0
        %815 = vmatpush1.msra.mxu0 0.0
        %816 = vmatprep.subr.mxu0 0.0
        %817 = vmatpush1.msra.mxu0 0.0
        %818 = vmatprep.mubr.f32.mxu0 0.0
        %v819 = vand.u32 %v517, 4294901760
        %v820 = vsub.f32 %v517, %v819
        %821 = vmatmul.mubr.f32.gmra.mrb[0].mxu0 %v820
        %v822 = vpop.f32.mrb[0].mxu0
        %v823 = vadd.f32 %v725, %v822
        %v824 = vpop.f32.mrb[0].mxu0
        %825 = vmatprep.mubr.f32.mxu0 0.0
        %v826 = vand.u32 %v520, 4294901760
        %v827 = vsub.f32 %v520, %v826
        %828 = vmatmul.mubr.f32.gmra.mrb[0].mxu0 %v827
        %v829 = vpop.f32.mrb[0].mxu0
        %v830 = vadd.f32 %v731, %v829
        %v831 = vpop.f32.mrb[0].mxu0
        %832 = vmatprep.mubr.f32.mxu0 0.0
        %v833 = vand.u32 %v523, 4294901760
        %v834 = vsub.f32 %v523, %v833
        %835 = vmatmul.mubr.f32.gmra.mrb[0].mxu0 %v834
        %v836 = vpop.f32.mrb[0].mxu0
        %v837 = vadd.f32 %v737, %v836
        %v838 = vpop.f32.mrb[0].mxu0
        %839 = vmatprep.mubr.f32.mxu0 0.0
        %v840 = vand.u32 %v526, 4294901760
        %v841 = vsub.f32 %v526, %v840
        %842 = vmatmul.mubr.f32.gmra.mrb[0].mxu0 %v841
        %v843 = vpop.f32.mrb[0].mxu0
        %v844 = vadd.f32 %v743, %v843
        %v845 = vpop.f32.mrb[0].mxu0
        %846 = vdwg.mxu0
        %847 = vmatprep.subr.mxu0 0.0
        %v848 = vand.u32 %v462, 4294901760
        %849 = vmatpush1.msra.mxu0 %v848
        %850 = vmatprep.subr.mxu0 0.0
        %v851 = vand.u32 %v463, 4294901760
        %852 = vmatpush1.msra.mxu0 %v851
        %853 = vmatprep.subr.mxu0 0.0
        %v854 = vand.u32 %v464, 4294901760
        %855 = vmatpush1.msra.mxu0 %v854
        %856 = vmatprep.subr.mxu0 0.0
        %v857 = vand.u32 %v465, 4294901760
        %858 = vmatpush1.msra.mxu0 %v857
        %859 = vmatprep.subr.mxu0 0.0
        %860 = vmatpush1.msra.mxu0 0.0
        %861 = vmatprep.subr.mxu0 0.0
        %862 = vmatpush1.msra.mxu0 0.0
        %863 = vmatprep.subr.mxu0 0.0
        %864 = vmatpush1.msra.mxu0 0.0
        %865 = vmatprep.subr.mxu0 0.0
        %866 = vmatpush1.msra.mxu0 0.0
        %867 = vmatprep.subr.mxu0 0.0
        %868 = vmatpush1.msra.mxu0 0.0
        %869 = vmatprep.subr.mxu0 0.0
        %870 = vmatpush1.msra.mxu0 0.0
        %871 = vmatprep.subr.mxu0 0.0
        %872 = vmatpush1.msra.mxu0 0.0
        %873 = vmatprep.subr.mxu0 0.0
        %874 = vmatpush1.msra.mxu0 0.0
        %875 = vmatprep.subr.mxu0 0.0
        %876 = vmatpush1.msra.mxu0 0.0
        %877 = vmatprep.subr.mxu0 0.0
        %878 = vmatpush1.msra.mxu0 0.0
        %879 = vmatprep.subr.mxu0 0.0
        %880 = vmatpush1.msra.mxu0 0.0
        %881 = vmatprep.subr.mxu0 0.0
        %882 = vmatpush1.msra.mxu0 0.0
        %883 = vmatprep.subr.mxu0 0.0
        %884 = vmatpush1.msra.mxu0 0.0
        %885 = vmatprep.subr.mxu0 0.0
        %886 = vmatpush1.msra.mxu0 0.0
        %887 = vmatprep.subr.mxu0 0.0
        %888 = vmatpush1.msra.mxu0 0.0
        %889 = vmatprep.subr.mxu0 0.0
        %890 = vmatpush1.msra.mxu0 0.0
        %891 = vmatprep.subr.mxu0 0.0
        %892 = vmatpush1.msra.mxu0 0.0
        %893 = vmatprep.subr.mxu0 0.0
        %894 = vmatpush1.msra.mxu0 0.0
        %895 = vmatprep.subr.mxu0 0.0
        %896 = vmatpush1.msra.mxu0 0.0
        %897 = vmatprep.subr.mxu0 0.0
        %898 = vmatpush1.msra.mxu0 0.0
        %899 = vmatprep.subr.mxu0 0.0
        %900 = vmatpush1.msra.mxu0 0.0
        %901 = vmatprep.subr.mxu0 0.0
        %902 = vmatpush1.msra.mxu0 0.0
        %903 = vmatprep.subr.mxu0 0.0
        %904 = vmatpush1.msra.mxu0 0.0
        %905 = vmatprep.subr.mxu0 0.0
        %906 = vmatpush1.msra.mxu0 0.0
        %907 = vmatprep.subr.mxu0 0.0
        %908 = vmatpush1.msra.mxu0 0.0
        %909 = vmatprep.subr.mxu0 0.0
        %910 = vmatpush1.msra.mxu0 0.0
        %911 = vmatprep.subr.mxu0 0.0
        %912 = vmatpush1.msra.mxu0 0.0
        %913 = vmatprep.subr.mxu0 0.0
        %914 = vmatpush1.msra.mxu0 0.0
        %915 = vmatprep.mubr.f32.mxu0 0.0
        %v916 = vand.u32 %v517, 4294901760
        %v917 = vsub.f32 %v517, %v916
        %v918 = vand.u32 %v917, 4294901760
        %919 = vmatmul.mubr.f32.gmra.mrb[0].mxu0 %v918
        %v920 = vpop.f32.mrb[0].mxu0
        %v921 = vadd.f32 %v823, %v920
        %v922 = vpop.f32.mrb[0].mxu0
        %923 = vmatprep.mubr.f32.mxu0 0.0
        %v924 = vand.u32 %v520, 4294901760
        %v925 = vsub.f32 %v520, %v924
        %v926 = vand.u32 %v925, 4294901760
        %927 = vmatmul.mubr.f32.gmra.mrb[0].mxu0 %v926
        %v928 = vpop.f32.mrb[0].mxu0
        %v929 = vadd.f32 %v830, %v928
        %v930 = vpop.f32.mrb[0].mxu0
        %931 = vmatprep.mubr.f32.mxu0 0.0
        %v932 = vand.u32 %v523, 4294901760
        %v933 = vsub.f32 %v523, %v932
        %v934 = vand.u32 %v933, 4294901760
        %935 = vmatmul.mubr.f32.gmra.mrb[0].mxu0 %v934
        %v936 = vpop.f32.mrb[0].mxu0
        %v937 = vadd.f32 %v837, %v936
        %v938 = vpop.f32.mrb[0].mxu0
        %939 = vmatprep.mubr.f32.mxu0 0.0
        %v940 = vand.u32 %v526, 4294901760
        %v941 = vsub.f32 %v526, %v940
        %v942 = vand.u32 %v941, 4294901760
        %943 = vmatmul.mubr.f32.gmra.mrb[0].mxu0 %v942
        %v944 = vpop.f32.mrb[0].mxu0
        %v945 = vadd.f32 %v844, %v944
        %v946 = vpop.f32.mrb[0].mxu0
        %947 = vdwg.mxu0
        %948 = vmatprep.subr.mxu0 0.0
        %v949 = vand.u32 %v462, 4294901760
        %v950 = vsub.f32 %v462, %v949
        %v951 = vand.u32 %v950, 4294901760
        %952 = vmatpush1.msra.mxu0 %v951
        %953 = vmatprep.subr.mxu0 0.0
        %v954 = vand.u32 %v463, 4294901760
        %v955 = vsub.f32 %v463, %v954
        %v956 = vand.u32 %v955, 4294901760
        %957 = vmatpush1.msra.mxu0 %v956
        %958 = vmatprep.subr.mxu0 0.0
        %v959 = vand.u32 %v464, 4294901760
        %v960 = vsub.f32 %v464, %v959
        %v961 = vand.u32 %v960, 4294901760
        %962 = vmatpush1.msra.mxu0 %v961
        %963 = vmatprep.subr.mxu0 0.0
        %v964 = vand.u32 %v465, 4294901760
        %v965 = vsub.f32 %v465, %v964
        %v966 = vand.u32 %v965, 4294901760
        %967 = vmatpush1.msra.mxu0 %v966
        %968 = vmatprep.subr.mxu0 0.0
        %969 = vmatpush1.msra.mxu0 0.0
        %970 = vmatprep.subr.mxu0 0.0
        %971 = vmatpush1.msra.mxu0 0.0
        %972 = vmatprep.subr.mxu0 0.0
        %973 = vmatpush1.msra.mxu0 0.0
        %974 = vmatprep.subr.mxu0 0.0
        %975 = vmatpush1.msra.mxu0 0.0
        %976 = vmatprep.subr.mxu0 0.0
        %977 = vmatpush1.msra.mxu0 0.0
        %978 = vmatprep.subr.mxu0 0.0
        %979 = vmatpush1.msra.mxu0 0.0
        %980 = vmatprep.subr.mxu0 0.0
        %981 = vmatpush1.msra.mxu0 0.0
        %982 = vmatprep.subr.mxu0 0.0
        %983 = vmatpush1.msra.mxu0 0.0
        %984 = vmatprep.subr.mxu0 0.0
        %985 = vmatpush1.msra.mxu0 0.0
        %986 = vmatprep.subr.mxu0 0.0
        %987 = vmatpush1.msra.mxu0 0.0
        %988 = vmatprep.subr.mxu0 0.0
        %989 = vmatpush1.msra.mxu0 0.0
        %990 = vmatprep.subr.mxu0 0.0
        %991 = vmatpush1.msra.mxu0 0.0
        %992 = vmatprep.subr.mxu0 0.0
        %993 = vmatpush1.msra.mxu0 0.0
        %994 = vmatprep.subr.mxu0 0.0
        %995 = vmatpush1.msra.mxu0 0.0
        %996 = vmatprep.subr.mxu0 0.0
        %997 = vmatpush1.msra.mxu0 0.0
        %998 = vmatprep.subr.mxu0 0.0
        %999 = vmatpush1.msra.mxu0 0.0
        %1000 = vmatprep.subr.mxu0 0.0
        %1001 = vmatpush1.msra.mxu0 0.0
        %1002 = vmatprep.subr.mxu0 0.0
        %1003 = vmatpush1.msra.mxu0 0.0
        %1004 = vmatprep.subr.mxu0 0.0
        %1005 = vmatpush1.msra.mxu0 0.0
        %1006 = vmatprep.subr.mxu0 0.0
        %1007 = vmatpush1.msra.mxu0 0.0
        %1008 = vmatprep.subr.mxu0 0.0
        %1009 = vmatpush1.msra.mxu0 0.0
        %1010 = vmatprep.subr.mxu0 0.0
        %1011 = vmatpush1.msra.mxu0 0.0
        %1012 = vmatprep.subr.mxu0 0.0
        %1013 = vmatpush1.msra.mxu0 0.0
        %1014 = vmatprep.subr.mxu0 0.0
        %1015 = vmatpush1.msra.mxu0 0.0
        %1016 = vmatprep.subr.mxu0 0.0
        %1017 = vmatpush1.msra.mxu0 0.0
        %1018 = vmatprep.subr.mxu0 0.0
        %1019 = vmatpush1.msra.mxu0 0.0
        %1020 = vmatprep.subr.mxu0 0.0
        %1021 = vmatpush1.msra.mxu0 0.0
        %1022 = vmatprep.subr.mxu0 0.0
        %1023 = vmatpush1.msra.mxu0 0.0
        %1024 = vmatprep.mubr.f32.mxu0 0.0
        %v1025 = vand.u32 %v517, 4294901760
        %1026 = vmatmul.mubr.f32.gmra.mrb[0].mxu0 %v1025
        %v1027 = vpop.f32.mrb[0].mxu0
        %v1028 = vadd.f32 %v921, %v1027
        %v1029 = vpop.f32.mrb[0].mxu0
        %1030 = vmatprep.mubr.f32.mxu0 0.0
        %v1031 = vand.u32 %v520, 4294901760
        %1032 = vmatmul.mubr.f32.gmra.mrb[0].mxu0 %v1031
        %v1033 = vpop.f32.mrb[0].mxu0
        %v1034 = vadd.f32 %v929, %v1033
        %v1035 = vpop.f32.mrb[0].mxu0
        %1036 = vmatprep.mubr.f32.mxu0 0.0
        %v1037 = vand.u32 %v523, 4294901760
        %1038 = vmatmul.mubr.f32.gmra.mrb[0].mxu0 %v1037
        %v1039 = vpop.f32.mrb[0].mxu0
        %v1040 = vadd.f32 %v937, %v1039
        %v1041 = vpop.f32.mrb[0].mxu0
        %1042 = vmatprep.mubr.f32.mxu0 0.0
        %v1043 = vand.u32 %v526, 4294901760
        %1044 = vmatmul.mubr.f32.gmra.mrb[0].mxu0 %v1043
        %v1045 = vpop.f32.mrb[0].mxu0
        %v1046 = vadd.f32 %v945, %v1045
        %v1047 = vpop.f32.mrb[0].mxu0
        %1048 = vdwg.mxu0
        %1049 = vmatprep.subr.mxu0 0.0
        %v1050 = vand.u32 %v462, 4294901760
        %1051 = vmatpush1.msra.mxu0 %v1050
        %1052 = vmatprep.subr.mxu0 0.0
        %v1053 = vand.u32 %v463, 4294901760
        %1054 = vmatpush1.msra.mxu0 %v1053
        %1055 = vmatprep.subr.mxu0 0.0
        %v1056 = vand.u32 %v464, 4294901760
        %1057 = vmatpush1.msra.mxu0 %v1056
        %1058 = vmatprep.subr.mxu0 0.0
        %v1059 = vand.u32 %v465, 4294901760
        %1060 = vmatpush1.msra.mxu0 %v1059
        %1061 = vmatprep.subr.mxu0 0.0
        %1062 = vmatpush1.msra.mxu0 0.0
        %1063 = vmatprep.subr.mxu0 0.0
        %1064 = vmatpush1.msra.mxu0 0.0
        %1065 = vmatprep.subr.mxu0 0.0
        %1066 = vmatpush1.msra.mxu0 0.0
        %1067 = vmatprep.subr.mxu0 0.0
        %1068 = vmatpush1.msra.mxu0 0.0
        %1069 = vmatprep.subr.mxu0 0.0
        %1070 = vmatpush1.msra.mxu0 0.0
        %1071 = vmatprep.subr.mxu0 0.0
        %1072 = vmatpush1.msra.mxu0 0.0
        %1073 = vmatprep.subr.mxu0 0.0
        %1074 = vmatpush1.msra.mxu0 0.0
        %1075 = vmatprep.subr.mxu0 0.0
        %1076 = vmatpush1.msra.mxu0 0.0
        %1077 = vmatprep.subr.mxu0 0.0
        %1078 = vmatpush1.msra.mxu0 0.0
        %1079 = vmatprep.subr.mxu0 0.0
        %1080 = vmatpush1.msra.mxu0 0.0
        %1081 = vmatprep.subr.mxu0 0.0
        %1082 = vmatpush1.msra.mxu0 0.0
        %1083 = vmatprep.subr.mxu0 0.0
        %1084 = vmatpush1.msra.mxu0 0.0
        %1085 = vmatprep.subr.mxu0 0.0
        %1086 = vmatpush1.msra.mxu0 0.0
        %1087 = vmatprep.subr.mxu0 0.0
        %1088 = vmatpush1.msra.mxu0 0.0
        %1089 = vmatprep.subr.mxu0 0.0
        %1090 = vmatpush1.msra.mxu0 0.0
        %1091 = vmatprep.subr.mxu0 0.0
        %1092 = vmatpush1.msra.mxu0 0.0
        %1093 = vmatprep.subr.mxu0 0.0
        %1094 = vmatpush1.msra.mxu0 0.0
        %1095 = vmatprep.subr.mxu0 0.0
        %1096 = vmatpush1.msra.mxu0 0.0
        %1097 = vmatprep.subr.mxu0 0.0
        %1098 = vmatpush1.msra.mxu0 0.0
        %1099 = vmatprep.subr.mxu0 0.0
        %1100 = vmatpush1.msra.mxu0 0.0
        %1101 = vmatprep.subr.mxu0 0.0
        %1102 = vmatpush1.msra.mxu0 0.0
        %1103 = vmatprep.subr.mxu0 0.0
        %1104 = vmatpush1.msra.mxu0 0.0
        %1105 = vmatprep.subr.mxu0 0.0
        %1106 = vmatpush1.msra.mxu0 0.0
        %1107 = vmatprep.subr.mxu0 0.0
        %1108 = vmatpush1.msra.mxu0 0.0
        %1109 = vmatprep.subr.mxu0 0.0
        %1110 = vmatpush1.msra.mxu0 0.0
        %1111 = vmatprep.subr.mxu0 0.0
        %1112 = vmatpush1.msra.mxu0 0.0
        %1113 = vmatprep.subr.mxu0 0.0
        %1114 = vmatpush1.msra.mxu0 0.0
        %1115 = vmatprep.subr.mxu0 0.0
        %1116 = vmatpush1.msra.mxu0 0.0
        %1117 = vmatprep.mubr.f32.mxu0 0.0
        %v1118 = vand.u32 %v517, 4294901760
        %1119 = vmatmul.mubr.f32.gmra.mrb[0].mxu0 %v1118
        %v1120 = vpop.f32.mrb[0].mxu0
        %v1121 = vadd.f32 %v1028, %v1120
        %v1122 = vpop.f32.mrb[0].mxu0
        %1123 = vmatprep.mubr.f32.mxu0 0.0
        %v1124 = vand.u32 %v520, 4294901760
        %1125 = vmatmul.mubr.f32.gmra.mrb[0].mxu0 %v1124
        %v1126 = vpop.f32.mrb[0].mxu0
        %v1127 = vadd.f32 %v1034, %v1126
        %v1128 = vpop.f32.mrb[0].mxu0
        %1129 = vmatprep.mubr.f32.mxu0 0.0
        %v1130 = vand.u32 %v523, 4294901760
        %1131 = vmatmul.mubr.f32.gmra.mrb[0].mxu0 %v1130
        %v1132 = vpop.f32.mrb[0].mxu0
        %v1133 = vadd.f32 %v1040, %v1132
        %v1134 = vpop.f32.mrb[0].mxu0
        %1135 = vmatprep.mubr.f32.mxu0 0.0
        %v1136 = vand.u32 %v526, 4294901760
        %1137 = vmatmul.mubr.f32.gmra.mrb[0].mxu0 %v1136
        %v1138 = vpop.f32.mrb[0].mxu0
        %v1139 = vadd.f32 %v1046, %v1138
        %v1140 = vpop.f32.mrb[0].mxu0
        %1141 = vdwg.mxu0
        %1143 = vrot.lane.b32.xlu0 %v1127, 96
        %v1144 = vpop.permute.xlu0 %1143
        %vm1145 = vcmask 130048
        %v1147 = vsel %vm1145, %v1121, 0
        %v1149 = vsel %vm1145, %v1144, 0
        %1151 = vmatprep.subr.mxu0 0.0
        %v1152 = vand.u32 %v1149, 4294901760
        %1153 = vmatpush1.xpose.msra.mxu0 %v1152
        %1154 = vmatprep.subr.mxu0 0.0
        %1155 = vmatpush1.xpose.msra.mxu0 0.0
        %1156 = vmatprep.subr.mxu0 0.0
        %1157 = vmatpush1.xpose.msra.mxu0 0.0
        %1158 = vmatprep.subr.mxu0 0.0
        %1159 = vmatpush1.xpose.msra.mxu0 0.0
        %1160 = vmatprep.subr.mxu0 0.0
        %1161 = vmatpush1.xpose.msra.mxu0 0.0
        %1162 = vmatprep.subr.mxu0 0.0
        %1163 = vmatpush1.xpose.msra.mxu0 0.0
        %1164 = vmatprep.subr.mxu0 0.0
        %1165 = vmatpush1.xpose.msra.mxu0 0.0
        %1166 = vmatprep.subr.mxu0 0.0
        %1167 = vmatpush1.xpose.msra.mxu0 0.0
        %1168 = vmatprep.subr.mxu0 0.0
        %1169 = vmatpush1.xpose.msra.mxu0 0.0
        %1170 = vmatprep.subr.mxu0 0.0
        %1171 = vmatpush1.xpose.msra.mxu0 0.0
        %1172 = vmatprep.subr.mxu0 0.0
        %1173 = vmatpush1.xpose.msra.mxu0 0.0
        %1174 = vmatprep.subr.mxu0 0.0
        %1175 = vmatpush1.xpose.msra.mxu0 0.0
        %1176 = vmatprep.subr.mxu0 0.0
        %1177 = vmatpush1.xpose.msra.mxu0 0.0
        %1178 = vmatprep.subr.mxu0 0.0
        %1179 = vmatpush1.xpose.msra.mxu0 0.0
        %1180 = vmatprep.subr.mxu0 0.0
        %1181 = vmatpush1.xpose.msra.mxu0 0.0
        %1182 = vmatprep.subr.mxu0 0.0
        %1183 = vmatpush1.xpose.msra.mxu0 0.0
        %1184 = vmatprep.subr.mxu0 0.0
        %1185 = vmatpush1.xpose.msra.mxu0 0.0
        %1186 = vmatprep.subr.mxu0 0.0
        %1187 = vmatpush1.xpose.msra.mxu0 0.0
        %1188 = vmatprep.subr.mxu0 0.0
        %1189 = vmatpush1.xpose.msra.mxu0 0.0
        %1190 = vmatprep.subr.mxu0 0.0
        %1191 = vmatpush1.xpose.msra.mxu0 0.0
        %1192 = vmatprep.subr.mxu0 0.0
        %1193 = vmatpush1.xpose.msra.mxu0 0.0
        %1194 = vmatprep.subr.mxu0 0.0
        %1195 = vmatpush1.xpose.msra.mxu0 0.0
        %1196 = vmatprep.subr.mxu0 0.0
        %1197 = vmatpush1.xpose.msra.mxu0 0.0
        %1198 = vmatprep.subr.mxu0 0.0
        %1199 = vmatpush1.xpose.msra.mxu0 0.0
        %1200 = vmatprep.subr.mxu0 0.0
        %1201 = vmatpush1.xpose.msra.mxu0 0.0
        %1202 = vmatprep.subr.mxu0 0.0
        %1203 = vmatpush1.xpose.msra.mxu0 0.0
        %1204 = vmatprep.subr.mxu0 0.0
        %1205 = vmatpush1.xpose.msra.mxu0 0.0
        %1206 = vmatprep.subr.mxu0 0.0
        %1207 = vmatpush1.xpose.msra.mxu0 0.0
        %1208 = vmatprep.subr.mxu0 0.0
        %1209 = vmatpush1.xpose.msra.mxu0 0.0
        %1210 = vmatprep.subr.mxu0 0.0
        %1211 = vmatpush1.xpose.msra.mxu0 0.0
        %1212 = vmatprep.subr.mxu0 0.0
        %1213 = vmatpush1.xpose.msra.mxu0 0.0
        %1214 = vmatprep.subr.mxu0 0.0
        %1215 = vmatpush1.xpose.msra.mxu0 0.0
        %1216 = vmatprep.mubr.f32.mxu0 0.0
        %v1217 = vand.u32 %v1147, 4294901760
        %v1218 = vsub.f32 %v1147, %v1217
        %v1219 = vand.u32 %v1218, 4294901760
        %v1220 = vsub.f32 %v1218, %v1219
        %v1221 = vand.u32 %v1220, 4294901760
        %1222 = vmatmul.mubr.f32.gmra.mrb[0].mxu0 %v1221
        %v1223 = vpop.f32.mrb[0].mxu0
        %v1224 = vadd.f32 0.0, %v1223
        %v1225 = vpop.f32.mrb[0].mxu0
        %1226 = vdwg.mxu0
        %1227 = vmatprep.subr.mxu0 0.0
        %v1228 = vand.u32 %v1149, 4294901760
        %v1229 = vsub.f32 %v1149, %v1228
        %v1230 = vand.u32 %v1229, 4294901760
        %v1231 = vsub.f32 %v1229, %v1230
        %v1232 = vand.u32 %v1231, 4294901760
        %1233 = vmatpush1.xpose.msra.mxu0 %v1232
        %1234 = vmatprep.subr.mxu0 0.0
        %1235 = vmatpush1.xpose.msra.mxu0 0.0
        %1236 = vmatprep.subr.mxu0 0.0
        %1237 = vmatpush1.xpose.msra.mxu0 0.0
        %1238 = vmatprep.subr.mxu0 0.0
        %1239 = vmatpush1.xpose.msra.mxu0 0.0
        %1240 = vmatprep.subr.mxu0 0.0
        %1241 = vmatpush1.xpose.msra.mxu0 0.0
        %1242 = vmatprep.subr.mxu0 0.0
        %1243 = vmatpush1.xpose.msra.mxu0 0.0
        %1244 = vmatprep.subr.mxu0 0.0
        %1245 = vmatpush1.xpose.msra.mxu0 0.0
        %1246 = vmatprep.subr.mxu0 0.0
        %1247 = vmatpush1.xpose.msra.mxu0 0.0
        %1248 = vmatprep.subr.mxu0 0.0
        %1249 = vmatpush1.xpose.msra.mxu0 0.0
        %1250 = vmatprep.subr.mxu0 0.0
        %1251 = vmatpush1.xpose.msra.mxu0 0.0
        %1252 = vmatprep.subr.mxu0 0.0
        %1253 = vmatpush1.xpose.msra.mxu0 0.0
        %1254 = vmatprep.subr.mxu0 0.0
        %1255 = vmatpush1.xpose.msra.mxu0 0.0
        %1256 = vmatprep.subr.mxu0 0.0
        %1257 = vmatpush1.xpose.msra.mxu0 0.0
        %1258 = vmatprep.subr.mxu0 0.0
        %1259 = vmatpush1.xpose.msra.mxu0 0.0
        %1260 = vmatprep.subr.mxu0 0.0
        %1261 = vmatpush1.xpose.msra.mxu0 0.0
        %1262 = vmatprep.subr.mxu0 0.0
        %1263 = vmatpush1.xpose.msra.mxu0 0.0
        %1264 = vmatprep.subr.mxu0 0.0
        %1265 = vmatpush1.xpose.msra.mxu0 0.0
        %1266 = vmatprep.subr.mxu0 0.0
        %1267 = vmatpush1.xpose.msra.mxu0 0.0
        %1268 = vmatprep.subr.mxu0 0.0
        %1269 = vmatpush1.xpose.msra.mxu0 0.0
        %1270 = vmatprep.subr.mxu0 0.0
        %1271 = vmatpush1.xpose.msra.mxu0 0.0
        %1272 = vmatprep.subr.mxu0 0.0
        %1273 = vmatpush1.xpose.msra.mxu0 0.0
        %1274 = vmatprep.subr.mxu0 0.0
        %1275 = vmatpush1.xpose.msra.mxu0 0.0
        %1276 = vmatprep.subr.mxu0 0.0
        %1277 = vmatpush1.xpose.msra.mxu0 0.0
        %1278 = vmatprep.subr.mxu0 0.0
        %1279 = vmatpush1.xpose.msra.mxu0 0.0
        %1280 = vmatprep.subr.mxu0 0.0
        %1281 = vmatpush1.xpose.msra.mxu0 0.0
        %1282 = vmatprep.subr.mxu0 0.0
        %1283 = vmatpush1.xpose.msra.mxu0 0.0
        %1284 = vmatprep.subr.mxu0 0.0
        %1285 = vmatpush1.xpose.msra.mxu0 0.0
        %1286 = vmatprep.subr.mxu0 0.0
        %1287 = vmatpush1.xpose.msra.mxu0 0.0
        %1288 = vmatprep.subr.mxu0 0.0
        %1289 = vmatpush1.xpose.msra.mxu0 0.0
        %1290 = vmatprep.subr.mxu0 0.0
        %1291 = vmatpush1.xpose.msra.mxu0 0.0
        %1292 = vmatprep.subr.mxu0 0.0
        %1293 = vmatpush1.xpose.msra.mxu0 0.0
        %1294 = vmatprep.subr.mxu0 0.0
        %1295 = vmatpush1.xpose.msra.mxu0 0.0
        %1296 = vmatprep.mubr.f32.mxu0 0.0
        %v1297 = vand.u32 %v1147, 4294901760
        %1298 = vmatmul.mubr.f32.gmra.mrb[0].mxu0 %v1297
        %v1299 = vpop.f32.mrb[0].mxu0
        %v1300 = vadd.f32 %v1224, %v1299
        %v1301 = vpop.f32.mrb[0].mxu0
        %1302 = vdwg.mxu0
        %1303 = vmatprep.subr.mxu0 0.0
        %v1304 = vand.u32 %v1149, 4294901760
        %v1305 = vsub.f32 %v1149, %v1304
        %1306 = vmatpush1.xpose.msra.mxu0 %v1305
        %1307 = vmatprep.subr.mxu0 0.0
        %1308 = vmatpush1.xpose.msra.mxu0 0.0
        %1309 = vmatprep.subr.mxu0 0.0
        %1310 = vmatpush1.xpose.msra.mxu0 0.0
        %1311 = vmatprep.subr.mxu0 0.0
        %1312 = vmatpush1.xpose.msra.mxu0 0.0
        %1313 = vmatprep.subr.mxu0 0.0
        %1314 = vmatpush1.xpose.msra.mxu0 0.0
        %1315 = vmatprep.subr.mxu0 0.0
        %1316 = vmatpush1.xpose.msra.mxu0 0.0
        %1317 = vmatprep.subr.mxu0 0.0
        %1318 = vmatpush1.xpose.msra.mxu0 0.0
        %1319 = vmatprep.subr.mxu0 0.0
        %1320 = vmatpush1.xpose.msra.mxu0 0.0
        %1321 = vmatprep.subr.mxu0 0.0
        %1322 = vmatpush1.xpose.msra.mxu0 0.0
        %1323 = vmatprep.subr.mxu0 0.0
        %1324 = vmatpush1.xpose.msra.mxu0 0.0
        %1325 = vmatprep.subr.mxu0 0.0
        %1326 = vmatpush1.xpose.msra.mxu0 0.0
        %1327 = vmatprep.subr.mxu0 0.0
        %1328 = vmatpush1.xpose.msra.mxu0 0.0
        %1329 = vmatprep.subr.mxu0 0.0
        %1330 = vmatpush1.xpose.msra.mxu0 0.0
        %1331 = vmatprep.subr.mxu0 0.0
        %1332 = vmatpush1.xpose.msra.mxu0 0.0
        %1333 = vmatprep.subr.mxu0 0.0
        %1334 = vmatpush1.xpose.msra.mxu0 0.0
        %1335 = vmatprep.subr.mxu0 0.0
        %1336 = vmatpush1.xpose.msra.mxu0 0.0
        %1337 = vmatprep.subr.mxu0 0.0
        %1338 = vmatpush1.xpose.msra.mxu0 0.0
        %1339 = vmatprep.subr.mxu0 0.0
        %1340 = vmatpush1.xpose.msra.mxu0 0.0
        %1341 = vmatprep.subr.mxu0 0.0
        %1342 = vmatpush1.xpose.msra.mxu0 0.0
        %1343 = vmatprep.subr.mxu0 0.0
        %1344 = vmatpush1.xpose.msra.mxu0 0.0
        %1345 = vmatprep.subr.mxu0 0.0
        %1346 = vmatpush1.xpose.msra.mxu0 0.0
        %1347 = vmatprep.subr.mxu0 0.0
        %1348 = vmatpush1.xpose.msra.mxu0 0.0
        %1349 = vmatprep.subr.mxu0 0.0
        %1350 = vmatpush1.xpose.msra.mxu0 0.0
        %1351 = vmatprep.subr.mxu0 0.0
        %1352 = vmatpush1.xpose.msra.mxu0 0.0
        %1353 = vmatprep.subr.mxu0 0.0
        %1354 = vmatpush1.xpose.msra.mxu0 0.0
        %1355 = vmatprep.subr.mxu0 0.0
        %1356 = vmatpush1.xpose.msra.mxu0 0.0
        %1357 = vmatprep.subr.mxu0 0.0
        %1358 = vmatpush1.xpose.msra.mxu0 0.0
        %1359 = vmatprep.subr.mxu0 0.0
        %1360 = vmatpush1.xpose.msra.mxu0 0.0
        %1361 = vmatprep.subr.mxu0 0.0
        %1362 = vmatpush1.xpose.msra.mxu0 0.0
        %1363 = vmatprep.subr.mxu0 0.0
        %1364 = vmatpush1.xpose.msra.mxu0 0.0
        %1365 = vmatprep.subr.mxu0 0.0
        %1366 = vmatpush1.xpose.msra.mxu0 0.0
        %1367 = vmatprep.subr.mxu0 0.0
        %1368 = vmatpush1.xpose.msra.mxu0 0.0
        %1369 = vmatprep.mubr.f32.mxu0 0.0
        %v1370 = vand.u32 %v1147, 4294901760
        %v1371 = vsub.f32 %v1147, %v1370
        %1372 = vmatmul.mubr.f32.gmra.mrb[0].mxu0 %v1371
        %v1373 = vpop.f32.mrb[0].mxu0
        %v1374 = vadd.f32 %v1300, %v1373
        %v1375 = vpop.f32.mrb[0].mxu0
        %1376 = vdwg.mxu0
        %1377 = vmatprep.subr.mxu0 0.0
        %v1378 = vand.u32 %v1149, 4294901760
        %1379 = vmatpush1.xpose.msra.mxu0 %v1378
        %1380 = vmatprep.subr.mxu0 0.0
        %1381 = vmatpush1.xpose.msra.mxu0 0.0
        %1382 = vmatprep.subr.mxu0 0.0
        %1383 = vmatpush1.xpose.msra.mxu0 0.0
        %1384 = vmatprep.subr.mxu0 0.0
        %1385 = vmatpush1.xpose.msra.mxu0 0.0
        %1386 = vmatprep.subr.mxu0 0.0
        %1387 = vmatpush1.xpose.msra.mxu0 0.0
        %1388 = vmatprep.subr.mxu0 0.0
        %1389 = vmatpush1.xpose.msra.mxu0 0.0
        %1390 = vmatprep.subr.mxu0 0.0
        %1391 = vmatpush1.xpose.msra.mxu0 0.0
        %1392 = vmatprep.subr.mxu0 0.0
        %1393 = vmatpush1.xpose.msra.mxu0 0.0
        %1394 = vmatprep.subr.mxu0 0.0
        %1395 = vmatpush1.xpose.msra.mxu0 0.0
        %1396 = vmatprep.subr.mxu0 0.0
        %1397 = vmatpush1.xpose.msra.mxu0 0.0
        %1398 = vmatprep.subr.mxu0 0.0
        %1399 = vmatpush1.xpose.msra.mxu0 0.0
        %1400 = vmatprep.subr.mxu0 0.0
        %1401 = vmatpush1.xpose.msra.mxu0 0.0
        %1402 = vmatprep.subr.mxu0 0.0
        %1403 = vmatpush1.xpose.msra.mxu0 0.0
        %1404 = vmatprep.subr.mxu0 0.0
        %1405 = vmatpush1.xpose.msra.mxu0 0.0
        %1406 = vmatprep.subr.mxu0 0.0
        %1407 = vmatpush1.xpose.msra.mxu0 0.0
        %1408 = vmatprep.subr.mxu0 0.0
        %1409 = vmatpush1.xpose.msra.mxu0 0.0
        %1410 = vmatprep.subr.mxu0 0.0
        %1411 = vmatpush1.xpose.msra.mxu0 0.0
        %1412 = vmatprep.subr.mxu0 0.0
        %1413 = vmatpush1.xpose.msra.mxu0 0.0
        %1414 = vmatprep.subr.mxu0 0.0
        %1415 = vmatpush1.xpose.msra.mxu0 0.0
        %1416 = vmatprep.subr.mxu0 0.0
        %1417 = vmatpush1.xpose.msra.mxu0 0.0
        %1418 = vmatprep.subr.mxu0 0.0
        %1419 = vmatpush1.xpose.msra.mxu0 0.0
        %1420 = vmatprep.subr.mxu0 0.0
        %1421 = vmatpush1.xpose.msra.mxu0 0.0
        %1422 = vmatprep.subr.mxu0 0.0
        %1423 = vmatpush1.xpose.msra.mxu0 0.0
        %1424 = vmatprep.subr.mxu0 0.0
        %1425 = vmatpush1.xpose.msra.mxu0 0.0
        %1426 = vmatprep.subr.mxu0 0.0
        %1427 = vmatpush1.xpose.msra.mxu0 0.0
        %1428 = vmatprep.subr.mxu0 0.0
        %1429 = vmatpush1.xpose.msra.mxu0 0.0
        %1430 = vmatprep.subr.mxu0 0.0
        %1431 = vmatpush1.xpose.msra.mxu0 0.0
        %1432 = vmatprep.subr.mxu0 0.0
        %1433 = vmatpush1.xpose.msra.mxu0 0.0
        %1434 = vmatprep.subr.mxu0 0.0
        %1435 = vmatpush1.xpose.msra.mxu0 0.0
        %1436 = vmatprep.subr.mxu0 0.0
        %1437 = vmatpush1.xpose.msra.mxu0 0.0
        %1438 = vmatprep.subr.mxu0 0.0
        %1439 = vmatpush1.xpose.msra.mxu0 0.0
        %1440 = vmatprep.subr.mxu0 0.0
        %1441 = vmatpush1.xpose.msra.mxu0 0.0
        %1442 = vmatprep.mubr.f32.mxu0 0.0
        %v1443 = vand.u32 %v1147, 4294901760
        %v1444 = vsub.f32 %v1147, %v1443
        %v1445 = vand.u32 %v1444, 4294901760
        %1446 = vmatmul.mubr.f32.gmra.mrb[0].mxu0 %v1445
        %v1447 = vpop.f32.mrb[0].mxu0
        %v1448 = vadd.f32 %v1374, %v1447
        %v1449 = vpop.f32.mrb[0].mxu0
        %1450 = vdwg.mxu0
        %1451 = vmatprep.subr.mxu0 0.0
        %v1452 = vand.u32 %v1149, 4294901760
        %v1453 = vsub.f32 %v1149, %v1452
        %v1454 = vand.u32 %v1453, 4294901760
        %1455 = vmatpush1.xpose.msra.mxu0 %v1454
        %1456 = vmatprep.subr.mxu0 0.0
        %1457 = vmatpush1.xpose.msra.mxu0 0.0
        %1458 = vmatprep.subr.mxu0 0.0
        %1459 = vmatpush1.xpose.msra.mxu0 0.0
        %1460 = vmatprep.subr.mxu0 0.0
        %1461 = vmatpush1.xpose.msra.mxu0 0.0
        %1462 = vmatprep.subr.mxu0 0.0
        %1463 = vmatpush1.xpose.msra.mxu0 0.0
        %1464 = vmatprep.subr.mxu0 0.0
        %1465 = vmatpush1.xpose.msra.mxu0 0.0
        %1466 = vmatprep.subr.mxu0 0.0
        %1467 = vmatpush1.xpose.msra.mxu0 0.0
        %1468 = vmatprep.subr.mxu0 0.0
        %1469 = vmatpush1.xpose.msra.mxu0 0.0
        %1470 = vmatprep.subr.mxu0 0.0
        %1471 = vmatpush1.xpose.msra.mxu0 0.0
        %1472 = vmatprep.subr.mxu0 0.0
        %1473 = vmatpush1.xpose.msra.mxu0 0.0
        %1474 = vmatprep.subr.mxu0 0.0
        %1475 = vmatpush1.xpose.msra.mxu0 0.0
        %1476 = vmatprep.subr.mxu0 0.0
        %1477 = vmatpush1.xpose.msra.mxu0 0.0
        %1478 = vmatprep.subr.mxu0 0.0
        %1479 = vmatpush1.xpose.msra.mxu0 0.0
        %1480 = vmatprep.subr.mxu0 0.0
        %1481 = vmatpush1.xpose.msra.mxu0 0.0
        %1482 = vmatprep.subr.mxu0 0.0
        %1483 = vmatpush1.xpose.msra.mxu0 0.0
        %1484 = vmatprep.subr.mxu0 0.0
        %1485 = vmatpush1.xpose.msra.mxu0 0.0
        %1486 = vmatprep.subr.mxu0 0.0
        %1487 = vmatpush1.xpose.msra.mxu0 0.0
        %1488 = vmatprep.subr.mxu0 0.0
        %1489 = vmatpush1.xpose.msra.mxu0 0.0
        %1490 = vmatprep.subr.mxu0 0.0
        %1491 = vmatpush1.xpose.msra.mxu0 0.0
        %1492 = vmatprep.subr.mxu0 0.0
        %1493 = vmatpush1.xpose.msra.mxu0 0.0
        %1494 = vmatprep.subr.mxu0 0.0
        %1495 = vmatpush1.xpose.msra.mxu0 0.0
        %1496 = vmatprep.subr.mxu0 0.0
        %1497 = vmatpush1.xpose.msra.mxu0 0.0
        %1498 = vmatprep.subr.mxu0 0.0
        %1499 = vmatpush1.xpose.msra.mxu0 0.0
        %1500 = vmatprep.subr.mxu0 0.0
        %1501 = vmatpush1.xpose.msra.mxu0 0.0
        %1502 = vmatprep.subr.mxu0 0.0
        %1503 = vmatpush1.xpose.msra.mxu0 0.0
        %1504 = vmatprep.subr.mxu0 0.0
        %1505 = vmatpush1.xpose.msra.mxu0 0.0
        %1506 = vmatprep.subr.mxu0 0.0
        %1507 = vmatpush1.xpose.msra.mxu0 0.0
        %1508 = vmatprep.subr.mxu0 0.0
        %1509 = vmatpush1.xpose.msra.mxu0 0.0
        %1510 = vmatprep.subr.mxu0 0.0
        %1511 = vmatpush1.xpose.msra.mxu0 0.0
        %1512 = vmatprep.subr.mxu0 0.0
        %1513 = vmatpush1.xpose.msra.mxu0 0.0
        %1514 = vmatprep.subr.mxu0 0.0
        %1515 = vmatpush1.xpose.msra.mxu0 0.0
        %1516 = vmatprep.subr.mxu0 0.0
        %1517 = vmatpush1.xpose.msra.mxu0 0.0
        %1518 = vmatprep.mubr.f32.mxu0 0.0
        %v1519 = vand.u32 %v1147, 4294901760
        %1520 = vmatmul.mubr.f32.gmra.mrb[0].mxu0 %v1519
        %v1521 = vpop.f32.mrb[0].mxu0
        %v1522 = vadd.f32 %v1448, %v1521
        %v1523 = vpop.f32.mrb[0].mxu0
        %1524 = vdwg.mxu0
        %1525 = vmatprep.subr.mxu0 0.0
        %v1526 = vand.u32 %v1149, 4294901760
        %1527 = vmatpush1.xpose.msra.mxu0 %v1526
        %1528 = vmatprep.subr.mxu0 0.0
        %1529 = vmatpush1.xpose.msra.mxu0 0.0
        %1530 = vmatprep.subr.mxu0 0.0
        %1531 = vmatpush1.xpose.msra.mxu0 0.0
        %1532 = vmatprep.subr.mxu0 0.0
        %1533 = vmatpush1.xpose.msra.mxu0 0.0
        %1534 = vmatprep.subr.mxu0 0.0
        %1535 = vmatpush1.xpose.msra.mxu0 0.0
        %1536 = vmatprep.subr.mxu0 0.0
        %1537 = vmatpush1.xpose.msra.mxu0 0.0
        %1538 = vmatprep.subr.mxu0 0.0
        %1539 = vmatpush1.xpose.msra.mxu0 0.0
        %1540 = vmatprep.subr.mxu0 0.0
        %1541 = vmatpush1.xpose.msra.mxu0 0.0
        %1542 = vmatprep.subr.mxu0 0.0
        %1543 = vmatpush1.xpose.msra.mxu0 0.0
        %1544 = vmatprep.subr.mxu0 0.0
        %1545 = vmatpush1.xpose.msra.mxu0 0.0
        %1546 = vmatprep.subr.mxu0 0.0
        %1547 = vmatpush1.xpose.msra.mxu0 0.0
        %1548 = vmatprep.subr.mxu0 0.0
        %1549 = vmatpush1.xpose.msra.mxu0 0.0
        %1550 = vmatprep.subr.mxu0 0.0
        %1551 = vmatpush1.xpose.msra.mxu0 0.0
        %1552 = vmatprep.subr.mxu0 0.0
        %1553 = vmatpush1.xpose.msra.mxu0 0.0
        %1554 = vmatprep.subr.mxu0 0.0
        %1555 = vmatpush1.xpose.msra.mxu0 0.0
        %1556 = vmatprep.subr.mxu0 0.0
        %1557 = vmatpush1.xpose.msra.mxu0 0.0
        %1558 = vmatprep.subr.mxu0 0.0
        %1559 = vmatpush1.xpose.msra.mxu0 0.0
        %1560 = vmatprep.subr.mxu0 0.0
        %1561 = vmatpush1.xpose.msra.mxu0 0.0
        %1562 = vmatprep.subr.mxu0 0.0
        %1563 = vmatpush1.xpose.msra.mxu0 0.0
        %1564 = vmatprep.subr.mxu0 0.0
        %1565 = vmatpush1.xpose.msra.mxu0 0.0
        %1566 = vmatprep.subr.mxu0 0.0
        %1567 = vmatpush1.xpose.msra.mxu0 0.0
        %1568 = vmatprep.subr.mxu0 0.0
        %1569 = vmatpush1.xpose.msra.mxu0 0.0
        %1570 = vmatprep.subr.mxu0 0.0
        %1571 = vmatpush1.xpose.msra.mxu0 0.0
        %1572 = vmatprep.subr.mxu0 0.0
        %1573 = vmatpush1.xpose.msra.mxu0 0.0
        %1574 = vmatprep.subr.mxu0 0.0
        %1575 = vmatpush1.xpose.msra.mxu0 0.0
        %1576 = vmatprep.subr.mxu0 0.0
        %1577 = vmatpush1.xpose.msra.mxu0 0.0
        %1578 = vmatprep.subr.mxu0 0.0
        %1579 = vmatpush1.xpose.msra.mxu0 0.0
        %1580 = vmatprep.subr.mxu0 0.0
        %1581 = vmatpush1.xpose.msra.mxu0 0.0
        %1582 = vmatprep.subr.mxu0 0.0
        %1583 = vmatpush1.xpose.msra.mxu0 0.0
        %1584 = vmatprep.subr.mxu0 0.0
        %1585 = vmatpush1.xpose.msra.mxu0 0.0
        %1586 = vmatprep.subr.mxu0 0.0
        %1587 = vmatpush1.xpose.msra.mxu0 0.0
        %1588 = vmatprep.subr.mxu0 0.0
        %1589 = vmatpush1.xpose.msra.mxu0 0.0
        %1590 = vmatprep.mubr.f32.mxu0 0.0
        %v1591 = vand.u32 %v1147, 4294901760
        %1592 = vmatmul.mubr.f32.gmra.mrb[0].mxu0 %v1591
        %v1593 = vpop.f32.mrb[0].mxu0
        %v1594 = vadd.f32 %v1522, %v1593
        %v1595 = vpop.f32.mrb[0].mxu0
        %1596 = vdwg.mxu0
        %1598 = vrot.lane.b32.xlu0 %v1139, 96
        %v1599 = vpop.permute.xlu0 %1598
        %v1601 = vsel %vm1145, %v1133, 0
        %v1603 = vsel %vm1145, %v1599, 0
        %1605 = vmatprep.subr.mxu0 0.0
        %v1606 = vand.u32 %v1603, 4294901760
        %1607 = vmatpush1.xpose.msra.mxu0 %v1606
        %1608 = vmatprep.subr.mxu0 0.0
        %1609 = vmatpush1.xpose.msra.mxu0 0.0
        %1610 = vmatprep.subr.mxu0 0.0
        %1611 = vmatpush1.xpose.msra.mxu0 0.0
        %1612 = vmatprep.subr.mxu0 0.0
        %1613 = vmatpush1.xpose.msra.mxu0 0.0
        %1614 = vmatprep.subr.mxu0 0.0
        %1615 = vmatpush1.xpose.msra.mxu0 0.0
        %1616 = vmatprep.subr.mxu0 0.0
        %1617 = vmatpush1.xpose.msra.mxu0 0.0
        %1618 = vmatprep.subr.mxu0 0.0
        %1619 = vmatpush1.xpose.msra.mxu0 0.0
        %1620 = vmatprep.subr.mxu0 0.0
        %1621 = vmatpush1.xpose.msra.mxu0 0.0
        %1622 = vmatprep.subr.mxu0 0.0
        %1623 = vmatpush1.xpose.msra.mxu0 0.0
        %1624 = vmatprep.subr.mxu0 0.0
        %1625 = vmatpush1.xpose.msra.mxu0 0.0
        %1626 = vmatprep.subr.mxu0 0.0
        %1627 = vmatpush1.xpose.msra.mxu0 0.0
        %1628 = vmatprep.subr.mxu0 0.0
        %1629 = vmatpush1.xpose.msra.mxu0 0.0
        %1630 = vmatprep.subr.mxu0 0.0
        %1631 = vmatpush1.xpose.msra.mxu0 0.0
        %1632 = vmatprep.subr.mxu0 0.0
        %1633 = vmatpush1.xpose.msra.mxu0 0.0
        %1634 = vmatprep.subr.mxu0 0.0
        %1635 = vmatpush1.xpose.msra.mxu0 0.0
        %1636 = vmatprep.subr.mxu0 0.0
        %1637 = vmatpush1.xpose.msra.mxu0 0.0
        %1638 = vmatprep.subr.mxu0 0.0
        %1639 = vmatpush1.xpose.msra.mxu0 0.0
        %1640 = vmatprep.subr.mxu0 0.0
        %1641 = vmatpush1.xpose.msra.mxu0 0.0
        %1642 = vmatprep.subr.mxu0 0.0
        %1643 = vmatpush1.xpose.msra.mxu0 0.0
        %1644 = vmatprep.subr.mxu0 0.0
        %1645 = vmatpush1.xpose.msra.mxu0 0.0
        %1646 = vmatprep.subr.mxu0 0.0
        %1647 = vmatpush1.xpose.msra.mxu0 0.0
        %1648 = vmatprep.subr.mxu0 0.0
        %1649 = vmatpush1.xpose.msra.mxu0 0.0
        %1650 = vmatprep.subr.mxu0 0.0
        %1651 = vmatpush1.xpose.msra.mxu0 0.0
        %1652 = vmatprep.subr.mxu0 0.0
        %1653 = vmatpush1.xpose.msra.mxu0 0.0
        %1654 = vmatprep.subr.mxu0 0.0
        %1655 = vmatpush1.xpose.msra.mxu0 0.0
        %1656 = vmatprep.subr.mxu0 0.0
        %1657 = vmatpush1.xpose.msra.mxu0 0.0
        %1658 = vmatprep.subr.mxu0 0.0
        %1659 = vmatpush1.xpose.msra.mxu0 0.0
        %1660 = vmatprep.subr.mxu0 0.0
        %1661 = vmatpush1.xpose.msra.mxu0 0.0
        %1662 = vmatprep.subr.mxu0 0.0
        %1663 = vmatpush1.xpose.msra.mxu0 0.0
        %1664 = vmatprep.subr.mxu0 0.0
        %1665 = vmatpush1.xpose.msra.mxu0 0.0
        %1666 = vmatprep.subr.mxu0 0.0
        %1667 = vmatpush1.xpose.msra.mxu0 0.0
        %1668 = vmatprep.subr.mxu0 0.0
        %1669 = vmatpush1.xpose.msra.mxu0 0.0
        %1670 = vmatprep.mubr.f32.mxu0 0.0
        %v1671 = vand.u32 %v1601, 4294901760
        %v1672 = vsub.f32 %v1601, %v1671
        %v1673 = vand.u32 %v1672, 4294901760
        %v1674 = vsub.f32 %v1672, %v1673
        %v1675 = vand.u32 %v1674, 4294901760
        %1676 = vmatmul.mubr.f32.gmra.mrb[0].mxu0 %v1675
        %v1677 = vpop.f32.mrb[0].mxu0
        %v1678 = vadd.f32 0.0, %v1677
        %v1679 = vpop.f32.mrb[0].mxu0
        %1680 = vdwg.mxu0
        %1681 = vmatprep.subr.mxu0 0.0
        %v1682 = vand.u32 %v1603, 4294901760
        %v1683 = vsub.f32 %v1603, %v1682
        %v1684 = vand.u32 %v1683, 4294901760
        %v1685 = vsub.f32 %v1683, %v1684
        %v1686 = vand.u32 %v1685, 4294901760
        %1687 = vmatpush1.xpose.msra.mxu0 %v1686
        %1688 = vmatprep.subr.mxu0 0.0
        %1689 = vmatpush1.xpose.msra.mxu0 0.0
        %1690 = vmatprep.subr.mxu0 0.0
        %1691 = vmatpush1.xpose.msra.mxu0 0.0
        %1692 = vmatprep.subr.mxu0 0.0
        %1693 = vmatpush1.xpose.msra.mxu0 0.0
        %1694 = vmatprep.subr.mxu0 0.0
        %1695 = vmatpush1.xpose.msra.mxu0 0.0
        %1696 = vmatprep.subr.mxu0 0.0
        %1697 = vmatpush1.xpose.msra.mxu0 0.0
        %1698 = vmatprep.subr.mxu0 0.0
        %1699 = vmatpush1.xpose.msra.mxu0 0.0
        %1700 = vmatprep.subr.mxu0 0.0
        %1701 = vmatpush1.xpose.msra.mxu0 0.0
        %1702 = vmatprep.subr.mxu0 0.0
        %1703 = vmatpush1.xpose.msra.mxu0 0.0
        %1704 = vmatprep.subr.mxu0 0.0
        %1705 = vmatpush1.xpose.msra.mxu0 0.0
        %1706 = vmatprep.subr.mxu0 0.0
        %1707 = vmatpush1.xpose.msra.mxu0 0.0
        %1708 = vmatprep.subr.mxu0 0.0
        %1709 = vmatpush1.xpose.msra.mxu0 0.0
        %1710 = vmatprep.subr.mxu0 0.0
        %1711 = vmatpush1.xpose.msra.mxu0 0.0
        %1712 = vmatprep.subr.mxu0 0.0
        %1713 = vmatpush1.xpose.msra.mxu0 0.0
        %1714 = vmatprep.subr.mxu0 0.0
        %1715 = vmatpush1.xpose.msra.mxu0 0.0
        %1716 = vmatprep.subr.mxu0 0.0
        %1717 = vmatpush1.xpose.msra.mxu0 0.0
        %1718 = vmatprep.subr.mxu0 0.0
        %1719 = vmatpush1.xpose.msra.mxu0 0.0
        %1720 = vmatprep.subr.mxu0 0.0
        %1721 = vmatpush1.xpose.msra.mxu0 0.0
        %1722 = vmatprep.subr.mxu0 0.0
        %1723 = vmatpush1.xpose.msra.mxu0 0.0
        %1724 = vmatprep.subr.mxu0 0.0
        %1725 = vmatpush1.xpose.msra.mxu0 0.0
        %1726 = vmatprep.subr.mxu0 0.0
        %1727 = vmatpush1.xpose.msra.mxu0 0.0
        %1728 = vmatprep.subr.mxu0 0.0
        %1729 = vmatpush1.xpose.msra.mxu0 0.0
        %1730 = vmatprep.subr.mxu0 0.0
        %1731 = vmatpush1.xpose.msra.mxu0 0.0
        %1732 = vmatprep.subr.mxu0 0.0
        %1733 = vmatpush1.xpose.msra.mxu0 0.0
        %1734 = vmatprep.subr.mxu0 0.0
        %1735 = vmatpush1.xpose.msra.mxu0 0.0
        %1736 = vmatprep.subr.mxu0 0.0
        %1737 = vmatpush1.xpose.msra.mxu0 0.0
        %1738 = vmatprep.subr.mxu0 0.0
        %1739 = vmatpush1.xpose.msra.mxu0 0.0
        %1740 = vmatprep.subr.mxu0 0.0
        %1741 = vmatpush1.xpose.msra.mxu0 0.0
        %1742 = vmatprep.subr.mxu0 0.0
        %1743 = vmatpush1.xpose.msra.mxu0 0.0
        %1744 = vmatprep.subr.mxu0 0.0
        %1745 = vmatpush1.xpose.msra.mxu0 0.0
        %1746 = vmatprep.subr.mxu0 0.0
        %1747 = vmatpush1.xpose.msra.mxu0 0.0
        %1748 = vmatprep.subr.mxu0 0.0
        %1749 = vmatpush1.xpose.msra.mxu0 0.0
        %1750 = vmatprep.mubr.f32.mxu0 0.0
        %v1751 = vand.u32 %v1601, 4294901760
        %1752 = vmatmul.mubr.f32.gmra.mrb[0].mxu0 %v1751
        %v1753 = vpop.f32.mrb[0].mxu0
        %v1754 = vadd.f32 %v1678, %v1753
        %v1755 = vpop.f32.mrb[0].mxu0
        %1756 = vdwg.mxu0
        %1757 = vmatprep.subr.mxu0 0.0
        %v1758 = vand.u32 %v1603, 4294901760
        %v1759 = vsub.f32 %v1603, %v1758
        %1760 = vmatpush1.xpose.msra.mxu0 %v1759
        %1761 = vmatprep.subr.mxu0 0.0
        %1762 = vmatpush1.xpose.msra.mxu0 0.0
        %1763 = vmatprep.subr.mxu0 0.0
        %1764 = vmatpush1.xpose.msra.mxu0 0.0
        %1765 = vmatprep.subr.mxu0 0.0
        %1766 = vmatpush1.xpose.msra.mxu0 0.0
        %1767 = vmatprep.subr.mxu0 0.0
        %1768 = vmatpush1.xpose.msra.mxu0 0.0
        %1769 = vmatprep.subr.mxu0 0.0
        %1770 = vmatpush1.xpose.msra.mxu0 0.0
        %1771 = vmatprep.subr.mxu0 0.0
        %1772 = vmatpush1.xpose.msra.mxu0 0.0
        %1773 = vmatprep.subr.mxu0 0.0
        %1774 = vmatpush1.xpose.msra.mxu0 0.0
        %1775 = vmatprep.subr.mxu0 0.0
        %1776 = vmatpush1.xpose.msra.mxu0 0.0
        %1777 = vmatprep.subr.mxu0 0.0
        %1778 = vmatpush1.xpose.msra.mxu0 0.0
        %1779 = vmatprep.subr.mxu0 0.0
        %1780 = vmatpush1.xpose.msra.mxu0 0.0
        %1781 = vmatprep.subr.mxu0 0.0
        %1782 = vmatpush1.xpose.msra.mxu0 0.0
        %1783 = vmatprep.subr.mxu0 0.0
        %1784 = vmatpush1.xpose.msra.mxu0 0.0
        %1785 = vmatprep.subr.mxu0 0.0
        %1786 = vmatpush1.xpose.msra.mxu0 0.0
        %1787 = vmatprep.subr.mxu0 0.0
        %1788 = vmatpush1.xpose.msra.mxu0 0.0
        %1789 = vmatprep.subr.mxu0 0.0
        %1790 = vmatpush1.xpose.msra.mxu0 0.0
        %1791 = vmatprep.subr.mxu0 0.0
        %1792 = vmatpush1.xpose.msra.mxu0 0.0
        %1793 = vmatprep.subr.mxu0 0.0
        %1794 = vmatpush1.xpose.msra.mxu0 0.0
        %1795 = vmatprep.subr.mxu0 0.0
        %1796 = vmatpush1.xpose.msra.mxu0 0.0
        %1797 = vmatprep.subr.mxu0 0.0
        %1798 = vmatpush1.xpose.msra.mxu0 0.0
        %1799 = vmatprep.subr.mxu0 0.0
        %1800 = vmatpush1.xpose.msra.mxu0 0.0
        %1801 = vmatprep.subr.mxu0 0.0
        %1802 = vmatpush1.xpose.msra.mxu0 0.0
        %1803 = vmatprep.subr.mxu0 0.0
        %1804 = vmatpush1.xpose.msra.mxu0 0.0
        %1805 = vmatprep.subr.mxu0 0.0
        %1806 = vmatpush1.xpose.msra.mxu0 0.0
        %1807 = vmatprep.subr.mxu0 0.0
        %1808 = vmatpush1.xpose.msra.mxu0 0.0
        %1809 = vmatprep.subr.mxu0 0.0
        %1810 = vmatpush1.xpose.msra.mxu0 0.0
        %1811 = vmatprep.subr.mxu0 0.0
        %1812 = vmatpush1.xpose.msra.mxu0 0.0
        %1813 = vmatprep.subr.mxu0 0.0
        %1814 = vmatpush1.xpose.msra.mxu0 0.0
        %1815 = vmatprep.subr.mxu0 0.0
        %1816 = vmatpush1.xpose.msra.mxu0 0.0
        %1817 = vmatprep.subr.mxu0 0.0
        %1818 = vmatpush1.xpose.msra.mxu0 0.0
        %1819 = vmatprep.subr.mxu0 0.0
        %1820 = vmatpush1.xpose.msra.mxu0 0.0
        %1821 = vmatprep.subr.mxu0 0.0
        %1822 = vmatpush1.xpose.msra.mxu0 0.0
        %1823 = vmatprep.mubr.f32.mxu0 0.0
        %v1824 = vand.u32 %v1601, 4294901760
        %v1825 = vsub.f32 %v1601, %v1824
        %1826 = vmatmul.mubr.f32.gmra.mrb[0].mxu0 %v1825
        %v1827 = vpop.f32.mrb[0].mxu0
        %v1828 = vadd.f32 %v1754, %v1827
        %v1829 = vpop.f32.mrb[0].mxu0
        %1830 = vdwg.mxu0
        %1831 = vmatprep.subr.mxu0 0.0
        %v1832 = vand.u32 %v1603, 4294901760
        %1833 = vmatpush1.xpose.msra.mxu0 %v1832
        %1834 = vmatprep.subr.mxu0 0.0
        %1835 = vmatpush1.xpose.msra.mxu0 0.0
        %1836 = vmatprep.subr.mxu0 0.0
        %1837 = vmatpush1.xpose.msra.mxu0 0.0
        %1838 = vmatprep.subr.mxu0 0.0
        %1839 = vmatpush1.xpose.msra.mxu0 0.0
        %1840 = vmatprep.subr.mxu0 0.0
        %1841 = vmatpush1.xpose.msra.mxu0 0.0
        %1842 = vmatprep.subr.mxu0 0.0
        %1843 = vmatpush1.xpose.msra.mxu0 0.0
        %1844 = vmatprep.subr.mxu0 0.0
        %1845 = vmatpush1.xpose.msra.mxu0 0.0
        %1846 = vmatprep.subr.mxu0 0.0
        %1847 = vmatpush1.xpose.msra.mxu0 0.0
        %1848 = vmatprep.subr.mxu0 0.0
        %1849 = vmatpush1.xpose.msra.mxu0 0.0
        %1850 = vmatprep.subr.mxu0 0.0
        %1851 = vmatpush1.xpose.msra.mxu0 0.0
        %1852 = vmatprep.subr.mxu0 0.0
        %1853 = vmatpush1.xpose.msra.mxu0 0.0
        %1854 = vmatprep.subr.mxu0 0.0
        %1855 = vmatpush1.xpose.msra.mxu0 0.0
        %1856 = vmatprep.subr.mxu0 0.0
        %1857 = vmatpush1.xpose.msra.mxu0 0.0
        %1858 = vmatprep.subr.mxu0 0.0
        %1859 = vmatpush1.xpose.msra.mxu0 0.0
        %1860 = vmatprep.subr.mxu0 0.0
        %1861 = vmatpush1.xpose.msra.mxu0 0.0
        %1862 = vmatprep.subr.mxu0 0.0
        %1863 = vmatpush1.xpose.msra.mxu0 0.0
        %1864 = vmatprep.subr.mxu0 0.0
        %1865 = vmatpush1.xpose.msra.mxu0 0.0
        %1866 = vmatprep.subr.mxu0 0.0
        %1867 = vmatpush1.xpose.msra.mxu0 0.0
        %1868 = vmatprep.subr.mxu0 0.0
        %1869 = vmatpush1.xpose.msra.mxu0 0.0
        %1870 = vmatprep.subr.mxu0 0.0
        %1871 = vmatpush1.xpose.msra.mxu0 0.0
        %1872 = vmatprep.subr.mxu0 0.0
        %1873 = vmatpush1.xpose.msra.mxu0 0.0
        %1874 = vmatprep.subr.mxu0 0.0
        %1875 = vmatpush1.xpose.msra.mxu0 0.0
        %1876 = vmatprep.subr.mxu0 0.0
        %1877 = vmatpush1.xpose.msra.mxu0 0.0
        %1878 = vmatprep.subr.mxu0 0.0
        %1879 = vmatpush1.xpose.msra.mxu0 0.0
        %1880 = vmatprep.subr.mxu0 0.0
        %1881 = vmatpush1.xpose.msra.mxu0 0.0
        %1882 = vmatprep.subr.mxu0 0.0
        %1883 = vmatpush1.xpose.msra.mxu0 0.0
        %1884 = vmatprep.subr.mxu0 0.0
        %1885 = vmatpush1.xpose.msra.mxu0 0.0
        %1886 = vmatprep.subr.mxu0 0.0
        %1887 = vmatpush1.xpose.msra.mxu0 0.0
        %1888 = vmatprep.subr.mxu0 0.0
        %1889 = vmatpush1.xpose.msra.mxu0 0.0
        %1890 = vmatprep.subr.mxu0 0.0
        %1891 = vmatpush1.xpose.msra.mxu0 0.0
        %1892 = vmatprep.subr.mxu0 0.0
        %1893 = vmatpush1.xpose.msra.mxu0 0.0
        %1894 = vmatprep.subr.mxu0 0.0
        %1895 = vmatpush1.xpose.msra.mxu0 0.0
        %1896 = vmatprep.mubr.f32.mxu0 0.0
        %v1897 = vand.u32 %v1601, 4294901760
        %v1898 = vsub.f32 %v1601, %v1897
        %v1899 = vand.u32 %v1898, 4294901760
        %1900 = vmatmul.mubr.f32.gmra.mrb[0].mxu0 %v1899
        %v1901 = vpop.f32.mrb[0].mxu0
        %v1902 = vadd.f32 %v1828, %v1901
        %v1903 = vpop.f32.mrb[0].mxu0
        %1904 = vdwg.mxu0
        %1905 = vmatprep.subr.mxu0 0.0
        %v1906 = vand.u32 %v1603, 4294901760
        %v1907 = vsub.f32 %v1603, %v1906
        %v1908 = vand.u32 %v1907, 4294901760
        %1909 = vmatpush1.xpose.msra.mxu0 %v1908
        %1910 = vmatprep.subr.mxu0 0.0
        %1911 = vmatpush1.xpose.msra.mxu0 0.0
        %1912 = vmatprep.subr.mxu0 0.0
        %1913 = vmatpush1.xpose.msra.mxu0 0.0
        %1914 = vmatprep.subr.mxu0 0.0
        %1915 = vmatpush1.xpose.msra.mxu0 0.0
        %1916 = vmatprep.subr.mxu0 0.0
        %1917 = vmatpush1.xpose.msra.mxu0 0.0
        %1918 = vmatprep.subr.mxu0 0.0
        %1919 = vmatpush1.xpose.msra.mxu0 0.0
        %1920 = vmatprep.subr.mxu0 0.0
        %1921 = vmatpush1.xpose.msra.mxu0 0.0
        %1922 = vmatprep.subr.mxu0 0.0
        %1923 = vmatpush1.xpose.msra.mxu0 0.0
        %1924 = vmatprep.subr.mxu0 0.0
        %1925 = vmatpush1.xpose.msra.mxu0 0.0
        %1926 = vmatprep.subr.mxu0 0.0
        %1927 = vmatpush1.xpose.msra.mxu0 0.0
        %1928 = vmatprep.subr.mxu0 0.0
        %1929 = vmatpush1.xpose.msra.mxu0 0.0
        %1930 = vmatprep.subr.mxu0 0.0
        %1931 = vmatpush1.xpose.msra.mxu0 0.0
        %1932 = vmatprep.subr.mxu0 0.0
        %1933 = vmatpush1.xpose.msra.mxu0 0.0
        %1934 = vmatprep.subr.mxu0 0.0
        %1935 = vmatpush1.xpose.msra.mxu0 0.0
        %1936 = vmatprep.subr.mxu0 0.0
        %1937 = vmatpush1.xpose.msra.mxu0 0.0
        %1938 = vmatprep.subr.mxu0 0.0
        %1939 = vmatpush1.xpose.msra.mxu0 0.0
        %1940 = vmatprep.subr.mxu0 0.0
        %1941 = vmatpush1.xpose.msra.mxu0 0.0
        %1942 = vmatprep.subr.mxu0 0.0
        %1943 = vmatpush1.xpose.msra.mxu0 0.0
        %1944 = vmatprep.subr.mxu0 0.0
        %1945 = vmatpush1.xpose.msra.mxu0 0.0
        %1946 = vmatprep.subr.mxu0 0.0
        %1947 = vmatpush1.xpose.msra.mxu0 0.0
        %1948 = vmatprep.subr.mxu0 0.0
        %1949 = vmatpush1.xpose.msra.mxu0 0.0
        %1950 = vmatprep.subr.mxu0 0.0
        %1951 = vmatpush1.xpose.msra.mxu0 0.0
        %1952 = vmatprep.subr.mxu0 0.0
        %1953 = vmatpush1.xpose.msra.mxu0 0.0
        %1954 = vmatprep.subr.mxu0 0.0
        %1955 = vmatpush1.xpose.msra.mxu0 0.0
        %1956 = vmatprep.subr.mxu0 0.0
        %1957 = vmatpush1.xpose.msra.mxu0 0.0
        %1958 = vmatprep.subr.mxu0 0.0
        %1959 = vmatpush1.xpose.msra.mxu0 0.0
        %1960 = vmatprep.subr.mxu0 0.0
        %1961 = vmatpush1.xpose.msra.mxu0 0.0
        %1962 = vmatprep.subr.mxu0 0.0
        %1963 = vmatpush1.xpose.msra.mxu0 0.0
        %1964 = vmatprep.subr.mxu0 0.0
        %1965 = vmatpush1.xpose.msra.mxu0 0.0
        %1966 = vmatprep.subr.mxu0 0.0
        %1967 = vmatpush1.xpose.msra.mxu0 0.0
        %1968 = vmatprep.subr.mxu0 0.0
        %1969 = vmatpush1.xpose.msra.mxu0 0.0
        %1970 = vmatprep.subr.mxu0 0.0
        %1971 = vmatpush1.xpose.msra.mxu0 0.0
        %1972 = vmatprep.mubr.f32.mxu0 0.0
        %v1973 = vand.u32 %v1601, 4294901760
        %1974 = vmatmul.mubr.f32.gmra.mrb[0].mxu0 %v1973
        %v1975 = vpop.f32.mrb[0].mxu0
        %v1976 = vadd.f32 %v1902, %v1975
        %v1977 = vpop.f32.mrb[0].mxu0
        %1978 = vdwg.mxu0
        %1979 = vmatprep.subr.mxu0 0.0
        %v1980 = vand.u32 %v1603, 4294901760
        %1981 = vmatpush1.xpose.msra.mxu0 %v1980
        %1982 = vmatprep.subr.mxu0 0.0
        %1983 = vmatpush1.xpose.msra.mxu0 0.0
        %1984 = vmatprep.subr.mxu0 0.0
        %1985 = vmatpush1.xpose.msra.mxu0 0.0
        %1986 = vmatprep.subr.mxu0 0.0
        %1987 = vmatpush1.xpose.msra.mxu0 0.0
        %1988 = vmatprep.subr.mxu0 0.0
        %1989 = vmatpush1.xpose.msra.mxu0 0.0
        %1990 = vmatprep.subr.mxu0 0.0
        %1991 = vmatpush1.xpose.msra.mxu0 0.0
        %1992 = vmatprep.subr.mxu0 0.0
        %1993 = vmatpush1.xpose.msra.mxu0 0.0
        %1994 = vmatprep.subr.mxu0 0.0
        %1995 = vmatpush1.xpose.msra.mxu0 0.0
        %1996 = vmatprep.subr.mxu0 0.0
        %1997 = vmatpush1.xpose.msra.mxu0 0.0
        %1998 = vmatprep.subr.mxu0 0.0
        %1999 = vmatpush1.xpose.msra.mxu0 0.0
        %2000 = vmatprep.subr.mxu0 0.0
        %2001 = vmatpush1.xpose.msra.mxu0 0.0
        %2002 = vmatprep.subr.mxu0 0.0
        %2003 = vmatpush1.xpose.msra.mxu0 0.0
        %2004 = vmatprep.subr.mxu0 0.0
        %2005 = vmatpush1.xpose.msra.mxu0 0.0
        %2006 = vmatprep.subr.mxu0 0.0
        %2007 = vmatpush1.xpose.msra.mxu0 0.0
        %2008 = vmatprep.subr.mxu0 0.0
        %2009 = vmatpush1.xpose.msra.mxu0 0.0
        %2010 = vmatprep.subr.mxu0 0.0
        %2011 = vmatpush1.xpose.msra.mxu0 0.0
        %2012 = vmatprep.subr.mxu0 0.0
        %2013 = vmatpush1.xpose.msra.mxu0 0.0
        %2014 = vmatprep.subr.mxu0 0.0
        %2015 = vmatpush1.xpose.msra.mxu0 0.0
        %2016 = vmatprep.subr.mxu0 0.0
        %2017 = vmatpush1.xpose.msra.mxu0 0.0
        %2018 = vmatprep.subr.mxu0 0.0
        %2019 = vmatpush1.xpose.msra.mxu0 0.0
        %2020 = vmatprep.subr.mxu0 0.0
        %2021 = vmatpush1.xpose.msra.mxu0 0.0
        %2022 = vmatprep.subr.mxu0 0.0
        %2023 = vmatpush1.xpose.msra.mxu0 0.0
        %2024 = vmatprep.subr.mxu0 0.0
        %2025 = vmatpush1.xpose.msra.mxu0 0.0
        %2026 = vmatprep.subr.mxu0 0.0
        %2027 = vmatpush1.xpose.msra.mxu0 0.0
        %2028 = vmatprep.subr.mxu0 0.0
        %2029 = vmatpush1.xpose.msra.mxu0 0.0
        %2030 = vmatprep.subr.mxu0 0.0
        %2031 = vmatpush1.xpose.msra.mxu0 0.0
        %2032 = vmatprep.subr.mxu0 0.0
        %2033 = vmatpush1.xpose.msra.mxu0 0.0
        %2034 = vmatprep.subr.mxu0 0.0
        %2035 = vmatpush1.xpose.msra.mxu0 0.0
        %2036 = vmatprep.subr.mxu0 0.0
        %2037 = vmatpush1.xpose.msra.mxu0 0.0
        %2038 = vmatprep.subr.mxu0 0.0
        %2039 = vmatpush1.xpose.msra.mxu0 0.0
        %2040 = vmatprep.subr.mxu0 0.0
        %2041 = vmatpush1.xpose.msra.mxu0 0.0
        %2042 = vmatprep.subr.mxu0 0.0
        %2043 = vmatpush1.xpose.msra.mxu0 0.0
        %2044 = vmatprep.mubr.f32.mxu0 0.0
        %v2045 = vand.u32 %v1601, 4294901760
        %2046 = vmatmul.mubr.f32.gmra.mrb[0].mxu0 %v2045
        %v2047 = vpop.f32.mrb[0].mxu0
        %v2048 = vadd.f32 %v1976, %v2047
        %v2049 = vpop.f32.mrb[0].mxu0
        %2050 = vdwg.mxu0
        %v2051 = vmul.f32 %v1594, 0.25
        %v2052 = vmul.f32 %v2048, 0.25
        %v2053 = vsel %vm460, 1, 0
        %v2054 = vsel %vm461, 1, 0
        %v2055 = vlaneseq
        %v2056 = vshrl.u32 %v2055, 7
        %v2057 = vsub.s32 0, %v2056
        %v2058 = vrot.slane %v2053, %v2057
        %v2059 = vlaneseq
        %v2060 = vshrl.u32 %v2059, 7
        %v2061 = vsub.s32 0, %v2060
        %v2062 = vrot.slane %v2054, %v2061
        %vm2063 = vcmp.eq.s32.totalorder %v2058, 1
        %vm2064 = vcmp.eq.s32.totalorder %v2062, 1
        %v2065 = vsel %vm2063, %v2051, -1e+09
        %v2066 = vsel %vm2064, %v2052, -1e+09
        %vm2067 = vcmask 64512
        %v2068 = vsel %vm2067, %v2065, -inf
        %2069 = vmax.xlane.f32.xlu0 %v2068
        %v2070 = vpop.xlane.xlu0 %2069
        %v2071 = vsel %vm2067, %v2066, -inf
        %2072 = vmax.xlane.f32.xlu0 %v2071
        %v2073 = vpop.xlane.xlu0 %2072
        %v2074 = vsub.f32 %v2065, %v2070
        %v2075 = vsub.f32 %v2066, %v2073
        %v2076 = vmul.f32 %v2074, 1.442695
        %v2077 = vpow.pop %v2076
        %v2078 = vmul.f32 %v2075, 1.442695
        %v2079 = vpow.pop %v2078
        %v2080 = vsel %vm2067, %v2077, 0.0
        %2081 = vadd.xlane.f32.xlu0 %v2080
        %v2082 = vpop.xlane.xlu0 %2081
        %v2083 = vsel %vm2067, %v2079, 0.0
        %2084 = vadd.xlane.f32.xlu0 %v2083
        %v2085 = vpop.xlane.xlu0 %2084
        %v2086 = vrcp.pop %v2082
        %v2087 = vmul.f32 %v2077, %v2086
        %v2088 = vrcp.pop %v2085
        %v2089 = vmul.f32 %v2079, %v2088
        %2090 = vrot.lane.b32.xlu0 %v1127, 64
        %v2091 = vpop.permute.xlu0 %2090
        %v2094 = vsel %vm2067, %v2087, 0
        %2096 = vmatprep.subr.mxu0 0.0
        %v2097 = vand.u32 %v2091, 4294901760
        %2098 = vmatpush1.msra.mxu0 %v2097
        %2099 = vmatprep.subr.mxu0 0.0
        %2100 = vmatpush1.msra.mxu0 0.0
        %2101 = vmatprep.subr.mxu0 0.0
        %2102 = vmatpush1.msra.mxu0 0.0
        %2103 = vmatprep.subr.mxu0 0.0
        %2104 = vmatpush1.msra.mxu0 0.0
        %2105 = vmatprep.subr.mxu0 0.0
        %2106 = vmatpush1.msra.mxu0 0.0
        %2107 = vmatprep.subr.mxu0 0.0
        %2108 = vmatpush1.msra.mxu0 0.0
        %2109 = vmatprep.subr.mxu0 0.0
        %2110 = vmatpush1.msra.mxu0 0.0
        %2111 = vmatprep.subr.mxu0 0.0
        %2112 = vmatpush1.msra.mxu0 0.0
        %2113 = vmatprep.subr.mxu0 0.0
        %2114 = vmatpush1.msra.mxu0 0.0
        %2115 = vmatprep.subr.mxu0 0.0
        %2116 = vmatpush1.msra.mxu0 0.0
        %2117 = vmatprep.subr.mxu0 0.0
        %2118 = vmatpush1.msra.mxu0 0.0
        %2119 = vmatprep.subr.mxu0 0.0
        %2120 = vmatpush1.msra.mxu0 0.0
        %2121 = vmatprep.subr.mxu0 0.0
        %2122 = vmatpush1.msra.mxu0 0.0
        %2123 = vmatprep.subr.mxu0 0.0
        %2124 = vmatpush1.msra.mxu0 0.0
        %2125 = vmatprep.subr.mxu0 0.0
        %2126 = vmatpush1.msra.mxu0 0.0
        %2127 = vmatprep.subr.mxu0 0.0
        %2128 = vmatpush1.msra.mxu0 0.0
        %2129 = vmatprep.subr.mxu0 0.0
        %2130 = vmatpush1.msra.mxu0 0.0
        %2131 = vmatprep.subr.mxu0 0.0
        %2132 = vmatpush1.msra.mxu0 0.0
        %2133 = vmatprep.subr.mxu0 0.0
        %2134 = vmatpush1.msra.mxu0 0.0
        %2135 = vmatprep.subr.mxu0 0.0
        %2136 = vmatpush1.msra.mxu0 0.0
        %2137 = vmatprep.subr.mxu0 0.0
        %2138 = vmatpush1.msra.mxu0 0.0
        %2139 = vmatprep.subr.mxu0 0.0
        %2140 = vmatpush1.msra.mxu0 0.0
        %2141 = vmatprep.subr.mxu0 0.0
        %2142 = vmatpush1.msra.mxu0 0.0
        %2143 = vmatprep.subr.mxu0 0.0
        %2144 = vmatpush1.msra.mxu0 0.0
        %2145 = vmatprep.subr.mxu0 0.0
        %2146 = vmatpush1.msra.mxu0 0.0
        %2147 = vmatprep.subr.mxu0 0.0
        %2148 = vmatpush1.msra.mxu0 0.0
        %2149 = vmatprep.subr.mxu0 0.0
        %2150 = vmatpush1.msra.mxu0 0.0
        %2151 = vmatprep.subr.mxu0 0.0
        %2152 = vmatpush1.msra.mxu0 0.0
        %2153 = vmatprep.subr.mxu0 0.0
        %2154 = vmatpush1.msra.mxu0 0.0
        %2155 = vmatprep.subr.mxu0 0.0
        %2156 = vmatpush1.msra.mxu0 0.0
        %2157 = vmatprep.subr.mxu0 0.0
        %2158 = vmatpush1.msra.mxu0 0.0
        %2159 = vmatprep.subr.mxu0 0.0
        %2160 = vmatpush1.msra.mxu0 0.0
        %2161 = vmatprep.mubr.f32.mxu0 0.0
        %v2162 = vand.u32 %v2094, 4294901760
        %v2163 = vsub.f32 %v2094, %v2162
        %v2164 = vand.u32 %v2163, 4294901760
        %v2165 = vsub.f32 %v2163, %v2164
        %v2166 = vand.u32 %v2165, 4294901760
        %2167 = vmatmul.mubr.f32.gmra.mrb[0].mxu0 %v2166
        %v2168 = vpop.f32.mrb[0].mxu0
        %v2169 = vadd.f32 0.0, %v2168
        %v2170 = vpop.f32.mrb[0].mxu0
        %2171 = vdwg.mxu0
        %2172 = vmatprep.subr.mxu0 0.0
        %v2173 = vand.u32 %v2091, 4294901760
        %v2174 = vsub.f32 %v2091, %v2173
        %v2175 = vand.u32 %v2174, 4294901760
        %v2176 = vsub.f32 %v2174, %v2175
        %v2177 = vand.u32 %v2176, 4294901760
        %2178 = vmatpush1.msra.mxu0 %v2177
        %2179 = vmatprep.subr.mxu0 0.0
        %2180 = vmatpush1.msra.mxu0 0.0
        %2181 = vmatprep.subr.mxu0 0.0
        %2182 = vmatpush1.msra.mxu0 0.0
        %2183 = vmatprep.subr.mxu0 0.0
        %2184 = vmatpush1.msra.mxu0 0.0
        %2185 = vmatprep.subr.mxu0 0.0
        %2186 = vmatpush1.msra.mxu0 0.0
        %2187 = vmatprep.subr.mxu0 0.0
        %2188 = vmatpush1.msra.mxu0 0.0
        %2189 = vmatprep.subr.mxu0 0.0
        %2190 = vmatpush1.msra.mxu0 0.0
        %2191 = vmatprep.subr.mxu0 0.0
        %2192 = vmatpush1.msra.mxu0 0.0
        %2193 = vmatprep.subr.mxu0 0.0
        %2194 = vmatpush1.msra.mxu0 0.0
        %2195 = vmatprep.subr.mxu0 0.0
        %2196 = vmatpush1.msra.mxu0 0.0
        %2197 = vmatprep.subr.mxu0 0.0
        %2198 = vmatpush1.msra.mxu0 0.0
        %2199 = vmatprep.subr.mxu0 0.0
        %2200 = vmatpush1.msra.mxu0 0.0
        %2201 = vmatprep.subr.mxu0 0.0
        %2202 = vmatpush1.msra.mxu0 0.0
        %2203 = vmatprep.subr.mxu0 0.0
        %2204 = vmatpush1.msra.mxu0 0.0
        %2205 = vmatprep.subr.mxu0 0.0
        %2206 = vmatpush1.msra.mxu0 0.0
        %2207 = vmatprep.subr.mxu0 0.0
        %2208 = vmatpush1.msra.mxu0 0.0
        %2209 = vmatprep.subr.mxu0 0.0
        %2210 = vmatpush1.msra.mxu0 0.0
        %2211 = vmatprep.subr.mxu0 0.0
        %2212 = vmatpush1.msra.mxu0 0.0
        %2213 = vmatprep.subr.mxu0 0.0
        %2214 = vmatpush1.msra.mxu0 0.0
        %2215 = vmatprep.subr.mxu0 0.0
        %2216 = vmatpush1.msra.mxu0 0.0
        %2217 = vmatprep.subr.mxu0 0.0
        %2218 = vmatpush1.msra.mxu0 0.0
        %2219 = vmatprep.subr.mxu0 0.0
        %2220 = vmatpush1.msra.mxu0 0.0
        %2221 = vmatprep.subr.mxu0 0.0
        %2222 = vmatpush1.msra.mxu0 0.0
        %2223 = vmatprep.subr.mxu0 0.0
        %2224 = vmatpush1.msra.mxu0 0.0
        %2225 = vmatprep.subr.mxu0 0.0
        %2226 = vmatpush1.msra.mxu0 0.0
        %2227 = vmatprep.subr.mxu0 0.0
        %2228 = vmatpush1.msra.mxu0 0.0
        %2229 = vmatprep.subr.mxu0 0.0
        %2230 = vmatpush1.msra.mxu0 0.0
        %2231 = vmatprep.subr.mxu0 0.0
        %2232 = vmatpush1.msra.mxu0 0.0
        %2233 = vmatprep.subr.mxu0 0.0
        %2234 = vmatpush1.msra.mxu0 0.0
        %2235 = vmatprep.subr.mxu0 0.0
        %2236 = vmatpush1.msra.mxu0 0.0
        %2237 = vmatprep.subr.mxu0 0.0
        %2238 = vmatpush1.msra.mxu0 0.0
        %2239 = vmatprep.subr.mxu0 0.0
        %2240 = vmatpush1.msra.mxu0 0.0
        %2241 = vmatprep.mubr.f32.mxu0 0.0
        %v2242 = vand.u32 %v2094, 4294901760
        %2243 = vmatmul.mubr.f32.gmra.mrb[0].mxu0 %v2242
        %v2244 = vpop.f32.mrb[0].mxu0
        %v2245 = vadd.f32 %v2169, %v2244
        %v2246 = vpop.f32.mrb[0].mxu0
        %2247 = vdwg.mxu0
        %2248 = vmatprep.subr.mxu0 0.0
        %v2249 = vand.u32 %v2091, 4294901760
        %v2250 = vsub.f32 %v2091, %v2249
        %2251 = vmatpush1.msra.mxu0 %v2250
        %2252 = vmatprep.subr.mxu0 0.0
        %2253 = vmatpush1.msra.mxu0 0.0
        %2254 = vmatprep.subr.mxu0 0.0
        %2255 = vmatpush1.msra.mxu0 0.0
        %2256 = vmatprep.subr.mxu0 0.0
        %2257 = vmatpush1.msra.mxu0 0.0
        %2258 = vmatprep.subr.mxu0 0.0
        %2259 = vmatpush1.msra.mxu0 0.0
        %2260 = vmatprep.subr.mxu0 0.0
        %2261 = vmatpush1.msra.mxu0 0.0
        %2262 = vmatprep.subr.mxu0 0.0
        %2263 = vmatpush1.msra.mxu0 0.0
        %2264 = vmatprep.subr.mxu0 0.0
        %2265 = vmatpush1.msra.mxu0 0.0
        %2266 = vmatprep.subr.mxu0 0.0
        %2267 = vmatpush1.msra.mxu0 0.0
        %2268 = vmatprep.subr.mxu0 0.0
        %2269 = vmatpush1.msra.mxu0 0.0
        %2270 = vmatprep.subr.mxu0 0.0
        %2271 = vmatpush1.msra.mxu0 0.0
        %2272 = vmatprep.subr.mxu0 0.0
        %2273 = vmatpush1.msra.mxu0 0.0
        %2274 = vmatprep.subr.mxu0 0.0
        %2275 = vmatpush1.msra.mxu0 0.0
        %2276 = vmatprep.subr.mxu0 0.0
        %2277 = vmatpush1.msra.mxu0 0.0
        %2278 = vmatprep.subr.mxu0 0.0
        %2279 = vmatpush1.msra.mxu0 0.0
        %2280 = vmatprep.subr.mxu0 0.0
        %2281 = vmatpush1.msra.mxu0 0.0
        %2282 = vmatprep.subr.mxu0 0.0
        %2283 = vmatpush1.msra.mxu0 0.0
        %2284 = vmatprep.subr.mxu0 0.0
        %2285 = vmatpush1.msra.mxu0 0.0
        %2286 = vmatprep.subr.mxu0 0.0
        %2287 = vmatpush1.msra.mxu0 0.0
        %2288 = vmatprep.subr.mxu0 0.0
        %2289 = vmatpush1.msra.mxu0 0.0
        %2290 = vmatprep.subr.mxu0 0.0
        %2291 = vmatpush1.msra.mxu0 0.0
        %2292 = vmatprep.subr.mxu0 0.0
        %2293 = vmatpush1.msra.mxu0 0.0
        %2294 = vmatprep.subr.mxu0 0.0
        %2295 = vmatpush1.msra.mxu0 0.0
        %2296 = vmatprep.subr.mxu0 0.0
        %2297 = vmatpush1.msra.mxu0 0.0
        %2298 = vmatprep.subr.mxu0 0.0
        %2299 = vmatpush1.msra.mxu0 0.0
        %2300 = vmatprep.subr.mxu0 0.0
        %2301 = vmatpush1.msra.mxu0 0.0
        %2302 = vmatprep.subr.mxu0 0.0
        %2303 = vmatpush1.msra.mxu0 0.0
        %2304 = vmatprep.subr.mxu0 0.0
        %2305 = vmatpush1.msra.mxu0 0.0
        %2306 = vmatprep.subr.mxu0 0.0
        %2307 = vmatpush1.msra.mxu0 0.0
        %2308 = vmatprep.subr.mxu0 0.0
        %2309 = vmatpush1.msra.mxu0 0.0
        %2310 = vmatprep.subr.mxu0 0.0
        %2311 = vmatpush1.msra.mxu0 0.0
        %2312 = vmatprep.subr.mxu0 0.0
        %2313 = vmatpush1.msra.mxu0 0.0
        %2314 = vmatprep.mubr.f32.mxu0 0.0
        %v2315 = vand.u32 %v2094, 4294901760
        %v2316 = vsub.f32 %v2094, %v2315
        %2317 = vmatmul.mubr.f32.gmra.mrb[0].mxu0 %v2316
        %v2318 = vpop.f32.mrb[0].mxu0
        %v2319 = vadd.f32 %v2245, %v2318
        %v2320 = vpop.f32.mrb[0].mxu0
        %2321 = vdwg.mxu0
        %2322 = vmatprep.subr.mxu0 0.0
        %v2323 = vand.u32 %v2091, 4294901760
        %2324 = vmatpush1.msra.mxu0 %v2323
        %2325 = vmatprep.subr.mxu0 0.0
        %2326 = vmatpush1.msra.mxu0 0.0
        %2327 = vmatprep.subr.mxu0 0.0
        %2328 = vmatpush1.msra.mxu0 0.0
        %2329 = vmatprep.subr.mxu0 0.0
        %2330 = vmatpush1.msra.mxu0 0.0
        %2331 = vmatprep.subr.mxu0 0.0
        %2332 = vmatpush1.msra.mxu0 0.0
        %2333 = vmatprep.subr.mxu0 0.0
        %2334 = vmatpush1.msra.mxu0 0.0
        %2335 = vmatprep.subr.mxu0 0.0
        %2336 = vmatpush1.msra.mxu0 0.0
        %2337 = vmatprep.subr.mxu0 0.0
        %2338 = vmatpush1.msra.mxu0 0.0
        %2339 = vmatprep.subr.mxu0 0.0
        %2340 = vmatpush1.msra.mxu0 0.0
        %2341 = vmatprep.subr.mxu0 0.0
        %2342 = vmatpush1.msra.mxu0 0.0
        %2343 = vmatprep.subr.mxu0 0.0
        %2344 = vmatpush1.msra.mxu0 0.0
        %2345 = vmatprep.subr.mxu0 0.0
        %2346 = vmatpush1.msra.mxu0 0.0
        %2347 = vmatprep.subr.mxu0 0.0
        %2348 = vmatpush1.msra.mxu0 0.0
        %2349 = vmatprep.subr.mxu0 0.0
        %2350 = vmatpush1.msra.mxu0 0.0
        %2351 = vmatprep.subr.mxu0 0.0
        %2352 = vmatpush1.msra.mxu0 0.0
        %2353 = vmatprep.subr.mxu0 0.0
        %2354 = vmatpush1.msra.mxu0 0.0
        %2355 = vmatprep.subr.mxu0 0.0
        %2356 = vmatpush1.msra.mxu0 0.0
        %2357 = vmatprep.subr.mxu0 0.0
        %2358 = vmatpush1.msra.mxu0 0.0
        %2359 = vmatprep.subr.mxu0 0.0
        %2360 = vmatpush1.msra.mxu0 0.0
        %2361 = vmatprep.subr.mxu0 0.0
        %2362 = vmatpush1.msra.mxu0 0.0
        %2363 = vmatprep.subr.mxu0 0.0
        %2364 = vmatpush1.msra.mxu0 0.0
        %2365 = vmatprep.subr.mxu0 0.0
        %2366 = vmatpush1.msra.mxu0 0.0
        %2367 = vmatprep.subr.mxu0 0.0
        %2368 = vmatpush1.msra.mxu0 0.0
        %2369 = vmatprep.subr.mxu0 0.0
        %2370 = vmatpush1.msra.mxu0 0.0
        %2371 = vmatprep.subr.mxu0 0.0
        %2372 = vmatpush1.msra.mxu0 0.0
        %2373 = vmatprep.subr.mxu0 0.0
        %2374 = vmatpush1.msra.mxu0 0.0
        %2375 = vmatprep.subr.mxu0 0.0
        %2376 = vmatpush1.msra.mxu0 0.0
        %2377 = vmatprep.subr.mxu0 0.0
        %2378 = vmatpush1.msra.mxu0 0.0
        %2379 = vmatprep.subr.mxu0 0.0
        %2380 = vmatpush1.msra.mxu0 0.0
        %2381 = vmatprep.subr.mxu0 0.0
        %2382 = vmatpush1.msra.mxu0 0.0
        %2383 = vmatprep.subr.mxu0 0.0
        %2384 = vmatpush1.msra.mxu0 0.0
        %2385 = vmatprep.subr.mxu0 0.0
        %2386 = vmatpush1.msra.mxu0 0.0
        %2387 = vmatprep.mubr.f32.mxu0 0.0
        %v2388 = vand.u32 %v2094, 4294901760
        %v2389 = vsub.f32 %v2094, %v2388
        %v2390 = vand.u32 %v2389, 4294901760
        %2391 = vmatmul.mubr.f32.gmra.mrb[0].mxu0 %v2390
        %v2392 = vpop.f32.mrb[0].mxu0
        %v2393 = vadd.f32 %v2319, %v2392
        %v2394 = vpop.f32.mrb[0].mxu0
        %2395 = vdwg.mxu0
        %2396 = vmatprep.subr.mxu0 0.0
        %v2397 = vand.u32 %v2091, 4294901760
        %v2398 = vsub.f32 %v2091, %v2397
        %v2399 = vand.u32 %v2398, 4294901760
        %2400 = vmatpush1.msra.mxu0 %v2399
        %2401 = vmatprep.subr.mxu0 0.0
        %2402 = vmatpush1.msra.mxu0 0.0
        %2403 = vmatprep.subr.mxu0 0.0
        %2404 = vmatpush1.msra.mxu0 0.0
        %2405 = vmatprep.subr.mxu0 0.0
        %2406 = vmatpush1.msra.mxu0 0.0
        %2407 = vmatprep.subr.mxu0 0.0
        %2408 = vmatpush1.msra.mxu0 0.0
        %2409 = vmatprep.subr.mxu0 0.0
        %2410 = vmatpush1.msra.mxu0 0.0
        %2411 = vmatprep.subr.mxu0 0.0
        %2412 = vmatpush1.msra.mxu0 0.0
        %2413 = vmatprep.subr.mxu0 0.0
        %2414 = vmatpush1.msra.mxu0 0.0
        %2415 = vmatprep.subr.mxu0 0.0
        %2416 = vmatpush1.msra.mxu0 0.0
        %2417 = vmatprep.subr.mxu0 0.0
        %2418 = vmatpush1.msra.mxu0 0.0
        %2419 = vmatprep.subr.mxu0 0.0
        %2420 = vmatpush1.msra.mxu0 0.0
        %2421 = vmatprep.subr.mxu0 0.0
        %2422 = vmatpush1.msra.mxu0 0.0
        %2423 = vmatprep.subr.mxu0 0.0
        %2424 = vmatpush1.msra.mxu0 0.0
        %2425 = vmatprep.subr.mxu0 0.0
        %2426 = vmatpush1.msra.mxu0 0.0
        %2427 = vmatprep.subr.mxu0 0.0
        %2428 = vmatpush1.msra.mxu0 0.0
        %2429 = vmatprep.subr.mxu0 0.0
        %2430 = vmatpush1.msra.mxu0 0.0
        %2431 = vmatprep.subr.mxu0 0.0
        %2432 = vmatpush1.msra.mxu0 0.0
        %2433 = vmatprep.subr.mxu0 0.0
        %2434 = vmatpush1.msra.mxu0 0.0
        %2435 = vmatprep.subr.mxu0 0.0
        %2436 = vmatpush1.msra.mxu0 0.0
        %2437 = vmatprep.subr.mxu0 0.0
        %2438 = vmatpush1.msra.mxu0 0.0
        %2439 = vmatprep.subr.mxu0 0.0
        %2440 = vmatpush1.msra.mxu0 0.0
        %2441 = vmatprep.subr.mxu0 0.0
        %2442 = vmatpush1.msra.mxu0 0.0
        %2443 = vmatprep.subr.mxu0 0.0
        %2444 = vmatpush1.msra.mxu0 0.0
        %2445 = vmatprep.subr.mxu0 0.0
        %2446 = vmatpush1.msra.mxu0 0.0
        %2447 = vmatprep.subr.mxu0 0.0
        %2448 = vmatpush1.msra.mxu0 0.0
        %2449 = vmatprep.subr.mxu0 0.0
        %2450 = vmatpush1.msra.mxu0 0.0
        %2451 = vmatprep.subr.mxu0 0.0
        %2452 = vmatpush1.msra.mxu0 0.0
        %2453 = vmatprep.subr.mxu0 0.0
        %2454 = vmatpush1.msra.mxu0 0.0
        %2455 = vmatprep.subr.mxu0 0.0
        %2456 = vmatpush1.msra.mxu0 0.0
        %2457 = vmatprep.subr.mxu0 0.0
        %2458 = vmatpush1.msra.mxu0 0.0
        %2459 = vmatprep.subr.mxu0 0.0
        %2460 = vmatpush1.msra.mxu0 0.0
        %2461 = vmatprep.subr.mxu0 0.0
        %2462 = vmatpush1.msra.mxu0 0.0
        %2463 = vmatprep.mubr.f32.mxu0 0.0
        %v2464 = vand.u32 %v2094, 4294901760
        %2465 = vmatmul.mubr.f32.gmra.mrb[0].mxu0 %v2464
        %v2466 = vpop.f32.mrb[0].mxu0
        %v2467 = vadd.f32 %v2393, %v2466
        %v2468 = vpop.f32.mrb[0].mxu0
        %2469 = vdwg.mxu0
        %2470 = vmatprep.subr.mxu0 0.0
        %v2471 = vand.u32 %v2091, 4294901760
        %2472 = vmatpush1.msra.mxu0 %v2471
        %2473 = vmatprep.subr.mxu0 0.0
        %2474 = vmatpush1.msra.mxu0 0.0
        %2475 = vmatprep.subr.mxu0 0.0
        %2476 = vmatpush1.msra.mxu0 0.0
        %2477 = vmatprep.subr.mxu0 0.0
        %2478 = vmatpush1.msra.mxu0 0.0
        %2479 = vmatprep.subr.mxu0 0.0
        %2480 = vmatpush1.msra.mxu0 0.0
        %2481 = vmatprep.subr.mxu0 0.0
        %2482 = vmatpush1.msra.mxu0 0.0
        %2483 = vmatprep.subr.mxu0 0.0
        %2484 = vmatpush1.msra.mxu0 0.0
        %2485 = vmatprep.subr.mxu0 0.0
        %2486 = vmatpush1.msra.mxu0 0.0
        %2487 = vmatprep.subr.mxu0 0.0
        %2488 = vmatpush1.msra.mxu0 0.0
        %2489 = vmatprep.subr.mxu0 0.0
        %2490 = vmatpush1.msra.mxu0 0.0
        %2491 = vmatprep.subr.mxu0 0.0
        %2492 = vmatpush1.msra.mxu0 0.0
        %2493 = vmatprep.subr.mxu0 0.0
        %2494 = vmatpush1.msra.mxu0 0.0
        %2495 = vmatprep.subr.mxu0 0.0
        %2496 = vmatpush1.msra.mxu0 0.0
        %2497 = vmatprep.subr.mxu0 0.0
        %2498 = vmatpush1.msra.mxu0 0.0
        %2499 = vmatprep.subr.mxu0 0.0
        %2500 = vmatpush1.msra.mxu0 0.0
        %2501 = vmatprep.subr.mxu0 0.0
        %2502 = vmatpush1.msra.mxu0 0.0
        %2503 = vmatprep.subr.mxu0 0.0
        %2504 = vmatpush1.msra.mxu0 0.0
        %2505 = vmatprep.subr.mxu0 0.0
        %2506 = vmatpush1.msra.mxu0 0.0
        %2507 = vmatprep.subr.mxu0 0.0
        %2508 = vmatpush1.msra.mxu0 0.0
        %2509 = vmatprep.subr.mxu0 0.0
        %2510 = vmatpush1.msra.mxu0 0.0
        %2511 = vmatprep.subr.mxu0 0.0
        %2512 = vmatpush1.msra.mxu0 0.0
        %2513 = vmatprep.subr.mxu0 0.0
        %2514 = vmatpush1.msra.mxu0 0.0
        %2515 = vmatprep.subr.mxu0 0.0
        %2516 = vmatpush1.msra.mxu0 0.0
        %2517 = vmatprep.subr.mxu0 0.0
        %2518 = vmatpush1.msra.mxu0 0.0
        %2519 = vmatprep.subr.mxu0 0.0
        %2520 = vmatpush1.msra.mxu0 0.0
        %2521 = vmatprep.subr.mxu0 0.0
        %2522 = vmatpush1.msra.mxu0 0.0
        %2523 = vmatprep.subr.mxu0 0.0
        %2524 = vmatpush1.msra.mxu0 0.0
        %2525 = vmatprep.subr.mxu0 0.0
        %2526 = vmatpush1.msra.mxu0 0.0
        %2527 = vmatprep.subr.mxu0 0.0
        %2528 = vmatpush1.msra.mxu0 0.0
        %2529 = vmatprep.subr.mxu0 0.0
        %2530 = vmatpush1.msra.mxu0 0.0
        %2531 = vmatprep.subr.mxu0 0.0
        %2532 = vmatpush1.msra.mxu0 0.0
        %2533 = vmatprep.subr.mxu0 0.0
        %2534 = vmatpush1.msra.mxu0 0.0
        %2535 = vmatprep.mubr.f32.mxu0 0.0
        %v2536 = vand.u32 %v2094, 4294901760
        %2537 = vmatmul.mubr.f32.gmra.mrb[0].mxu0 %v2536
        %v2538 = vpop.f32.mrb[0].mxu0
        %v2539 = vadd.f32 %v2467, %v2538
        %v2540 = vpop.f32.mrb[0].mxu0
        %2541 = vdwg.mxu0
        %2542 = vrot.lane.b32.xlu0 %v1139, 64
        %v2543 = vpop.permute.xlu0 %2542
        %v2546 = vsel %vm2067, %v2089, 0
        %2548 = vmatprep.subr.mxu0 0.0
        %v2549 = vand.u32 %v2543, 4294901760
        %2550 = vmatpush1.msra.mxu0 %v2549
        %2551 = vmatprep.subr.mxu0 0.0
        %2552 = vmatpush1.msra.mxu0 0.0
        %2553 = vmatprep.subr.mxu0 0.0
        %2554 = vmatpush1.msra.mxu0 0.0
        %2555 = vmatprep.subr.mxu0 0.0
        %2556 = vmatpush1.msra.mxu0 0.0
        %2557 = vmatprep.subr.mxu0 0.0
        %2558 = vmatpush1.msra.mxu0 0.0
        %2559 = vmatprep.subr.mxu0 0.0
        %2560 = vmatpush1.msra.mxu0 0.0
        %2561 = vmatprep.subr.mxu0 0.0
        %2562 = vmatpush1.msra.mxu0 0.0
        %2563 = vmatprep.subr.mxu0 0.0
        %2564 = vmatpush1.msra.mxu0 0.0
        %2565 = vmatprep.subr.mxu0 0.0
        %2566 = vmatpush1.msra.mxu0 0.0
        %2567 = vmatprep.subr.mxu0 0.0
        %2568 = vmatpush1.msra.mxu0 0.0
        %2569 = vmatprep.subr.mxu0 0.0
        %2570 = vmatpush1.msra.mxu0 0.0
        %2571 = vmatprep.subr.mxu0 0.0
        %2572 = vmatpush1.msra.mxu0 0.0
        %2573 = vmatprep.subr.mxu0 0.0
        %2574 = vmatpush1.msra.mxu0 0.0
        %2575 = vmatprep.subr.mxu0 0.0
        %2576 = vmatpush1.msra.mxu0 0.0
        %2577 = vmatprep.subr.mxu0 0.0
        %2578 = vmatpush1.msra.mxu0 0.0
        %2579 = vmatprep.subr.mxu0 0.0
        %2580 = vmatpush1.msra.mxu0 0.0
        %2581 = vmatprep.subr.mxu0 0.0
        %2582 = vmatpush1.msra.mxu0 0.0
        %2583 = vmatprep.subr.mxu0 0.0
        %2584 = vmatpush1.msra.mxu0 0.0
        %2585 = vmatprep.subr.mxu0 0.0
        %2586 = vmatpush1.msra.mxu0 0.0
        %2587 = vmatprep.subr.mxu0 0.0
        %2588 = vmatpush1.msra.mxu0 0.0
        %2589 = vmatprep.subr.mxu0 0.0
        %2590 = vmatpush1.msra.mxu0 0.0
        %2591 = vmatprep.subr.mxu0 0.0
        %2592 = vmatpush1.msra.mxu0 0.0
        %2593 = vmatprep.subr.mxu0 0.0
        %2594 = vmatpush1.msra.mxu0 0.0
        %2595 = vmatprep.subr.mxu0 0.0
        %2596 = vmatpush1.msra.mxu0 0.0
        %2597 = vmatprep.subr.mxu0 0.0
        %2598 = vmatpush1.msra.mxu0 0.0
        %2599 = vmatprep.subr.mxu0 0.0
        %2600 = vmatpush1.msra.mxu0 0.0
        %2601 = vmatprep.subr.mxu0 0.0
        %2602 = vmatpush1.msra.mxu0 0.0
        %2603 = vmatprep.subr.mxu0 0.0
        %2604 = vmatpush1.msra.mxu0 0.0
        %2605 = vmatprep.subr.mxu0 0.0
        %2606 = vmatpush1.msra.mxu0 0.0
        %2607 = vmatprep.subr.mxu0 0.0
        %2608 = vmatpush1.msra.mxu0 0.0
        %2609 = vmatprep.subr.mxu0 0.0
        %2610 = vmatpush1.msra.mxu0 0.0
        %2611 = vmatprep.subr.mxu0 0.0
        %2612 = vmatpush1.msra.mxu0 0.0
        %2613 = vmatprep.mubr.f32.mxu0 0.0
        %v2614 = vand.u32 %v2546, 4294901760
        %v2615 = vsub.f32 %v2546, %v2614
        %v2616 = vand.u32 %v2615, 4294901760
        %v2617 = vsub.f32 %v2615, %v2616
        %v2618 = vand.u32 %v2617, 4294901760
        %2619 = vmatmul.mubr.f32.gmra.mrb[0].mxu0 %v2618
        %v2620 = vpop.f32.mrb[0].mxu0
        %v2621 = vadd.f32 0.0, %v2620
        %v2622 = vpop.f32.mrb[0].mxu0
        %2623 = vdwg.mxu0
        %2624 = vmatprep.subr.mxu0 0.0
        %v2625 = vand.u32 %v2543, 4294901760
        %v2626 = vsub.f32 %v2543, %v2625
        %v2627 = vand.u32 %v2626, 4294901760
        %v2628 = vsub.f32 %v2626, %v2627
        %v2629 = vand.u32 %v2628, 4294901760
        %2630 = vmatpush1.msra.mxu0 %v2629
        %2631 = vmatprep.subr.mxu0 0.0
        %2632 = vmatpush1.msra.mxu0 0.0
        %2633 = vmatprep.subr.mxu0 0.0
        %2634 = vmatpush1.msra.mxu0 0.0
        %2635 = vmatprep.subr.mxu0 0.0
        %2636 = vmatpush1.msra.mxu0 0.0
        %2637 = vmatprep.subr.mxu0 0.0
        %2638 = vmatpush1.msra.mxu0 0.0
        %2639 = vmatprep.subr.mxu0 0.0
        %2640 = vmatpush1.msra.mxu0 0.0
        %2641 = vmatprep.subr.mxu0 0.0
        %2642 = vmatpush1.msra.mxu0 0.0
        %2643 = vmatprep.subr.mxu0 0.0
        %2644 = vmatpush1.msra.mxu0 0.0
        %2645 = vmatprep.subr.mxu0 0.0
        %2646 = vmatpush1.msra.mxu0 0.0
        %2647 = vmatprep.subr.mxu0 0.0
        %2648 = vmatpush1.msra.mxu0 0.0
        %2649 = vmatprep.subr.mxu0 0.0
        %2650 = vmatpush1.msra.mxu0 0.0
        %2651 = vmatprep.subr.mxu0 0.0
        %2652 = vmatpush1.msra.mxu0 0.0
        %2653 = vmatprep.subr.mxu0 0.0
        %2654 = vmatpush1.msra.mxu0 0.0
        %2655 = vmatprep.subr.mxu0 0.0
        %2656 = vmatpush1.msra.mxu0 0.0
        %2657 = vmatprep.subr.mxu0 0.0
        %2658 = vmatpush1.msra.mxu0 0.0
        %2659 = vmatprep.subr.mxu0 0.0
        %2660 = vmatpush1.msra.mxu0 0.0
        %2661 = vmatprep.subr.mxu0 0.0
        %2662 = vmatpush1.msra.mxu0 0.0
        %2663 = vmatprep.subr.mxu0 0.0
        %2664 = vmatpush1.msra.mxu0 0.0
        %2665 = vmatprep.subr.mxu0 0.0
        %2666 = vmatpush1.msra.mxu0 0.0
        %2667 = vmatprep.subr.mxu0 0.0
        %2668 = vmatpush1.msra.mxu0 0.0
        %2669 = vmatprep.subr.mxu0 0.0
        %2670 = vmatpush1.msra.mxu0 0.0
        %2671 = vmatprep.subr.mxu0 0.0
        %2672 = vmatpush1.msra.mxu0 0.0
        %2673 = vmatprep.subr.mxu0 0.0
        %2674 = vmatpush1.msra.mxu0 0.0
        %2675 = vmatprep.subr.mxu0 0.0
        %2676 = vmatpush1.msra.mxu0 0.0
        %2677 = vmatprep.subr.mxu0 0.0
        %2678 = vmatpush1.msra.mxu0 0.0
        %2679 = vmatprep.subr.mxu0 0.0
        %2680 = vmatpush1.msra.mxu0 0.0
        %2681 = vmatprep.subr.mxu0 0.0
        %2682 = vmatpush1.msra.mxu0 0.0
        %2683 = vmatprep.subr.mxu0 0.0
        %2684 = vmatpush1.msra.mxu0 0.0
        %2685 = vmatprep.subr.mxu0 0.0
        %2686 = vmatpush1.msra.mxu0 0.0
        %2687 = vmatprep.subr.mxu0 0.0
        %2688 = vmatpush1.msra.mxu0 0.0
        %2689 = vmatprep.subr.mxu0 0.0
        %2690 = vmatpush1.msra.mxu0 0.0
        %2691 = vmatprep.subr.mxu0 0.0
        %2692 = vmatpush1.msra.mxu0 0.0
        %2693 = vmatprep.mubr.f32.mxu0 0.0
        %v2694 = vand.u32 %v2546, 4294901760
        %2695 = vmatmul.mubr.f32.gmra.mrb[0].mxu0 %v2694
        %v2696 = vpop.f32.mrb[0].mxu0
        %v2697 = vadd.f32 %v2621, %v2696
        %v2698 = vpop.f32.mrb[0].mxu0
        %2699 = vdwg.mxu0
        %2700 = vmatprep.subr.mxu0 0.0
        %v2701 = vand.u32 %v2543, 4294901760
        %v2702 = vsub.f32 %v2543, %v2701
        %2703 = vmatpush1.msra.mxu0 %v2702
        %2704 = vmatprep.subr.mxu0 0.0
        %2705 = vmatpush1.msra.mxu0 0.0
        %2706 = vmatprep.subr.mxu0 0.0
        %2707 = vmatpush1.msra.mxu0 0.0
        %2708 = vmatprep.subr.mxu0 0.0
        %2709 = vmatpush1.msra.mxu0 0.0
        %2710 = vmatprep.subr.mxu0 0.0
        %2711 = vmatpush1.msra.mxu0 0.0
        %2712 = vmatprep.subr.mxu0 0.0
        %2713 = vmatpush1.msra.mxu0 0.0
        %2714 = vmatprep.subr.mxu0 0.0
        %2715 = vmatpush1.msra.mxu0 0.0
        %2716 = vmatprep.subr.mxu0 0.0
        %2717 = vmatpush1.msra.mxu0 0.0
        %2718 = vmatprep.subr.mxu0 0.0
        %2719 = vmatpush1.msra.mxu0 0.0
        %2720 = vmatprep.subr.mxu0 0.0
        %2721 = vmatpush1.msra.mxu0 0.0
        %2722 = vmatprep.subr.mxu0 0.0
        %2723 = vmatpush1.msra.mxu0 0.0
        %2724 = vmatprep.subr.mxu0 0.0
        %2725 = vmatpush1.msra.mxu0 0.0
        %2726 = vmatprep.subr.mxu0 0.0
        %2727 = vmatpush1.msra.mxu0 0.0
        %2728 = vmatprep.subr.mxu0 0.0
        %2729 = vmatpush1.msra.mxu0 0.0
        %2730 = vmatprep.subr.mxu0 0.0
        %2731 = vmatpush1.msra.mxu0 0.0
        %2732 = vmatprep.subr.mxu0 0.0
        %2733 = vmatpush1.msra.mxu0 0.0
        %2734 = vmatprep.subr.mxu0 0.0
        %2735 = vmatpush1.msra.mxu0 0.0
        %2736 = vmatprep.subr.mxu0 0.0
        %2737 = vmatpush1.msra.mxu0 0.0
        %2738 = vmatprep.subr.mxu0 0.0
        %2739 = vmatpush1.msra.mxu0 0.0
        %2740 = vmatprep.subr.mxu0 0.0
        %2741 = vmatpush1.msra.mxu0 0.0
        %2742 = vmatprep.subr.mxu0 0.0
        %2743 = vmatpush1.msra.mxu0 0.0
        %2744 = vmatprep.subr.mxu0 0.0
        %2745 = vmatpush1.msra.mxu0 0.0
        %2746 = vmatprep.subr.mxu0 0.0
        %2747 = vmatpush1.msra.mxu0 0.0
        %2748 = vmatprep.subr.mxu0 0.0
        %2749 = vmatpush1.msra.mxu0 0.0
        %2750 = vmatprep.subr.mxu0 0.0
        %2751 = vmatpush1.msra.mxu0 0.0
        %2752 = vmatprep.subr.mxu0 0.0
        %2753 = vmatpush1.msra.mxu0 0.0
        %2754 = vmatprep.subr.mxu0 0.0
        %2755 = vmatpush1.msra.mxu0 0.0
        %2756 = vmatprep.subr.mxu0 0.0
        %2757 = vmatpush1.msra.mxu0 0.0
        %2758 = vmatprep.subr.mxu0 0.0
        %2759 = vmatpush1.msra.mxu0 0.0
        %2760 = vmatprep.subr.mxu0 0.0
        %2761 = vmatpush1.msra.mxu0 0.0
        %2762 = vmatprep.subr.mxu0 0.0
        %2763 = vmatpush1.msra.mxu0 0.0
        %2764 = vmatprep.subr.mxu0 0.0
        %2765 = vmatpush1.msra.mxu0 0.0
        %2766 = vmatprep.mubr.f32.mxu0 0.0
        %v2767 = vand.u32 %v2546, 4294901760
        %v2768 = vsub.f32 %v2546, %v2767
        %2769 = vmatmul.mubr.f32.gmra.mrb[0].mxu0 %v2768
        %v2770 = vpop.f32.mrb[0].mxu0
        %v2771 = vadd.f32 %v2697, %v2770
        %v2772 = vpop.f32.mrb[0].mxu0
        %2773 = vdwg.mxu0
        %2774 = vmatprep.subr.mxu0 0.0
        %v2775 = vand.u32 %v2543, 4294901760
        %2776 = vmatpush1.msra.mxu0 %v2775
        %2777 = vmatprep.subr.mxu0 0.0
        %2778 = vmatpush1.msra.mxu0 0.0
        %2779 = vmatprep.subr.mxu0 0.0
        %2780 = vmatpush1.msra.mxu0 0.0
        %2781 = vmatprep.subr.mxu0 0.0
        %2782 = vmatpush1.msra.mxu0 0.0
        %2783 = vmatprep.subr.mxu0 0.0
        %2784 = vmatpush1.msra.mxu0 0.0
        %2785 = vmatprep.subr.mxu0 0.0
        %2786 = vmatpush1.msra.mxu0 0.0
        %2787 = vmatprep.subr.mxu0 0.0
        %2788 = vmatpush1.msra.mxu0 0.0
        %2789 = vmatprep.subr.mxu0 0.0
        %2790 = vmatpush1.msra.mxu0 0.0
        %2791 = vmatprep.subr.mxu0 0.0
        %2792 = vmatpush1.msra.mxu0 0.0
        %2793 = vmatprep.subr.mxu0 0.0
        %2794 = vmatpush1.msra.mxu0 0.0
        %2795 = vmatprep.subr.mxu0 0.0
        %2796 = vmatpush1.msra.mxu0 0.0
        %2797 = vmatprep.subr.mxu0 0.0
        %2798 = vmatpush1.msra.mxu0 0.0
        %2799 = vmatprep.subr.mxu0 0.0
        %2800 = vmatpush1.msra.mxu0 0.0
        %2801 = vmatprep.subr.mxu0 0.0
        %2802 = vmatpush1.msra.mxu0 0.0
        %2803 = vmatprep.subr.mxu0 0.0
        %2804 = vmatpush1.msra.mxu0 0.0
        %2805 = vmatprep.subr.mxu0 0.0
        %2806 = vmatpush1.msra.mxu0 0.0
        %2807 = vmatprep.subr.mxu0 0.0
        %2808 = vmatpush1.msra.mxu0 0.0
        %2809 = vmatprep.subr.mxu0 0.0
        %2810 = vmatpush1.msra.mxu0 0.0
        %2811 = vmatprep.subr.mxu0 0.0
        %2812 = vmatpush1.msra.mxu0 0.0
        %2813 = vmatprep.subr.mxu0 0.0
        %2814 = vmatpush1.msra.mxu0 0.0
        %2815 = vmatprep.subr.mxu0 0.0
        %2816 = vmatpush1.msra.mxu0 0.0
        %2817 = vmatprep.subr.mxu0 0.0
        %2818 = vmatpush1.msra.mxu0 0.0
        %2819 = vmatprep.subr.mxu0 0.0
        %2820 = vmatpush1.msra.mxu0 0.0
        %2821 = vmatprep.subr.mxu0 0.0
        %2822 = vmatpush1.msra.mxu0 0.0
        %2823 = vmatprep.subr.mxu0 0.0
        %2824 = vmatpush1.msra.mxu0 0.0
        %2825 = vmatprep.subr.mxu0 0.0
        %2826 = vmatpush1.msra.mxu0 0.0
        %2827 = vmatprep.subr.mxu0 0.0
        %2828 = vmatpush1.msra.mxu0 0.0
        %2829 = vmatprep.subr.mxu0 0.0
        %2830 = vmatpush1.msra.mxu0 0.0
        %2831 = vmatprep.subr.mxu0 0.0
        %2832 = vmatpush1.msra.mxu0 0.0
        %2833 = vmatprep.subr.mxu0 0.0
        %2834 = vmatpush1.msra.mxu0 0.0
        %2835 = vmatprep.subr.mxu0 0.0
        %2836 = vmatpush1.msra.mxu0 0.0
        %2837 = vmatprep.subr.mxu0 0.0
        %2838 = vmatpush1.msra.mxu0 0.0
        %2839 = vmatprep.mubr.f32.mxu0 0.0
        %v2840 = vand.u32 %v2546, 4294901760
        %v2841 = vsub.f32 %v2546, %v2840
        %v2842 = vand.u32 %v2841, 4294901760
        %2843 = vmatmul.mubr.f32.gmra.mrb[0].mxu0 %v2842
        %v2844 = vpop.f32.mrb[0].mxu0
        %v2845 = vadd.f32 %v2771, %v2844
        %v2846 = vpop.f32.mrb[0].mxu0
        %2847 = vdwg.mxu0
        %2848 = vmatprep.subr.mxu0 0.0
        %v2849 = vand.u32 %v2543, 4294901760
        %v2850 = vsub.f32 %v2543, %v2849
        %v2851 = vand.u32 %v2850, 4294901760
        %2852 = vmatpush1.msra.mxu0 %v2851
        %2853 = vmatprep.subr.mxu0 0.0
        %2854 = vmatpush1.msra.mxu0 0.0
        %2855 = vmatprep.subr.mxu0 0.0
        %2856 = vmatpush1.msra.mxu0 0.0
        %2857 = vmatprep.subr.mxu0 0.0
        %2858 = vmatpush1.msra.mxu0 0.0
        %2859 = vmatprep.subr.mxu0 0.0
        %2860 = vmatpush1.msra.mxu0 0.0
        %2861 = vmatprep.subr.mxu0 0.0
        %2862 = vmatpush1.msra.mxu0 0.0
        %2863 = vmatprep.subr.mxu0 0.0
        %2864 = vmatpush1.msra.mxu0 0.0
        %2865 = vmatprep.subr.mxu0 0.0
        %2866 = vmatpush1.msra.mxu0 0.0
        %2867 = vmatprep.subr.mxu0 0.0
        %2868 = vmatpush1.msra.mxu0 0.0
        %2869 = vmatprep.subr.mxu0 0.0
        %2870 = vmatpush1.msra.mxu0 0.0
        %2871 = vmatprep.subr.mxu0 0.0
        %2872 = vmatpush1.msra.mxu0 0.0
        %2873 = vmatprep.subr.mxu0 0.0
        %2874 = vmatpush1.msra.mxu0 0.0
        %2875 = vmatprep.subr.mxu0 0.0
        %2876 = vmatpush1.msra.mxu0 0.0
        %2877 = vmatprep.subr.mxu0 0.0
        %2878 = vmatpush1.msra.mxu0 0.0
        %2879 = vmatprep.subr.mxu0 0.0
        %2880 = vmatpush1.msra.mxu0 0.0
        %2881 = vmatprep.subr.mxu0 0.0
        %2882 = vmatpush1.msra.mxu0 0.0
        %2883 = vmatprep.subr.mxu0 0.0
        %2884 = vmatpush1.msra.mxu0 0.0
        %2885 = vmatprep.subr.mxu0 0.0
        %2886 = vmatpush1.msra.mxu0 0.0
        %2887 = vmatprep.subr.mxu0 0.0
        %2888 = vmatpush1.msra.mxu0 0.0
        %2889 = vmatprep.subr.mxu0 0.0
        %2890 = vmatpush1.msra.mxu0 0.0
        %2891 = vmatprep.subr.mxu0 0.0
        %2892 = vmatpush1.msra.mxu0 0.0
        %2893 = vmatprep.subr.mxu0 0.0
        %2894 = vmatpush1.msra.mxu0 0.0
        %2895 = vmatprep.subr.mxu0 0.0
        %2896 = vmatpush1.msra.mxu0 0.0
        %2897 = vmatprep.subr.mxu0 0.0
        %2898 = vmatpush1.msra.mxu0 0.0
        %2899 = vmatprep.subr.mxu0 0.0
        %2900 = vmatpush1.msra.mxu0 0.0
        %2901 = vmatprep.subr.mxu0 0.0
        %2902 = vmatpush1.msra.mxu0 0.0
        %2903 = vmatprep.subr.mxu0 0.0
        %2904 = vmatpush1.msra.mxu0 0.0
        %2905 = vmatprep.subr.mxu0 0.0
        %2906 = vmatpush1.msra.mxu0 0.0
        %2907 = vmatprep.subr.mxu0 0.0
        %2908 = vmatpush1.msra.mxu0 0.0
        %2909 = vmatprep.subr.mxu0 0.0
        %2910 = vmatpush1.msra.mxu0 0.0
        %2911 = vmatprep.subr.mxu0 0.0
        %2912 = vmatpush1.msra.mxu0 0.0
        %2913 = vmatprep.subr.mxu0 0.0
        %2914 = vmatpush1.msra.mxu0 0.0
        %2915 = vmatprep.mubr.f32.mxu0 0.0
        %v2916 = vand.u32 %v2546, 4294901760
        %2917 = vmatmul.mubr.f32.gmra.mrb[0].mxu0 %v2916
        %v2918 = vpop.f32.mrb[0].mxu0
        %v2919 = vadd.f32 %v2845, %v2918
        %v2920 = vpop.f32.mrb[0].mxu0
        %2921 = vdwg.mxu0
        %2922 = vmatprep.subr.mxu0 0.0
        %v2923 = vand.u32 %v2543, 4294901760
        %2924 = vmatpush1.msra.mxu0 %v2923
        %2925 = vmatprep.subr.mxu0 0.0
        %2926 = vmatpush1.msra.mxu0 0.0
        %2927 = vmatprep.subr.mxu0 0.0
        %2928 = vmatpush1.msra.mxu0 0.0
        %2929 = vmatprep.subr.mxu0 0.0
        %2930 = vmatpush1.msra.mxu0 0.0
        %2931 = vmatprep.subr.mxu0 0.0
        %2932 = vmatpush1.msra.mxu0 0.0
        %2933 = vmatprep.subr.mxu0 0.0
        %2934 = vmatpush1.msra.mxu0 0.0
        %2935 = vmatprep.subr.mxu0 0.0
        %2936 = vmatpush1.msra.mxu0 0.0
        %2937 = vmatprep.subr.mxu0 0.0
        %2938 = vmatpush1.msra.mxu0 0.0
        %2939 = vmatprep.subr.mxu0 0.0
        %2940 = vmatpush1.msra.mxu0 0.0
        %2941 = vmatprep.subr.mxu0 0.0
        %2942 = vmatpush1.msra.mxu0 0.0
        %2943 = vmatprep.subr.mxu0 0.0
        %2944 = vmatpush1.msra.mxu0 0.0
        %2945 = vmatprep.subr.mxu0 0.0
        %2946 = vmatpush1.msra.mxu0 0.0
        %2947 = vmatprep.subr.mxu0 0.0
        %2948 = vmatpush1.msra.mxu0 0.0
        %2949 = vmatprep.subr.mxu0 0.0
        %2950 = vmatpush1.msra.mxu0 0.0
        %2951 = vmatprep.subr.mxu0 0.0
        %2952 = vmatpush1.msra.mxu0 0.0
        %2953 = vmatprep.subr.mxu0 0.0
        %2954 = vmatpush1.msra.mxu0 0.0
        %2955 = vmatprep.subr.mxu0 0.0
        %2956 = vmatpush1.msra.mxu0 0.0
        %2957 = vmatprep.subr.mxu0 0.0
        %2958 = vmatpush1.msra.mxu0 0.0
        %2959 = vmatprep.subr.mxu0 0.0
        %2960 = vmatpush1.msra.mxu0 0.0
        %2961 = vmatprep.subr.mxu0 0.0
        %2962 = vmatpush1.msra.mxu0 0.0
        %2963 = vmatprep.subr.mxu0 0.0
        %2964 = vmatpush1.msra.mxu0 0.0
        %2965 = vmatprep.subr.mxu0 0.0
        %2966 = vmatpush1.msra.mxu0 0.0
        %2967 = vmatprep.subr.mxu0 0.0
        %2968 = vmatpush1.msra.mxu0 0.0
        %2969 = vmatprep.subr.mxu0 0.0
        %2970 = vmatpush1.msra.mxu0 0.0
        %2971 = vmatprep.subr.mxu0 0.0
        %2972 = vmatpush1.msra.mxu0 0.0
        %2973 = vmatprep.subr.mxu0 0.0
        %2974 = vmatpush1.msra.mxu0 0.0
        %2975 = vmatprep.subr.mxu0 0.0
        %2976 = vmatpush1.msra.mxu0 0.0
        %2977 = vmatprep.subr.mxu0 0.0
        %2978 = vmatpush1.msra.mxu0 0.0
        %2979 = vmatprep.subr.mxu0 0.0
        %2980 = vmatpush1.msra.mxu0 0.0
        %2981 = vmatprep.subr.mxu0 0.0
        %2982 = vmatpush1.msra.mxu0 0.0
        %2983 = vmatprep.subr.mxu0 0.0
        %2984 = vmatpush1.msra.mxu0 0.0
        %2985 = vmatprep.subr.mxu0 0.0
        %2986 = vmatpush1.msra.mxu0 0.0
        %2987 = vmatprep.mubr.f32.mxu0 0.0
        %v2988 = vand.u32 %v2546, 4294901760
        %2989 = vmatmul.mubr.f32.gmra.mrb[0].mxu0 %v2988
        %v2990 = vpop.f32.mrb[0].mxu0
        %v2991 = vadd.f32 %v2919, %v2990
        %v2992 = vpop.f32.mrb[0].mxu0
        %2993 = vdwg.mxu0
        %2994 = vrot.lane.b32.xlu0 %v1121, 112
        %v2995 = vpop.permute.xlu0 %2994
        %2996 = vrot.lane.b32.xlu0 %v1127, 80
        %v2997 = vpop.permute.xlu0 %2996
        %v2998 = vsel %vm1145, %v2995, 0
        %v3000 = vsel %vm1145, %v2997, 0
        %3002 = vmatprep.subr.mxu0 0.0
        %v3003 = vand.u32 %v3000, 4294901760
        %3004 = vmatpush1.xpose.msra.mxu0 %v3003
        %3005 = vmatprep.subr.mxu0 0.0
        %3006 = vmatpush1.xpose.msra.mxu0 0.0
        %3007 = vmatprep.subr.mxu0 0.0
        %3008 = vmatpush1.xpose.msra.mxu0 0.0
        %3009 = vmatprep.subr.mxu0 0.0
        %3010 = vmatpush1.xpose.msra.mxu0 0.0
        %3011 = vmatprep.subr.mxu0 0.0
        %3012 = vmatpush1.xpose.msra.mxu0 0.0
        %3013 = vmatprep.subr.mxu0 0.0
        %3014 = vmatpush1.xpose.msra.mxu0 0.0
        %3015 = vmatprep.subr.mxu0 0.0
        %3016 = vmatpush1.xpose.msra.mxu0 0.0
        %3017 = vmatprep.subr.mxu0 0.0
        %3018 = vmatpush1.xpose.msra.mxu0 0.0
        %3019 = vmatprep.subr.mxu0 0.0
        %3020 = vmatpush1.xpose.msra.mxu0 0.0
        %3021 = vmatprep.subr.mxu0 0.0
        %3022 = vmatpush1.xpose.msra.mxu0 0.0
        %3023 = vmatprep.subr.mxu0 0.0
        %3024 = vmatpush1.xpose.msra.mxu0 0.0
        %3025 = vmatprep.subr.mxu0 0.0
        %3026 = vmatpush1.xpose.msra.mxu0 0.0
        %3027 = vmatprep.subr.mxu0 0.0
        %3028 = vmatpush1.xpose.msra.mxu0 0.0
        %3029 = vmatprep.subr.mxu0 0.0
        %3030 = vmatpush1.xpose.msra.mxu0 0.0
        %3031 = vmatprep.subr.mxu0 0.0
        %3032 = vmatpush1.xpose.msra.mxu0 0.0
        %3033 = vmatprep.subr.mxu0 0.0
        %3034 = vmatpush1.xpose.msra.mxu0 0.0
        %3035 = vmatprep.subr.mxu0 0.0
        %3036 = vmatpush1.xpose.msra.mxu0 0.0
        %3037 = vmatprep.subr.mxu0 0.0
        %3038 = vmatpush1.xpose.msra.mxu0 0.0
        %3039 = vmatprep.subr.mxu0 0.0
        %3040 = vmatpush1.xpose.msra.mxu0 0.0
        %3041 = vmatprep.subr.mxu0 0.0
        %3042 = vmatpush1.xpose.msra.mxu0 0.0
        %3043 = vmatprep.subr.mxu0 0.0
        %3044 = vmatpush1.xpose.msra.mxu0 0.0
        %3045 = vmatprep.subr.mxu0 0.0
        %3046 = vmatpush1.xpose.msra.mxu0 0.0
        %3047 = vmatprep.subr.mxu0 0.0
        %3048 = vmatpush1.xpose.msra.mxu0 0.0
        %3049 = vmatprep.subr.mxu0 0.0
        %3050 = vmatpush1.xpose.msra.mxu0 0.0
        %3051 = vmatprep.subr.mxu0 0.0
        %3052 = vmatpush1.xpose.msra.mxu0 0.0
        %3053 = vmatprep.subr.mxu0 0.0
        %3054 = vmatpush1.xpose.msra.mxu0 0.0
        %3055 = vmatprep.subr.mxu0 0.0
        %3056 = vmatpush1.xpose.msra.mxu0 0.0
        %3057 = vmatprep.subr.mxu0 0.0
        %3058 = vmatpush1.xpose.msra.mxu0 0.0
        %3059 = vmatprep.subr.mxu0 0.0
        %3060 = vmatpush1.xpose.msra.mxu0 0.0
        %3061 = vmatprep.subr.mxu0 0.0
        %3062 = vmatpush1.xpose.msra.mxu0 0.0
        %3063 = vmatprep.subr.mxu0 0.0
        %3064 = vmatpush1.xpose.msra.mxu0 0.0
        %3065 = vmatprep.subr.mxu0 0.0
        %3066 = vmatpush1.xpose.msra.mxu0 0.0
        %3067 = vmatprep.mubr.f32.mxu0 0.0
        %v3068 = vand.u32 %v2998, 4294901760
        %v3069 = vsub.f32 %v2998, %v3068
        %v3070 = vand.u32 %v3069, 4294901760
        %v3071 = vsub.f32 %v3069, %v3070
        %v3072 = vand.u32 %v3071, 4294901760
        %3073 = vmatmul.mubr.f32.gmra.mrb[0].mxu0 %v3072
        %v3074 = vpop.f32.mrb[0].mxu0
        %v3075 = vadd.f32 0.0, %v3074
        %v3076 = vpop.f32.mrb[0].mxu0
        %3077 = vdwg.mxu0
        %3078 = vmatprep.subr.mxu0 0.0
        %v3079 = vand.u32 %v3000, 4294901760
        %v3080 = vsub.f32 %v3000, %v3079
        %v3081 = vand.u32 %v3080, 4294901760
        %v3082 = vsub.f32 %v3080, %v3081
        %v3083 = vand.u32 %v3082, 4294901760
        %3084 = vmatpush1.xpose.msra.mxu0 %v3083
        %3085 = vmatprep.subr.mxu0 0.0
        %3086 = vmatpush1.xpose.msra.mxu0 0.0
        %3087 = vmatprep.subr.mxu0 0.0
        %3088 = vmatpush1.xpose.msra.mxu0 0.0
        %3089 = vmatprep.subr.mxu0 0.0
        %3090 = vmatpush1.xpose.msra.mxu0 0.0
        %3091 = vmatprep.subr.mxu0 0.0
        %3092 = vmatpush1.xpose.msra.mxu0 0.0
        %3093 = vmatprep.subr.mxu0 0.0
        %3094 = vmatpush1.xpose.msra.mxu0 0.0
        %3095 = vmatprep.subr.mxu0 0.0
        %3096 = vmatpush1.xpose.msra.mxu0 0.0
        %3097 = vmatprep.subr.mxu0 0.0
        %3098 = vmatpush1.xpose.msra.mxu0 0.0
        %3099 = vmatprep.subr.mxu0 0.0
        %3100 = vmatpush1.xpose.msra.mxu0 0.0
        %3101 = vmatprep.subr.mxu0 0.0
        %3102 = vmatpush1.xpose.msra.mxu0 0.0
        %3103 = vmatprep.subr.mxu0 0.0
        %3104 = vmatpush1.xpose.msra.mxu0 0.0
        %3105 = vmatprep.subr.mxu0 0.0
        %3106 = vmatpush1.xpose.msra.mxu0 0.0
        %3107 = vmatprep.subr.mxu0 0.0
        %3108 = vmatpush1.xpose.msra.mxu0 0.0
        %3109 = vmatprep.subr.mxu0 0.0
        %3110 = vmatpush1.xpose.msra.mxu0 0.0
        %3111 = vmatprep.subr.mxu0 0.0
        %3112 = vmatpush1.xpose.msra.mxu0 0.0
        %3113 = vmatprep.subr.mxu0 0.0
        %3114 = vmatpush1.xpose.msra.mxu0 0.0
        %3115 = vmatprep.subr.mxu0 0.0
        %3116 = vmatpush1.xpose.msra.mxu0 0.0
        %3117 = vmatprep.subr.mxu0 0.0
        %3118 = vmatpush1.xpose.msra.mxu0 0.0
        %3119 = vmatprep.subr.mxu0 0.0
        %3120 = vmatpush1.xpose.msra.mxu0 0.0
        %3121 = vmatprep.subr.mxu0 0.0
        %3122 = vmatpush1.xpose.msra.mxu0 0.0
        %3123 = vmatprep.subr.mxu0 0.0
        %3124 = vmatpush1.xpose.msra.mxu0 0.0
        %3125 = vmatprep.subr.mxu0 0.0
        %3126 = vmatpush1.xpose.msra.mxu0 0.0
        %3127 = vmatprep.subr.mxu0 0.0
        %3128 = vmatpush1.xpose.msra.mxu0 0.0
        %3129 = vmatprep.subr.mxu0 0.0
        %3130 = vmatpush1.xpose.msra.mxu0 0.0
        %3131 = vmatprep.subr.mxu0 0.0
        %3132 = vmatpush1.xpose.msra.mxu0 0.0
        %3133 = vmatprep.subr.mxu0 0.0
        %3134 = vmatpush1.xpose.msra.mxu0 0.0
        %3135 = vmatprep.subr.mxu0 0.0
        %3136 = vmatpush1.xpose.msra.mxu0 0.0
        %3137 = vmatprep.subr.mxu0 0.0
        %3138 = vmatpush1.xpose.msra.mxu0 0.0
        %3139 = vmatprep.subr.mxu0 0.0
        %3140 = vmatpush1.xpose.msra.mxu0 0.0
        %3141 = vmatprep.subr.mxu0 0.0
        %3142 = vmatpush1.xpose.msra.mxu0 0.0
        %3143 = vmatprep.subr.mxu0 0.0
        %3144 = vmatpush1.xpose.msra.mxu0 0.0
        %3145 = vmatprep.subr.mxu0 0.0
        %3146 = vmatpush1.xpose.msra.mxu0 0.0
        %3147 = vmatprep.mubr.f32.mxu0 0.0
        %v3148 = vand.u32 %v2998, 4294901760
        %3149 = vmatmul.mubr.f32.gmra.mrb[0].mxu0 %v3148
        %v3150 = vpop.f32.mrb[0].mxu0
        %v3151 = vadd.f32 %v3075, %v3150
        %v3152 = vpop.f32.mrb[0].mxu0
        %3153 = vdwg.mxu0
        %3154 = vmatprep.subr.mxu0 0.0
        %v3155 = vand.u32 %v3000, 4294901760
        %v3156 = vsub.f32 %v3000, %v3155
        %3157 = vmatpush1.xpose.msra.mxu0 %v3156
        %3158 = vmatprep.subr.mxu0 0.0
        %3159 = vmatpush1.xpose.msra.mxu0 0.0
        %3160 = vmatprep.subr.mxu0 0.0
        %3161 = vmatpush1.xpose.msra.mxu0 0.0
        %3162 = vmatprep.subr.mxu0 0.0
        %3163 = vmatpush1.xpose.msra.mxu0 0.0
        %3164 = vmatprep.subr.mxu0 0.0
        %3165 = vmatpush1.xpose.msra.mxu0 0.0
        %3166 = vmatprep.subr.mxu0 0.0
        %3167 = vmatpush1.xpose.msra.mxu0 0.0
        %3168 = vmatprep.subr.mxu0 0.0
        %3169 = vmatpush1.xpose.msra.mxu0 0.0
        %3170 = vmatprep.subr.mxu0 0.0
        %3171 = vmatpush1.xpose.msra.mxu0 0.0
        %3172 = vmatprep.subr.mxu0 0.0
        %3173 = vmatpush1.xpose.msra.mxu0 0.0
        %3174 = vmatprep.subr.mxu0 0.0
        %3175 = vmatpush1.xpose.msra.mxu0 0.0
        %3176 = vmatprep.subr.mxu0 0.0
        %3177 = vmatpush1.xpose.msra.mxu0 0.0
        %3178 = vmatprep.subr.mxu0 0.0
        %3179 = vmatpush1.xpose.msra.mxu0 0.0
        %3180 = vmatprep.subr.mxu0 0.0
        %3181 = vmatpush1.xpose.msra.mxu0 0.0
        %3182 = vmatprep.subr.mxu0 0.0
        %3183 = vmatpush1.xpose.msra.mxu0 0.0
        %3184 = vmatprep.subr.mxu0 0.0
        %3185 = vmatpush1.xpose.msra.mxu0 0.0
        %3186 = vmatprep.subr.mxu0 0.0
        %3187 = vmatpush1.xpose.msra.mxu0 0.0
        %3188 = vmatprep.subr.mxu0 0.0
        %3189 = vmatpush1.xpose.msra.mxu0 0.0
        %3190 = vmatprep.subr.mxu0 0.0
        %3191 = vmatpush1.xpose.msra.mxu0 0.0
        %3192 = vmatprep.subr.mxu0 0.0
        %3193 = vmatpush1.xpose.msra.mxu0 0.0
        %3194 = vmatprep.subr.mxu0 0.0
        %3195 = vmatpush1.xpose.msra.mxu0 0.0
        %3196 = vmatprep.subr.mxu0 0.0
        %3197 = vmatpush1.xpose.msra.mxu0 0.0
        %3198 = vmatprep.subr.mxu0 0.0
        %3199 = vmatpush1.xpose.msra.mxu0 0.0
        %3200 = vmatprep.subr.mxu0 0.0
        %3201 = vmatpush1.xpose.msra.mxu0 0.0
        %3202 = vmatprep.subr.mxu0 0.0
        %3203 = vmatpush1.xpose.msra.mxu0 0.0
        %3204 = vmatprep.subr.mxu0 0.0
        %3205 = vmatpush1.xpose.msra.mxu0 0.0
        %3206 = vmatprep.subr.mxu0 0.0
        %3207 = vmatpush1.xpose.msra.mxu0 0.0
        %3208 = vmatprep.subr.mxu0 0.0
        %3209 = vmatpush1.xpose.msra.mxu0 0.0
        %3210 = vmatprep.subr.mxu0 0.0
        %3211 = vmatpush1.xpose.msra.mxu0 0.0
        %3212 = vmatprep.subr.mxu0 0.0
        %3213 = vmatpush1.xpose.msra.mxu0 0.0
        %3214 = vmatprep.subr.mxu0 0.0
        %3215 = vmatpush1.xpose.msra.mxu0 0.0
        %3216 = vmatprep.subr.mxu0 0.0
        %3217 = vmatpush1.xpose.msra.mxu0 0.0
        %3218 = vmatprep.subr.mxu0 0.0
        %3219 = vmatpush1.xpose.msra.mxu0 0.0
        %3220 = vmatprep.mubr.f32.mxu0 0.0
        %v3221 = vand.u32 %v2998, 4294901760
        %v3222 = vsub.f32 %v2998, %v3221
        %3223 = vmatmul.mubr.f32.gmra.mrb[0].mxu0 %v3222
        %v3224 = vpop.f32.mrb[0].mxu0
        %v3225 = vadd.f32 %v3151, %v3224
        %v3226 = vpop.f32.mrb[0].mxu0
        %3227 = vdwg.mxu0
        %3228 = vmatprep.subr.mxu0 0.0
        %v3229 = vand.u32 %v3000, 4294901760
        %3230 = vmatpush1.xpose.msra.mxu0 %v3229
        %3231 = vmatprep.subr.mxu0 0.0
        %3232 = vmatpush1.xpose.msra.mxu0 0.0
        %3233 = vmatprep.subr.mxu0 0.0
        %3234 = vmatpush1.xpose.msra.mxu0 0.0
        %3235 = vmatprep.subr.mxu0 0.0
        %3236 = vmatpush1.xpose.msra.mxu0 0.0
        %3237 = vmatprep.subr.mxu0 0.0
        %3238 = vmatpush1.xpose.msra.mxu0 0.0
        %3239 = vmatprep.subr.mxu0 0.0
        %3240 = vmatpush1.xpose.msra.mxu0 0.0
        %3241 = vmatprep.subr.mxu0 0.0
        %3242 = vmatpush1.xpose.msra.mxu0 0.0
        %3243 = vmatprep.subr.mxu0 0.0
        %3244 = vmatpush1.xpose.msra.mxu0 0.0
        %3245 = vmatprep.subr.mxu0 0.0
        %3246 = vmatpush1.xpose.msra.mxu0 0.0
        %3247 = vmatprep.subr.mxu0 0.0
        %3248 = vmatpush1.xpose.msra.mxu0 0.0
        %3249 = vmatprep.subr.mxu0 0.0
        %3250 = vmatpush1.xpose.msra.mxu0 0.0
        %3251 = vmatprep.subr.mxu0 0.0
        %3252 = vmatpush1.xpose.msra.mxu0 0.0
        %3253 = vmatprep.subr.mxu0 0.0
        %3254 = vmatpush1.xpose.msra.mxu0 0.0
        %3255 = vmatprep.subr.mxu0 0.0
        %3256 = vmatpush1.xpose.msra.mxu0 0.0
        %3257 = vmatprep.subr.mxu0 0.0
        %3258 = vmatpush1.xpose.msra.mxu0 0.0
        %3259 = vmatprep.subr.mxu0 0.0
        %3260 = vmatpush1.xpose.msra.mxu0 0.0
        %3261 = vmatprep.subr.mxu0 0.0
        %3262 = vmatpush1.xpose.msra.mxu0 0.0
        %3263 = vmatprep.subr.mxu0 0.0
        %3264 = vmatpush1.xpose.msra.mxu0 0.0
        %3265 = vmatprep.subr.mxu0 0.0
        %3266 = vmatpush1.xpose.msra.mxu0 0.0
        %3267 = vmatprep.subr.mxu0 0.0
        %3268 = vmatpush1.xpose.msra.mxu0 0.0
        %3269 = vmatprep.subr.mxu0 0.0
        %3270 = vmatpush1.xpose.msra.mxu0 0.0
        %3271 = vmatprep.subr.mxu0 0.0
        %3272 = vmatpush1.xpose.msra.mxu0 0.0
        %3273 = vmatprep.subr.mxu0 0.0
        %3274 = vmatpush1.xpose.msra.mxu0 0.0
        %3275 = vmatprep.subr.mxu0 0.0
        %3276 = vmatpush1.xpose.msra.mxu0 0.0
        %3277 = vmatprep.subr.mxu0 0.0
        %3278 = vmatpush1.xpose.msra.mxu0 0.0
        %3279 = vmatprep.subr.mxu0 0.0
        %3280 = vmatpush1.xpose.msra.mxu0 0.0
        %3281 = vmatprep.subr.mxu0 0.0
        %3282 = vmatpush1.xpose.msra.mxu0 0.0
        %3283 = vmatprep.subr.mxu0 0.0
        %3284 = vmatpush1.xpose.msra.mxu0 0.0
        %3285 = vmatprep.subr.mxu0 0.0
        %3286 = vmatpush1.xpose.msra.mxu0 0.0
        %3287 = vmatprep.subr.mxu0 0.0
        %3288 = vmatpush1.xpose.msra.mxu0 0.0
        %3289 = vmatprep.subr.mxu0 0.0
        %3290 = vmatpush1.xpose.msra.mxu0 0.0
        %3291 = vmatprep.subr.mxu0 0.0
        %3292 = vmatpush1.xpose.msra.mxu0 0.0
        %3293 = vmatprep.mubr.f32.mxu0 0.0
        %v3294 = vand.u32 %v2998, 4294901760
        %v3295 = vsub.f32 %v2998, %v3294
        %v3296 = vand.u32 %v3295, 4294901760
        %3297 = vmatmul.mubr.f32.gmra.mrb[0].mxu0 %v3296
        %v3298 = vpop.f32.mrb[0].mxu0
        %v3299 = vadd.f32 %v3225, %v3298
        %v3300 = vpop.f32.mrb[0].mxu0
        %3301 = vdwg.mxu0
        %3302 = vmatprep.subr.mxu0 0.0
        %v3303 = vand.u32 %v3000, 4294901760
        %v3304 = vsub.f32 %v3000, %v3303
        %v3305 = vand.u32 %v3304, 4294901760
        %3306 = vmatpush1.xpose.msra.mxu0 %v3305
        %3307 = vmatprep.subr.mxu0 0.0
        %3308 = vmatpush1.xpose.msra.mxu0 0.0
        %3309 = vmatprep.subr.mxu0 0.0
        %3310 = vmatpush1.xpose.msra.mxu0 0.0
        %3311 = vmatprep.subr.mxu0 0.0
        %3312 = vmatpush1.xpose.msra.mxu0 0.0
        %3313 = vmatprep.subr.mxu0 0.0
        %3314 = vmatpush1.xpose.msra.mxu0 0.0
        %3315 = vmatprep.subr.mxu0 0.0
        %3316 = vmatpush1.xpose.msra.mxu0 0.0
        %3317 = vmatprep.subr.mxu0 0.0
        %3318 = vmatpush1.xpose.msra.mxu0 0.0
        %3319 = vmatprep.subr.mxu0 0.0
        %3320 = vmatpush1.xpose.msra.mxu0 0.0
        %3321 = vmatprep.subr.mxu0 0.0
        %3322 = vmatpush1.xpose.msra.mxu0 0.0
        %3323 = vmatprep.subr.mxu0 0.0
        %3324 = vmatpush1.xpose.msra.mxu0 0.0
        %3325 = vmatprep.subr.mxu0 0.0
        %3326 = vmatpush1.xpose.msra.mxu0 0.0
        %3327 = vmatprep.subr.mxu0 0.0
        %3328 = vmatpush1.xpose.msra.mxu0 0.0
        %3329 = vmatprep.subr.mxu0 0.0
        %3330 = vmatpush1.xpose.msra.mxu0 0.0
        %3331 = vmatprep.subr.mxu0 0.0
        %3332 = vmatpush1.xpose.msra.mxu0 0.0
        %3333 = vmatprep.subr.mxu0 0.0
        %3334 = vmatpush1.xpose.msra.mxu0 0.0
        %3335 = vmatprep.subr.mxu0 0.0
        %3336 = vmatpush1.xpose.msra.mxu0 0.0
        %3337 = vmatprep.subr.mxu0 0.0
        %3338 = vmatpush1.xpose.msra.mxu0 0.0
        %3339 = vmatprep.subr.mxu0 0.0
        %3340 = vmatpush1.xpose.msra.mxu0 0.0
        %3341 = vmatprep.subr.mxu0 0.0
        %3342 = vmatpush1.xpose.msra.mxu0 0.0
        %3343 = vmatprep.subr.mxu0 0.0
        %3344 = vmatpush1.xpose.msra.mxu0 0.0
        %3345 = vmatprep.subr.mxu0 0.0
        %3346 = vmatpush1.xpose.msra.mxu0 0.0
        %3347 = vmatprep.subr.mxu0 0.0
        %3348 = vmatpush1.xpose.msra.mxu0 0.0
        %3349 = vmatprep.subr.mxu0 0.0
        %3350 = vmatpush1.xpose.msra.mxu0 0.0
        %3351 = vmatprep.subr.mxu0 0.0
        %3352 = vmatpush1.xpose.msra.mxu0 0.0
        %3353 = vmatprep.subr.mxu0 0.0
        %3354 = vmatpush1.xpose.msra.mxu0 0.0
        %3355 = vmatprep.subr.mxu0 0.0
        %3356 = vmatpush1.xpose.msra.mxu0 0.0
        %3357 = vmatprep.subr.mxu0 0.0
        %3358 = vmatpush1.xpose.msra.mxu0 0.0
        %3359 = vmatprep.subr.mxu0 0.0
        %3360 = vmatpush1.xpose.msra.mxu0 0.0
        %3361 = vmatprep.subr.mxu0 0.0
        %3362 = vmatpush1.xpose.msra.mxu0 0.0
        %3363 = vmatprep.subr.mxu0 0.0
        %3364 = vmatpush1.xpose.msra.mxu0 0.0
        %3365 = vmatprep.subr.mxu0 0.0
        %3366 = vmatpush1.xpose.msra.mxu0 0.0
        %3367 = vmatprep.subr.mxu0 0.0
        %3368 = vmatpush1.xpose.msra.mxu0 0.0
        %3369 = vmatprep.mubr.f32.mxu0 0.0
        %v3370 = vand.u32 %v2998, 4294901760
        %3371 = vmatmul.mubr.f32.gmra.mrb[0].mxu0 %v3370
        %v3372 = vpop.f32.mrb[0].mxu0
        %v3373 = vadd.f32 %v3299, %v3372
        %v3374 = vpop.f32.mrb[0].mxu0
        %3375 = vdwg.mxu0
        %3376 = vmatprep.subr.mxu0 0.0
        %v3377 = vand.u32 %v3000, 4294901760
        %3378 = vmatpush1.xpose.msra.mxu0 %v3377
        %3379 = vmatprep.subr.mxu0 0.0
        %3380 = vmatpush1.xpose.msra.mxu0 0.0
        %3381 = vmatprep.subr.mxu0 0.0
        %3382 = vmatpush1.xpose.msra.mxu0 0.0
        %3383 = vmatprep.subr.mxu0 0.0
        %3384 = vmatpush1.xpose.msra.mxu0 0.0
        %3385 = vmatprep.subr.mxu0 0.0
        %3386 = vmatpush1.xpose.msra.mxu0 0.0
        %3387 = vmatprep.subr.mxu0 0.0
        %3388 = vmatpush1.xpose.msra.mxu0 0.0
        %3389 = vmatprep.subr.mxu0 0.0
        %3390 = vmatpush1.xpose.msra.mxu0 0.0
        %3391 = vmatprep.subr.mxu0 0.0
        %3392 = vmatpush1.xpose.msra.mxu0 0.0
        %3393 = vmatprep.subr.mxu0 0.0
        %3394 = vmatpush1.xpose.msra.mxu0 0.0
        %3395 = vmatprep.subr.mxu0 0.0
        %3396 = vmatpush1.xpose.msra.mxu0 0.0
        %3397 = vmatprep.subr.mxu0 0.0
        %3398 = vmatpush1.xpose.msra.mxu0 0.0
        %3399 = vmatprep.subr.mxu0 0.0
        %3400 = vmatpush1.xpose.msra.mxu0 0.0
        %3401 = vmatprep.subr.mxu0 0.0
        %3402 = vmatpush1.xpose.msra.mxu0 0.0
        %3403 = vmatprep.subr.mxu0 0.0
        %3404 = vmatpush1.xpose.msra.mxu0 0.0
        %3405 = vmatprep.subr.mxu0 0.0
        %3406 = vmatpush1.xpose.msra.mxu0 0.0
        %3407 = vmatprep.subr.mxu0 0.0
        %3408 = vmatpush1.xpose.msra.mxu0 0.0
        %3409 = vmatprep.subr.mxu0 0.0
        %3410 = vmatpush1.xpose.msra.mxu0 0.0
        %3411 = vmatprep.subr.mxu0 0.0
        %3412 = vmatpush1.xpose.msra.mxu0 0.0
        %3413 = vmatprep.subr.mxu0 0.0
        %3414 = vmatpush1.xpose.msra.mxu0 0.0
        %3415 = vmatprep.subr.mxu0 0.0
        %3416 = vmatpush1.xpose.msra.mxu0 0.0
        %3417 = vmatprep.subr.mxu0 0.0
        %3418 = vmatpush1.xpose.msra.mxu0 0.0
        %3419 = vmatprep.subr.mxu0 0.0
        %3420 = vmatpush1.xpose.msra.mxu0 0.0
        %3421 = vmatprep.subr.mxu0 0.0
        %3422 = vmatpush1.xpose.msra.mxu0 0.0
        %3423 = vmatprep.subr.mxu0 0.0
        %3424 = vmatpush1.xpose.msra.mxu0 0.0
        %3425 = vmatprep.subr.mxu0 0.0
        %3426 = vmatpush1.xpose.msra.mxu0 0.0
        %3427 = vmatprep.subr.mxu0 0.0
        %3428 = vmatpush1.xpose.msra.mxu0 0.0
        %3429 = vmatprep.subr.mxu0 0.0
        %3430 = vmatpush1.xpose.msra.mxu0 0.0
        %3431 = vmatprep.subr.mxu0 0.0
        %3432 = vmatpush1.xpose.msra.mxu0 0.0
        %3433 = vmatprep.subr.mxu0 0.0
        %3434 = vmatpush1.xpose.msra.mxu0 0.0
        %3435 = vmatprep.subr.mxu0 0.0
        %3436 = vmatpush1.xpose.msra.mxu0 0.0
        %3437 = vmatprep.subr.mxu0 0.0
        %3438 = vmatpush1.xpose.msra.mxu0 0.0
        %3439 = vmatprep.subr.mxu0 0.0
        %3440 = vmatpush1.xpose.msra.mxu0 0.0
        %3441 = vmatprep.mubr.f32.mxu0 0.0
        %v3442 = vand.u32 %v2998, 4294901760
        %3443 = vmatmul.mubr.f32.gmra.mrb[0].mxu0 %v3442
        %v3444 = vpop.f32.mrb[0].mxu0
        %v3445 = vadd.f32 %v3373, %v3444
        %v3446 = vpop.f32.mrb[0].mxu0
        %3447 = vdwg.mxu0
        %3448 = vrot.lane.b32.xlu0 %v1133, 112
        %v3449 = vpop.permute.xlu0 %3448
        %3450 = vrot.lane.b32.xlu0 %v1139, 80
        %v3451 = vpop.permute.xlu0 %3450
        %v3452 = vsel %vm1145, %v3449, 0
        %v3454 = vsel %vm1145, %v3451, 0
        %3456 = vmatprep.subr.mxu0 0.0
        %v3457 = vand.u32 %v3454, 4294901760
        %3458 = vmatpush1.xpose.msra.mxu0 %v3457
        %3459 = vmatprep.subr.mxu0 0.0
        %3460 = vmatpush1.xpose.msra.mxu0 0.0
        %3461 = vmatprep.subr.mxu0 0.0
        %3462 = vmatpush1.xpose.msra.mxu0 0.0
        %3463 = vmatprep.subr.mxu0 0.0
        %3464 = vmatpush1.xpose.msra.mxu0 0.0
        %3465 = vmatprep.subr.mxu0 0.0
        %3466 = vmatpush1.xpose.msra.mxu0 0.0
        %3467 = vmatprep.subr.mxu0 0.0
        %3468 = vmatpush1.xpose.msra.mxu0 0.0
        %3469 = vmatprep.subr.mxu0 0.0
        %3470 = vmatpush1.xpose.msra.mxu0 0.0
        %3471 = vmatprep.subr.mxu0 0.0
        %3472 = vmatpush1.xpose.msra.mxu0 0.0
        %3473 = vmatprep.subr.mxu0 0.0
        %3474 = vmatpush1.xpose.msra.mxu0 0.0
        %3475 = vmatprep.subr.mxu0 0.0
        %3476 = vmatpush1.xpose.msra.mxu0 0.0
        %3477 = vmatprep.subr.mxu0 0.0
        %3478 = vmatpush1.xpose.msra.mxu0 0.0
        %3479 = vmatprep.subr.mxu0 0.0
        %3480 = vmatpush1.xpose.msra.mxu0 0.0
        %3481 = vmatprep.subr.mxu0 0.0
        %3482 = vmatpush1.xpose.msra.mxu0 0.0
        %3483 = vmatprep.subr.mxu0 0.0
        %3484 = vmatpush1.xpose.msra.mxu0 0.0
        %3485 = vmatprep.subr.mxu0 0.0
        %3486 = vmatpush1.xpose.msra.mxu0 0.0
        %3487 = vmatprep.subr.mxu0 0.0
        %3488 = vmatpush1.xpose.msra.mxu0 0.0
        %3489 = vmatprep.subr.mxu0 0.0
        %3490 = vmatpush1.xpose.msra.mxu0 0.0
        %3491 = vmatprep.subr.mxu0 0.0
        %3492 = vmatpush1.xpose.msra.mxu0 0.0
        %3493 = vmatprep.subr.mxu0 0.0
        %3494 = vmatpush1.xpose.msra.mxu0 0.0
        %3495 = vmatprep.subr.mxu0 0.0
        %3496 = vmatpush1.xpose.msra.mxu0 0.0
        %3497 = vmatprep.subr.mxu0 0.0
        %3498 = vmatpush1.xpose.msra.mxu0 0.0
        %3499 = vmatprep.subr.mxu0 0.0
        %3500 = vmatpush1.xpose.msra.mxu0 0.0
        %3501 = vmatprep.subr.mxu0 0.0
        %3502 = vmatpush1.xpose.msra.mxu0 0.0
        %3503 = vmatprep.subr.mxu0 0.0
        %3504 = vmatpush1.xpose.msra.mxu0 0.0
        %3505 = vmatprep.subr.mxu0 0.0
        %3506 = vmatpush1.xpose.msra.mxu0 0.0
        %3507 = vmatprep.subr.mxu0 0.0
        %3508 = vmatpush1.xpose.msra.mxu0 0.0
        %3509 = vmatprep.subr.mxu0 0.0
        %3510 = vmatpush1.xpose.msra.mxu0 0.0
        %3511 = vmatprep.subr.mxu0 0.0
        %3512 = vmatpush1.xpose.msra.mxu0 0.0
        %3513 = vmatprep.subr.mxu0 0.0
        %3514 = vmatpush1.xpose.msra.mxu0 0.0
        %3515 = vmatprep.subr.mxu0 0.0
        %3516 = vmatpush1.xpose.msra.mxu0 0.0
        %3517 = vmatprep.subr.mxu0 0.0
        %3518 = vmatpush1.xpose.msra.mxu0 0.0
        %3519 = vmatprep.subr.mxu0 0.0
        %3520 = vmatpush1.xpose.msra.mxu0 0.0
        %3521 = vmatprep.mubr.f32.mxu0 0.0
        %v3522 = vand.u32 %v3452, 4294901760
        %v3523 = vsub.f32 %v3452, %v3522
        %v3524 = vand.u32 %v3523, 4294901760
        %v3525 = vsub.f32 %v3523, %v3524
        %v3526 = vand.u32 %v3525, 4294901760
        %3527 = vmatmul.mubr.f32.gmra.mrb[0].mxu0 %v3526
        %v3528 = vpop.f32.mrb[0].mxu0
        %v3529 = vadd.f32 0.0, %v3528
        %v3530 = vpop.f32.mrb[0].mxu0
        %3531 = vdwg.mxu0
        %3532 = vmatprep.subr.mxu0 0.0
        %v3533 = vand.u32 %v3454, 4294901760
        %v3534 = vsub.f32 %v3454, %v3533
        %v3535 = vand.u32 %v3534, 4294901760
        %v3536 = vsub.f32 %v3534, %v3535
        %v3537 = vand.u32 %v3536, 4294901760
        %3538 = vmatpush1.xpose.msra.mxu0 %v3537
        %3539 = vmatprep.subr.mxu0 0.0
        %3540 = vmatpush1.xpose.msra.mxu0 0.0
        %3541 = vmatprep.subr.mxu0 0.0
        %3542 = vmatpush1.xpose.msra.mxu0 0.0
        %3543 = vmatprep.subr.mxu0 0.0
        %3544 = vmatpush1.xpose.msra.mxu0 0.0
        %3545 = vmatprep.subr.mxu0 0.0
        %3546 = vmatpush1.xpose.msra.mxu0 0.0
        %3547 = vmatprep.subr.mxu0 0.0
        %3548 = vmatpush1.xpose.msra.mxu0 0.0
        %3549 = vmatprep.subr.mxu0 0.0
        %3550 = vmatpush1.xpose.msra.mxu0 0.0
        %3551 = vmatprep.subr.mxu0 0.0
        %3552 = vmatpush1.xpose.msra.mxu0 0.0
        %3553 = vmatprep.subr.mxu0 0.0
        %3554 = vmatpush1.xpose.msra.mxu0 0.0
        %3555 = vmatprep.subr.mxu0 0.0
        %3556 = vmatpush1.xpose.msra.mxu0 0.0
        %3557 = vmatprep.subr.mxu0 0.0
        %3558 = vmatpush1.xpose.msra.mxu0 0.0
        %3559 = vmatprep.subr.mxu0 0.0
        %3560 = vmatpush1.xpose.msra.mxu0 0.0
        %3561 = vmatprep.subr.mxu0 0.0
        %3562 = vmatpush1.xpose.msra.mxu0 0.0
        %3563 = vmatprep.subr.mxu0 0.0
        %3564 = vmatpush1.xpose.msra.mxu0 0.0
        %3565 = vmatprep.subr.mxu0 0.0
        %3566 = vmatpush1.xpose.msra.mxu0 0.0
        %3567 = vmatprep.subr.mxu0 0.0
        %3568 = vmatpush1.xpose.msra.mxu0 0.0
        %3569 = vmatprep.subr.mxu0 0.0
        %3570 = vmatpush1.xpose.msra.mxu0 0.0
        %3571 = vmatprep.subr.mxu0 0.0
        %3572 = vmatpush1.xpose.msra.mxu0 0.0
        %3573 = vmatprep.subr.mxu0 0.0
        %3574 = vmatpush1.xpose.msra.mxu0 0.0
        %3575 = vmatprep.subr.mxu0 0.0
        %3576 = vmatpush1.xpose.msra.mxu0 0.0
        %3577 = vmatprep.subr.mxu0 0.0
        %3578 = vmatpush1.xpose.msra.mxu0 0.0
        %3579 = vmatprep.subr.mxu0 0.0
        %3580 = vmatpush1.xpose.msra.mxu0 0.0
        %3581 = vmatprep.subr.mxu0 0.0
        %3582 = vmatpush1.xpose.msra.mxu0 0.0
        %3583 = vmatprep.subr.mxu0 0.0
        %3584 = vmatpush1.xpose.msra.mxu0 0.0
        %3585 = vmatprep.subr.mxu0 0.0
        %3586 = vmatpush1.xpose.msra.mxu0 0.0
        %3587 = vmatprep.subr.mxu0 0.0
        %3588 = vmatpush1.xpose.msra.mxu0 0.0
        %3589 = vmatprep.subr.mxu0 0.0
        %3590 = vmatpush1.xpose.msra.mxu0 0.0
        %3591 = vmatprep.subr.mxu0 0.0
        %3592 = vmatpush1.xpose.msra.mxu0 0.0
        %3593 = vmatprep.subr.mxu0 0.0
        %3594 = vmatpush1.xpose.msra.mxu0 0.0
        %3595 = vmatprep.subr.mxu0 0.0
        %3596 = vmatpush1.xpose.msra.mxu0 0.0
        %3597 = vmatprep.subr.mxu0 0.0
        %3598 = vmatpush1.xpose.msra.mxu0 0.0
        %3599 = vmatprep.subr.mxu0 0.0
        %3600 = vmatpush1.xpose.msra.mxu0 0.0
        %3601 = vmatprep.mubr.f32.mxu0 0.0
        %v3602 = vand.u32 %v3452, 4294901760
        %3603 = vmatmul.mubr.f32.gmra.mrb[0].mxu0 %v3602
        %v3604 = vpop.f32.mrb[0].mxu0
        %v3605 = vadd.f32 %v3529, %v3604
        %v3606 = vpop.f32.mrb[0].mxu0
        %3607 = vdwg.mxu0
        %3608 = vmatprep.subr.mxu0 0.0
        %v3609 = vand.u32 %v3454, 4294901760
        %v3610 = vsub.f32 %v3454, %v3609
        %3611 = vmatpush1.xpose.msra.mxu0 %v3610
        %3612 = vmatprep.subr.mxu0 0.0
        %3613 = vmatpush1.xpose.msra.mxu0 0.0
        %3614 = vmatprep.subr.mxu0 0.0
        %3615 = vmatpush1.xpose.msra.mxu0 0.0
        %3616 = vmatprep.subr.mxu0 0.0
        %3617 = vmatpush1.xpose.msra.mxu0 0.0
        %3618 = vmatprep.subr.mxu0 0.0
        %3619 = vmatpush1.xpose.msra.mxu0 0.0
        %3620 = vmatprep.subr.mxu0 0.0
        %3621 = vmatpush1.xpose.msra.mxu0 0.0
        %3622 = vmatprep.subr.mxu0 0.0
        %3623 = vmatpush1.xpose.msra.mxu0 0.0
        %3624 = vmatprep.subr.mxu0 0.0
        %3625 = vmatpush1.xpose.msra.mxu0 0.0
        %3626 = vmatprep.subr.mxu0 0.0
        %3627 = vmatpush1.xpose.msra.mxu0 0.0
        %3628 = vmatprep.subr.mxu0 0.0
        %3629 = vmatpush1.xpose.msra.mxu0 0.0
        %3630 = vmatprep.subr.mxu0 0.0
        %3631 = vmatpush1.xpose.msra.mxu0 0.0
        %3632 = vmatprep.subr.mxu0 0.0
        %3633 = vmatpush1.xpose.msra.mxu0 0.0
        %3634 = vmatprep.subr.mxu0 0.0
        %3635 = vmatpush1.xpose.msra.mxu0 0.0
        %3636 = vmatprep.subr.mxu0 0.0
        %3637 = vmatpush1.xpose.msra.mxu0 0.0
        %3638 = vmatprep.subr.mxu0 0.0
        %3639 = vmatpush1.xpose.msra.mxu0 0.0
        %3640 = vmatprep.subr.mxu0 0.0
        %3641 = vmatpush1.xpose.msra.mxu0 0.0
        %3642 = vmatprep.subr.mxu0 0.0
        %3643 = vmatpush1.xpose.msra.mxu0 0.0
        %3644 = vmatprep.subr.mxu0 0.0
        %3645 = vmatpush1.xpose.msra.mxu0 0.0
        %3646 = vmatprep.subr.mxu0 0.0
        %3647 = vmatpush1.xpose.msra.mxu0 0.0
        %3648 = vmatprep.subr.mxu0 0.0
        %3649 = vmatpush1.xpose.msra.mxu0 0.0
        %3650 = vmatprep.subr.mxu0 0.0
        %3651 = vmatpush1.xpose.msra.mxu0 0.0
        %3652 = vmatprep.subr.mxu0 0.0
        %3653 = vmatpush1.xpose.msra.mxu0 0.0
        %3654 = vmatprep.subr.mxu0 0.0
        %3655 = vmatpush1.xpose.msra.mxu0 0.0
        %3656 = vmatprep.subr.mxu0 0.0
        %3657 = vmatpush1.xpose.msra.mxu0 0.0
        %3658 = vmatprep.subr.mxu0 0.0
        %3659 = vmatpush1.xpose.msra.mxu0 0.0
        %3660 = vmatprep.subr.mxu0 0.0
        %3661 = vmatpush1.xpose.msra.mxu0 0.0
        %3662 = vmatprep.subr.mxu0 0.0
        %3663 = vmatpush1.xpose.msra.mxu0 0.0
        %3664 = vmatprep.subr.mxu0 0.0
        %3665 = vmatpush1.xpose.msra.mxu0 0.0
        %3666 = vmatprep.subr.mxu0 0.0
        %3667 = vmatpush1.xpose.msra.mxu0 0.0
        %3668 = vmatprep.subr.mxu0 0.0
        %3669 = vmatpush1.xpose.msra.mxu0 0.0
        %3670 = vmatprep.subr.mxu0 0.0
        %3671 = vmatpush1.xpose.msra.mxu0 0.0
        %3672 = vmatprep.subr.mxu0 0.0
        %3673 = vmatpush1.xpose.msra.mxu0 0.0
        %3674 = vmatprep.mubr.f32.mxu0 0.0
        %v3675 = vand.u32 %v3452, 4294901760
        %v3676 = vsub.f32 %v3452, %v3675
        %3677 = vmatmul.mubr.f32.gmra.mrb[0].mxu0 %v3676
        %v3678 = vpop.f32.mrb[0].mxu0
        %v3679 = vadd.f32 %v3605, %v3678
        %v3680 = vpop.f32.mrb[0].mxu0
        %3681 = vdwg.mxu0
        %3682 = vmatprep.subr.mxu0 0.0
        %v3683 = vand.u32 %v3454, 4294901760
        %3684 = vmatpush1.xpose.msra.mxu0 %v3683
        %3685 = vmatprep.subr.mxu0 0.0
        %3686 = vmatpush1.xpose.msra.mxu0 0.0
        %3687 = vmatprep.subr.mxu0 0.0
        %3688 = vmatpush1.xpose.msra.mxu0 0.0
        %3689 = vmatprep.subr.mxu0 0.0
        %3690 = vmatpush1.xpose.msra.mxu0 0.0
        %3691 = vmatprep.subr.mxu0 0.0
        %3692 = vmatpush1.xpose.msra.mxu0 0.0
        %3693 = vmatprep.subr.mxu0 0.0
        %3694 = vmatpush1.xpose.msra.mxu0 0.0
        %3695 = vmatprep.subr.mxu0 0.0
        %3696 = vmatpush1.xpose.msra.mxu0 0.0
        %3697 = vmatprep.subr.mxu0 0.0
        %3698 = vmatpush1.xpose.msra.mxu0 0.0
        %3699 = vmatprep.subr.mxu0 0.0
        %3700 = vmatpush1.xpose.msra.mxu0 0.0
        %3701 = vmatprep.subr.mxu0 0.0
        %3702 = vmatpush1.xpose.msra.mxu0 0.0
        %3703 = vmatprep.subr.mxu0 0.0
        %3704 = vmatpush1.xpose.msra.mxu0 0.0
        %3705 = vmatprep.subr.mxu0 0.0
        %3706 = vmatpush1.xpose.msra.mxu0 0.0
        %3707 = vmatprep.subr.mxu0 0.0
        %3708 = vmatpush1.xpose.msra.mxu0 0.0
        %3709 = vmatprep.subr.mxu0 0.0
        %3710 = vmatpush1.xpose.msra.mxu0 0.0
        %3711 = vmatprep.subr.mxu0 0.0
        %3712 = vmatpush1.xpose.msra.mxu0 0.0
        %3713 = vmatprep.subr.mxu0 0.0
        %3714 = vmatpush1.xpose.msra.mxu0 0.0
        %3715 = vmatprep.subr.mxu0 0.0
        %3716 = vmatpush1.xpose.msra.mxu0 0.0
        %3717 = vmatprep.subr.mxu0 0.0
        %3718 = vmatpush1.xpose.msra.mxu0 0.0
        %3719 = vmatprep.subr.mxu0 0.0
        %3720 = vmatpush1.xpose.msra.mxu0 0.0
        %3721 = vmatprep.subr.mxu0 0.0
        %3722 = vmatpush1.xpose.msra.mxu0 0.0
        %3723 = vmatprep.subr.mxu0 0.0
        %3724 = vmatpush1.xpose.msra.mxu0 0.0
        %3725 = vmatprep.subr.mxu0 0.0
        %3726 = vmatpush1.xpose.msra.mxu0 0.0
        %3727 = vmatprep.subr.mxu0 0.0
        %3728 = vmatpush1.xpose.msra.mxu0 0.0
        %3729 = vmatprep.subr.mxu0 0.0
        %3730 = vmatpush1.xpose.msra.mxu0 0.0
        %3731 = vmatprep.subr.mxu0 0.0
        %3732 = vmatpush1.xpose.msra.mxu0 0.0
        %3733 = vmatprep.subr.mxu0 0.0
        %3734 = vmatpush1.xpose.msra.mxu0 0.0
        %3735 = vmatprep.subr.mxu0 0.0
        %3736 = vmatpush1.xpose.msra.mxu0 0.0
        %3737 = vmatprep.subr.mxu0 0.0
        %3738 = vmatpush1.xpose.msra.mxu0 0.0
        %3739 = vmatprep.subr.mxu0 0.0
        %3740 = vmatpush1.xpose.msra.mxu0 0.0
        %3741 = vmatprep.subr.mxu0 0.0
        %3742 = vmatpush1.xpose.msra.mxu0 0.0
        %3743 = vmatprep.subr.mxu0 0.0
        %3744 = vmatpush1.xpose.msra.mxu0 0.0
        %3745 = vmatprep.subr.mxu0 0.0
        %3746 = vmatpush1.xpose.msra.mxu0 0.0
        %3747 = vmatprep.mubr.f32.mxu0 0.0
        %v3748 = vand.u32 %v3452, 4294901760
        %v3749 = vsub.f32 %v3452, %v3748
        %v3750 = vand.u32 %v3749, 4294901760
        %3751 = vmatmul.mubr.f32.gmra.mrb[0].mxu0 %v3750
        %v3752 = vpop.f32.mrb[0].mxu0
        %v3753 = vadd.f32 %v3679, %v3752
        %v3754 = vpop.f32.mrb[0].mxu0
        %3755 = vdwg.mxu0
        %3756 = vmatprep.subr.mxu0 0.0
        %v3757 = vand.u32 %v3454, 4294901760
        %v3758 = vsub.f32 %v3454, %v3757
        %v3759 = vand.u32 %v3758, 4294901760
        %3760 = vmatpush1.xpose.msra.mxu0 %v3759
        %3761 = vmatprep.subr.mxu0 0.0
        %3762 = vmatpush1.xpose.msra.mxu0 0.0
        %3763 = vmatprep.subr.mxu0 0.0
        %3764 = vmatpush1.xpose.msra.mxu0 0.0
        %3765 = vmatprep.subr.mxu0 0.0
        %3766 = vmatpush1.xpose.msra.mxu0 0.0
        %3767 = vmatprep.subr.mxu0 0.0
        %3768 = vmatpush1.xpose.msra.mxu0 0.0
        %3769 = vmatprep.subr.mxu0 0.0
        %3770 = vmatpush1.xpose.msra.mxu0 0.0
        %3771 = vmatprep.subr.mxu0 0.0
        %3772 = vmatpush1.xpose.msra.mxu0 0.0
        %3773 = vmatprep.subr.mxu0 0.0
        %3774 = vmatpush1.xpose.msra.mxu0 0.0
        %3775 = vmatprep.subr.mxu0 0.0
        %3776 = vmatpush1.xpose.msra.mxu0 0.0
        %3777 = vmatprep.subr.mxu0 0.0
        %3778 = vmatpush1.xpose.msra.mxu0 0.0
        %3779 = vmatprep.subr.mxu0 0.0
        %3780 = vmatpush1.xpose.msra.mxu0 0.0
        %3781 = vmatprep.subr.mxu0 0.0
        %3782 = vmatpush1.xpose.msra.mxu0 0.0
        %3783 = vmatprep.subr.mxu0 0.0
        %3784 = vmatpush1.xpose.msra.mxu0 0.0
        %3785 = vmatprep.subr.mxu0 0.0
        %3786 = vmatpush1.xpose.msra.mxu0 0.0
        %3787 = vmatprep.subr.mxu0 0.0
        %3788 = vmatpush1.xpose.msra.mxu0 0.0
        %3789 = vmatprep.subr.mxu0 0.0
        %3790 = vmatpush1.xpose.msra.mxu0 0.0
        %3791 = vmatprep.subr.mxu0 0.0
        %3792 = vmatpush1.xpose.msra.mxu0 0.0
        %3793 = vmatprep.subr.mxu0 0.0
        %3794 = vmatpush1.xpose.msra.mxu0 0.0
        %3795 = vmatprep.subr.mxu0 0.0
        %3796 = vmatpush1.xpose.msra.mxu0 0.0
        %3797 = vmatprep.subr.mxu0 0.0
        %3798 = vmatpush1.xpose.msra.mxu0 0.0
        %3799 = vmatprep.subr.mxu0 0.0
        %3800 = vmatpush1.xpose.msra.mxu0 0.0
        %3801 = vmatprep.subr.mxu0 0.0
        %3802 = vmatpush1.xpose.msra.mxu0 0.0
        %3803 = vmatprep.subr.mxu0 0.0
        %3804 = vmatpush1.xpose.msra.mxu0 0.0
        %3805 = vmatprep.subr.mxu0 0.0
        %3806 = vmatpush1.xpose.msra.mxu0 0.0
        %3807 = vmatprep.subr.mxu0 0.0
        %3808 = vmatpush1.xpose.msra.mxu0 0.0
        %3809 = vmatprep.subr.mxu0 0.0
        %3810 = vmatpush1.xpose.msra.mxu0 0.0
        %3811 = vmatprep.subr.mxu0 0.0
        %3812 = vmatpush1.xpose.msra.mxu0 0.0
        %3813 = vmatprep.subr.mxu0 0.0
        %3814 = vmatpush1.xpose.msra.mxu0 0.0
        %3815 = vmatprep.subr.mxu0 0.0
        %3816 = vmatpush1.xpose.msra.mxu0 0.0
        %3817 = vmatprep.subr.mxu0 0.0
        %3818 = vmatpush1.xpose.msra.mxu0 0.0
        %3819 = vmatprep.subr.mxu0 0.0
        %3820 = vmatpush1.xpose.msra.mxu0 0.0
        %3821 = vmatprep.subr.mxu0 0.0
        %3822 = vmatpush1.xpose.msra.mxu0 0.0
        %3823 = vmatprep.mubr.f32.mxu0 0.0
        %v3824 = vand.u32 %v3452, 4294901760
        %3825 = vmatmul.mubr.f32.gmra.mrb[0].mxu0 %v3824
        %v3826 = vpop.f32.mrb[0].mxu0
        %v3827 = vadd.f32 %v3753, %v3826
        %v3828 = vpop.f32.mrb[0].mxu0
        %3829 = vdwg.mxu0
        %3830 = vmatprep.subr.mxu0 0.0
        %v3831 = vand.u32 %v3454, 4294901760
        %3832 = vmatpush1.xpose.msra.mxu0 %v3831
        %3833 = vmatprep.subr.mxu0 0.0
        %3834 = vmatpush1.xpose.msra.mxu0 0.0
        %3835 = vmatprep.subr.mxu0 0.0
        %3836 = vmatpush1.xpose.msra.mxu0 0.0
        %3837 = vmatprep.subr.mxu0 0.0
        %3838 = vmatpush1.xpose.msra.mxu0 0.0
        %3839 = vmatprep.subr.mxu0 0.0
        %3840 = vmatpush1.xpose.msra.mxu0 0.0
        %3841 = vmatprep.subr.mxu0 0.0
        %3842 = vmatpush1.xpose.msra.mxu0 0.0
        %3843 = vmatprep.subr.mxu0 0.0
        %3844 = vmatpush1.xpose.msra.mxu0 0.0
        %3845 = vmatprep.subr.mxu0 0.0
        %3846 = vmatpush1.xpose.msra.mxu0 0.0
        %3847 = vmatprep.subr.mxu0 0.0
        %3848 = vmatpush1.xpose.msra.mxu0 0.0
        %3849 = vmatprep.subr.mxu0 0.0
        %3850 = vmatpush1.xpose.msra.mxu0 0.0
        %3851 = vmatprep.subr.mxu0 0.0
        %3852 = vmatpush1.xpose.msra.mxu0 0.0
        %3853 = vmatprep.subr.mxu0 0.0
        %3854 = vmatpush1.xpose.msra.mxu0 0.0
        %3855 = vmatprep.subr.mxu0 0.0
        %3856 = vmatpush1.xpose.msra.mxu0 0.0
        %3857 = vmatprep.subr.mxu0 0.0
        %3858 = vmatpush1.xpose.msra.mxu0 0.0
        %3859 = vmatprep.subr.mxu0 0.0
        %3860 = vmatpush1.xpose.msra.mxu0 0.0
        %3861 = vmatprep.subr.mxu0 0.0
        %3862 = vmatpush1.xpose.msra.mxu0 0.0
        %3863 = vmatprep.subr.mxu0 0.0
        %3864 = vmatpush1.xpose.msra.mxu0 0.0
        %3865 = vmatprep.subr.mxu0 0.0
        %3866 = vmatpush1.xpose.msra.mxu0 0.0
        %3867 = vmatprep.subr.mxu0 0.0
        %3868 = vmatpush1.xpose.msra.mxu0 0.0
        %3869 = vmatprep.subr.mxu0 0.0
        %3870 = vmatpush1.xpose.msra.mxu0 0.0
        %3871 = vmatprep.subr.mxu0 0.0
        %3872 = vmatpush1.xpose.msra.mxu0 0.0
        %3873 = vmatprep.subr.mxu0 0.0
        %3874 = vmatpush1.xpose.msra.mxu0 0.0
        %3875 = vmatprep.subr.mxu0 0.0
        %3876 = vmatpush1.xpose.msra.mxu0 0.0
        %3877 = vmatprep.subr.mxu0 0.0
        %3878 = vmatpush1.xpose.msra.mxu0 0.0
        %3879 = vmatprep.subr.mxu0 0.0
        %3880 = vmatpush1.xpose.msra.mxu0 0.0
        %3881 = vmatprep.subr.mxu0 0.0
        %3882 = vmatpush1.xpose.msra.mxu0 0.0
        %3883 = vmatprep.subr.mxu0 0.0
        %3884 = vmatpush1.xpose.msra.mxu0 0.0
        %3885 = vmatprep.subr.mxu0 0.0
        %3886 = vmatpush1.xpose.msra.mxu0 0.0
        %3887 = vmatprep.subr.mxu0 0.0
        %3888 = vmatpush1.xpose.msra.mxu0 0.0
        %3889 = vmatprep.subr.mxu0 0.0
        %3890 = vmatpush1.xpose.msra.mxu0 0.0
        %3891 = vmatprep.subr.mxu0 0.0
        %3892 = vmatpush1.xpose.msra.mxu0 0.0
        %3893 = vmatprep.subr.mxu0 0.0
        %3894 = vmatpush1.xpose.msra.mxu0 0.0
        %3895 = vmatprep.mubr.f32.mxu0 0.0
        %v3896 = vand.u32 %v3452, 4294901760
        %3897 = vmatmul.mubr.f32.gmra.mrb[0].mxu0 %v3896
        %v3898 = vpop.f32.mrb[0].mxu0
        %v3899 = vadd.f32 %v3827, %v3898
        %v3900 = vpop.f32.mrb[0].mxu0
        %3901 = vdwg.mxu0
        %v3902 = vmul.f32 %v3445, 0.25
        %v3903 = vmul.f32 %v3899, 0.25
        %v3904 = vsel %vm2063, %v3902, -1e+09
        %v3905 = vsel %vm2064, %v3903, -1e+09
        %v3906 = vsel %vm2067, %v3904, -inf
        %3907 = vmax.xlane.f32.xlu0 %v3906
        %v3908 = vpop.xlane.xlu0 %3907
        %v3909 = vsel %vm2067, %v3905, -inf
        %3910 = vmax.xlane.f32.xlu0 %v3909
        %v3911 = vpop.xlane.xlu0 %3910
        %v3912 = vsub.f32 %v3904, %v3908
        %v3913 = vsub.f32 %v3905, %v3911
        %v3914 = vmul.f32 %v3912, 1.442695
        %v3915 = vpow.pop %v3914
        %v3916 = vmul.f32 %v3913, 1.442695
        %v3917 = vpow.pop %v3916
        %v3918 = vsel %vm2067, %v3915, 0.0
        %3919 = vadd.xlane.f32.xlu0 %v3918
        %v3920 = vpop.xlane.xlu0 %3919
        %v3921 = vsel %vm2067, %v3917, 0.0
        %3922 = vadd.xlane.f32.xlu0 %v3921
        %v3923 = vpop.xlane.xlu0 %3922
        %v3924 = vrcp.pop %v3920
        %v3925 = vmul.f32 %v3915, %v3924
        %v3926 = vrcp.pop %v3923
        %v3927 = vmul.f32 %v3917, %v3926
        %3928 = vrot.lane.b32.xlu0 %v1127, 48
        %v3929 = vpop.permute.xlu0 %3928
        %v3932 = vsel %vm2067, %v3925, 0
        %3934 = vmatprep.subr.mxu0 0.0
        %v3935 = vand.u32 %v3929, 4294901760
        %3936 = vmatpush1.msra.mxu0 %v3935
        %3937 = vmatprep.subr.mxu0 0.0
        %3938 = vmatpush1.msra.mxu0 0.0
        %3939 = vmatprep.subr.mxu0 0.0
        %3940 = vmatpush1.msra.mxu0 0.0
        %3941 = vmatprep.subr.mxu0 0.0
        %3942 = vmatpush1.msra.mxu0 0.0
        %3943 = vmatprep.subr.mxu0 0.0
        %3944 = vmatpush1.msra.mxu0 0.0
        %3945 = vmatprep.subr.mxu0 0.0
        %3946 = vmatpush1.msra.mxu0 0.0
        %3947 = vmatprep.subr.mxu0 0.0
        %3948 = vmatpush1.msra.mxu0 0.0
        %3949 = vmatprep.subr.mxu0 0.0
        %3950 = vmatpush1.msra.mxu0 0.0
        %3951 = vmatprep.subr.mxu0 0.0
        %3952 = vmatpush1.msra.mxu0 0.0
        %3953 = vmatprep.subr.mxu0 0.0
        %3954 = vmatpush1.msra.mxu0 0.0
        %3955 = vmatprep.subr.mxu0 0.0
        %3956 = vmatpush1.msra.mxu0 0.0
        %3957 = vmatprep.subr.mxu0 0.0
        %3958 = vmatpush1.msra.mxu0 0.0
        %3959 = vmatprep.subr.mxu0 0.0
        %3960 = vmatpush1.msra.mxu0 0.0
        %3961 = vmatprep.subr.mxu0 0.0
        %3962 = vmatpush1.msra.mxu0 0.0
        %3963 = vmatprep.subr.mxu0 0.0
        %3964 = vmatpush1.msra.mxu0 0.0
        %3965 = vmatprep.subr.mxu0 0.0
        %3966 = vmatpush1.msra.mxu0 0.0
        %3967 = vmatprep.subr.mxu0 0.0
        %3968 = vmatpush1.msra.mxu0 0.0
        %3969 = vmatprep.subr.mxu0 0.0
        %3970 = vmatpush1.msra.mxu0 0.0
        %3971 = vmatprep.subr.mxu0 0.0
        %3972 = vmatpush1.msra.mxu0 0.0
        %3973 = vmatprep.subr.mxu0 0.0
        %3974 = vmatpush1.msra.mxu0 0.0
        %3975 = vmatprep.subr.mxu0 0.0
        %3976 = vmatpush1.msra.mxu0 0.0
        %3977 = vmatprep.subr.mxu0 0.0
        %3978 = vmatpush1.msra.mxu0 0.0
        %3979 = vmatprep.subr.mxu0 0.0
        %3980 = vmatpush1.msra.mxu0 0.0
        %3981 = vmatprep.subr.mxu0 0.0
        %3982 = vmatpush1.msra.mxu0 0.0
        %3983 = vmatprep.subr.mxu0 0.0
        %3984 = vmatpush1.msra.mxu0 0.0
        %3985 = vmatprep.subr.mxu0 0.0
        %3986 = vmatpush1.msra.mxu0 0.0
        %3987 = vmatprep.subr.mxu0 0.0
        %3988 = vmatpush1.msra.mxu0 0.0
        %3989 = vmatprep.subr.mxu0 0.0
        %3990 = vmatpush1.msra.mxu0 0.0
        %3991 = vmatprep.subr.mxu0 0.0
        %3992 = vmatpush1.msra.mxu0 0.0
        %3993 = vmatprep.subr.mxu0 0.0
        %3994 = vmatpush1.msra.mxu0 0.0
        %3995 = vmatprep.subr.mxu0 0.0
        %3996 = vmatpush1.msra.mxu0 0.0
        %3997 = vmatprep.subr.mxu0 0.0
        %3998 = vmatpush1.msra.mxu0 0.0
        %3999 = vmatprep.mubr.f32.mxu0 0.0
        %v4000 = vand.u32 %v3932, 4294901760
        %v4001 = vsub.f32 %v3932, %v4000
        %v4002 = vand.u32 %v4001, 4294901760
        %v4003 = vsub.f32 %v4001, %v4002
        %v4004 = vand.u32 %v4003, 4294901760
        %4005 = vmatmul.mubr.f32.gmra.mrb[0].mxu0 %v4004
        %v4006 = vpop.f32.mrb[0].mxu0
        %v4007 = vadd.f32 0.0, %v4006
        %v4008 = vpop.f32.mrb[0].mxu0
        %4009 = vdwg.mxu0
        %4010 = vmatprep.subr.mxu0 0.0
        %v4011 = vand.u32 %v3929, 4294901760
        %v4012 = vsub.f32 %v3929, %v4011
        %v4013 = vand.u32 %v4012, 4294901760
        %v4014 = vsub.f32 %v4012, %v4013
        %v4015 = vand.u32 %v4014, 4294901760
        %4016 = vmatpush1.msra.mxu0 %v4015
        %4017 = vmatprep.subr.mxu0 0.0
        %4018 = vmatpush1.msra.mxu0 0.0
        %4019 = vmatprep.subr.mxu0 0.0
        %4020 = vmatpush1.msra.mxu0 0.0
        %4021 = vmatprep.subr.mxu0 0.0
        %4022 = vmatpush1.msra.mxu0 0.0
        %4023 = vmatprep.subr.mxu0 0.0
        %4024 = vmatpush1.msra.mxu0 0.0
        %4025 = vmatprep.subr.mxu0 0.0
        %4026 = vmatpush1.msra.mxu0 0.0
        %4027 = vmatprep.subr.mxu0 0.0
        %4028 = vmatpush1.msra.mxu0 0.0
        %4029 = vmatprep.subr.mxu0 0.0
        %4030 = vmatpush1.msra.mxu0 0.0
        %4031 = vmatprep.subr.mxu0 0.0
        %4032 = vmatpush1.msra.mxu0 0.0
        %4033 = vmatprep.subr.mxu0 0.0
        %4034 = vmatpush1.msra.mxu0 0.0
        %4035 = vmatprep.subr.mxu0 0.0
        %4036 = vmatpush1.msra.mxu0 0.0
        %4037 = vmatprep.subr.mxu0 0.0
        %4038 = vmatpush1.msra.mxu0 0.0
        %4039 = vmatprep.subr.mxu0 0.0
        %4040 = vmatpush1.msra.mxu0 0.0
        %4041 = vmatprep.subr.mxu0 0.0
        %4042 = vmatpush1.msra.mxu0 0.0
        %4043 = vmatprep.subr.mxu0 0.0
        %4044 = vmatpush1.msra.mxu0 0.0
        %4045 = vmatprep.subr.mxu0 0.0
        %4046 = vmatpush1.msra.mxu0 0.0
        %4047 = vmatprep.subr.mxu0 0.0
        %4048 = vmatpush1.msra.mxu0 0.0
        %4049 = vmatprep.subr.mxu0 0.0
        %4050 = vmatpush1.msra.mxu0 0.0
        %4051 = vmatprep.subr.mxu0 0.0
        %4052 = vmatpush1.msra.mxu0 0.0
        %4053 = vmatprep.subr.mxu0 0.0
        %4054 = vmatpush1.msra.mxu0 0.0
        %4055 = vmatprep.subr.mxu0 0.0
        %4056 = vmatpush1.msra.mxu0 0.0
        %4057 = vmatprep.subr.mxu0 0.0
        %4058 = vmatpush1.msra.mxu0 0.0
        %4059 = vmatprep.subr.mxu0 0.0
        %4060 = vmatpush1.msra.mxu0 0.0
        %4061 = vmatprep.subr.mxu0 0.0
        %4062 = vmatpush1.msra.mxu0 0.0
        %4063 = vmatprep.subr.mxu0 0.0
        %4064 = vmatpush1.msra.mxu0 0.0
        %4065 = vmatprep.subr.mxu0 0.0
        %4066 = vmatpush1.msra.mxu0 0.0
        %4067 = vmatprep.subr.mxu0 0.0
        %4068 = vmatpush1.msra.mxu0 0.0
        %4069 = vmatprep.subr.mxu0 0.0
        %4070 = vmatpush1.msra.mxu0 0.0
        %4071 = vmatprep.subr.mxu0 0.0
        %4072 = vmatpush1.msra.mxu0 0.0
        %4073 = vmatprep.subr.mxu0 0.0
        %4074 = vmatpush1.msra.mxu0 0.0
        %4075 = vmatprep.subr.mxu0 0.0
        %4076 = vmatpush1.msra.mxu0 0.0
        %4077 = vmatprep.subr.mxu0 0.0
        %4078 = vmatpush1.msra.mxu0 0.0
        %4079 = vmatprep.mubr.f32.mxu0 0.0
        %v4080 = vand.u32 %v3932, 4294901760
        %4081 = vmatmul.mubr.f32.gmra.mrb[0].mxu0 %v4080
        %v4082 = vpop.f32.mrb[0].mxu0
        %v4083 = vadd.f32 %v4007, %v4082
        %v4084 = vpop.f32.mrb[0].mxu0
        %4085 = vdwg.mxu0
        %4086 = vmatprep.subr.mxu0 0.0
        %v4087 = vand.u32 %v3929, 4294901760
        %v4088 = vsub.f32 %v3929, %v4087
        %4089 = vmatpush1.msra.mxu0 %v4088
        %4090 = vmatprep.subr.mxu0 0.0
        %4091 = vmatpush1.msra.mxu0 0.0
        %4092 = vmatprep.subr.mxu0 0.0
        %4093 = vmatpush1.msra.mxu0 0.0
        %4094 = vmatprep.subr.mxu0 0.0
        %4095 = vmatpush1.msra.mxu0 0.0
        %4096 = vmatprep.subr.mxu0 0.0
        %4097 = vmatpush1.msra.mxu0 0.0
        %4098 = vmatprep.subr.mxu0 0.0
        %4099 = vmatpush1.msra.mxu0 0.0
        %4100 = vmatprep.subr.mxu0 0.0
        %4101 = vmatpush1.msra.mxu0 0.0
        %4102 = vmatprep.subr.mxu0 0.0
        %4103 = vmatpush1.msra.mxu0 0.0
        %4104 = vmatprep.subr.mxu0 0.0
        %4105 = vmatpush1.msra.mxu0 0.0
        %4106 = vmatprep.subr.mxu0 0.0
        %4107 = vmatpush1.msra.mxu0 0.0
        %4108 = vmatprep.subr.mxu0 0.0
        %4109 = vmatpush1.msra.mxu0 0.0
        %4110 = vmatprep.subr.mxu0 0.0
        %4111 = vmatpush1.msra.mxu0 0.0
        %4112 = vmatprep.subr.mxu0 0.0
        %4113 = vmatpush1.msra.mxu0 0.0
        %4114 = vmatprep.subr.mxu0 0.0
        %4115 = vmatpush1.msra.mxu0 0.0
        %4116 = vmatprep.subr.mxu0 0.0
        %4117 = vmatpush1.msra.mxu0 0.0
        %4118 = vmatprep.subr.mxu0 0.0
        %4119 = vmatpush1.msra.mxu0 0.0
        %4120 = vmatprep.subr.mxu0 0.0
        %4121 = vmatpush1.msra.mxu0 0.0
        %4122 = vmatprep.subr.mxu0 0.0
        %4123 = vmatpush1.msra.mxu0 0.0
        %4124 = vmatprep.subr.mxu0 0.0
        %4125 = vmatpush1.msra.mxu0 0.0
        %4126 = vmatprep.subr.mxu0 0.0
        %4127 = vmatpush1.msra.mxu0 0.0
        %4128 = vmatprep.subr.mxu0 0.0
        %4129 = vmatpush1.msra.mxu0 0.0
        %4130 = vmatprep.subr.mxu0 0.0
        %4131 = vmatpush1.msra.mxu0 0.0
        %4132 = vmatprep.subr.mxu0 0.0
        %4133 = vmatpush1.msra.mxu0 0.0
        %4134 = vmatprep.subr.mxu0 0.0
        %4135 = vmatpush1.msra.mxu0 0.0
        %4136 = vmatprep.subr.mxu0 0.0
        %4137 = vmatpush1.msra.mxu0 0.0
        %4138 = vmatprep.subr.mxu0 0.0
        %4139 = vmatpush1.msra.mxu0 0.0
        %4140 = vmatprep.subr.mxu0 0.0
        %4141 = vmatpush1.msra.mxu0 0.0
        %4142 = vmatprep.subr.mxu0 0.0
        %4143 = vmatpush1.msra.mxu0 0.0
        %4144 = vmatprep.subr.mxu0 0.0
        %4145 = vmatpush1.msra.mxu0 0.0
        %4146 = vmatprep.subr.mxu0 0.0
        %4147 = vmatpush1.msra.mxu0 0.0
        %4148 = vmatprep.subr.mxu0 0.0
        %4149 = vmatpush1.msra.mxu0 0.0
        %4150 = vmatprep.subr.mxu0 0.0
        %4151 = vmatpush1.msra.mxu0 0.0
        %4152 = vmatprep.mubr.f32.mxu0 0.0
        %v4153 = vand.u32 %v3932, 4294901760
        %v4154 = vsub.f32 %v3932, %v4153
        %4155 = vmatmul.mubr.f32.gmra.mrb[0].mxu0 %v4154
        %v4156 = vpop.f32.mrb[0].mxu0
        %v4157 = vadd.f32 %v4083, %v4156
        %v4158 = vpop.f32.mrb[0].mxu0
        %4159 = vdwg.mxu0
        %4160 = vmatprep.subr.mxu0 0.0
        %v4161 = vand.u32 %v3929, 4294901760
        %4162 = vmatpush1.msra.mxu0 %v4161
        %4163 = vmatprep.subr.mxu0 0.0
        %4164 = vmatpush1.msra.mxu0 0.0
        %4165 = vmatprep.subr.mxu0 0.0
        %4166 = vmatpush1.msra.mxu0 0.0
        %4167 = vmatprep.subr.mxu0 0.0
        %4168 = vmatpush1.msra.mxu0 0.0
        %4169 = vmatprep.subr.mxu0 0.0
        %4170 = vmatpush1.msra.mxu0 0.0
        %4171 = vmatprep.subr.mxu0 0.0
        %4172 = vmatpush1.msra.mxu0 0.0
        %4173 = vmatprep.subr.mxu0 0.0
        %4174 = vmatpush1.msra.mxu0 0.0
        %4175 = vmatprep.subr.mxu0 0.0
        %4176 = vmatpush1.msra.mxu0 0.0
        %4177 = vmatprep.subr.mxu0 0.0
        %4178 = vmatpush1.msra.mxu0 0.0
        %4179 = vmatprep.subr.mxu0 0.0
        %4180 = vmatpush1.msra.mxu0 0.0
        %4181 = vmatprep.subr.mxu0 0.0
        %4182 = vmatpush1.msra.mxu0 0.0
        %4183 = vmatprep.subr.mxu0 0.0
        %4184 = vmatpush1.msra.mxu0 0.0
        %4185 = vmatprep.subr.mxu0 0.0
        %4186 = vmatpush1.msra.mxu0 0.0
        %4187 = vmatprep.subr.mxu0 0.0
        %4188 = vmatpush1.msra.mxu0 0.0
        %4189 = vmatprep.subr.mxu0 0.0
        %4190 = vmatpush1.msra.mxu0 0.0
        %4191 = vmatprep.subr.mxu0 0.0
        %4192 = vmatpush1.msra.mxu0 0.0
        %4193 = vmatprep.subr.mxu0 0.0
        %4194 = vmatpush1.msra.mxu0 0.0
        %4195 = vmatprep.subr.mxu0 0.0
        %4196 = vmatpush1.msra.mxu0 0.0
        %4197 = vmatprep.subr.mxu0 0.0
        %4198 = vmatpush1.msra.mxu0 0.0
        %4199 = vmatprep.subr.mxu0 0.0
        %4200 = vmatpush1.msra.mxu0 0.0
        %4201 = vmatprep.subr.mxu0 0.0
        %4202 = vmatpush1.msra.mxu0 0.0
        %4203 = vmatprep.subr.mxu0 0.0
        %4204 = vmatpush1.msra.mxu0 0.0
        %4205 = vmatprep.subr.mxu0 0.0
        %4206 = vmatpush1.msra.mxu0 0.0
        %4207 = vmatprep.subr.mxu0 0.0
        %4208 = vmatpush1.msra.mxu0 0.0
        %4209 = vmatprep.subr.mxu0 0.0
        %4210 = vmatpush1.msra.mxu0 0.0
        %4211 = vmatprep.subr.mxu0 0.0
        %4212 = vmatpush1.msra.mxu0 0.0
        %4213 = vmatprep.subr.mxu0 0.0
        %4214 = vmatpush1.msra.mxu0 0.0
        %4215 = vmatprep.subr.mxu0 0.0
        %4216 = vmatpush1.msra.mxu0 0.0
        %4217 = vmatprep.subr.mxu0 0.0
        %4218 = vmatpush1.msra.mxu0 0.0
        %4219 = vmatprep.subr.mxu0 0.0
        %4220 = vmatpush1.msra.mxu0 0.0
        %4221 = vmatprep.subr.mxu0 0.0
        %4222 = vmatpush1.msra.mxu0 0.0
        %4223 = vmatprep.subr.mxu0 0.0
        %4224 = vmatpush1.msra.mxu0 0.0
        %4225 = vmatprep.mubr.f32.mxu0 0.0
        %v4226 = vand.u32 %v3932, 4294901760
        %v4227 = vsub.f32 %v3932, %v4226
        %v4228 = vand.u32 %v4227, 4294901760
        %4229 = vmatmul.mubr.f32.gmra.mrb[0].mxu0 %v4228
        %v4230 = vpop.f32.mrb[0].mxu0
        %v4231 = vadd.f32 %v4157, %v4230
        %v4232 = vpop.f32.mrb[0].mxu0
        %4233 = vdwg.mxu0
        %4234 = vmatprep.subr.mxu0 0.0
        %v4235 = vand.u32 %v3929, 4294901760
        %v4236 = vsub.f32 %v3929, %v4235
        %v4237 = vand.u32 %v4236, 4294901760
        %4238 = vmatpush1.msra.mxu0 %v4237
        %4239 = vmatprep.subr.mxu0 0.0
        %4240 = vmatpush1.msra.mxu0 0.0
        %4241 = vmatprep.subr.mxu0 0.0
        %4242 = vmatpush1.msra.mxu0 0.0
        %4243 = vmatprep.subr.mxu0 0.0
        %4244 = vmatpush1.msra.mxu0 0.0
        %4245 = vmatprep.subr.mxu0 0.0
        %4246 = vmatpush1.msra.mxu0 0.0
        %4247 = vmatprep.subr.mxu0 0.0
        %4248 = vmatpush1.msra.mxu0 0.0
        %4249 = vmatprep.subr.mxu0 0.0
        %4250 = vmatpush1.msra.mxu0 0.0
        %4251 = vmatprep.subr.mxu0 0.0
        %4252 = vmatpush1.msra.mxu0 0.0
        %4253 = vmatprep.subr.mxu0 0.0
        %4254 = vmatpush1.msra.mxu0 0.0
        %4255 = vmatprep.subr.mxu0 0.0
        %4256 = vmatpush1.msra.mxu0 0.0
        %4257 = vmatprep.subr.mxu0 0.0
        %4258 = vmatpush1.msra.mxu0 0.0
        %4259 = vmatprep.subr.mxu0 0.0
        %4260 = vmatpush1.msra.mxu0 0.0
        %4261 = vmatprep.subr.mxu0 0.0
        %4262 = vmatpush1.msra.mxu0 0.0
        %4263 = vmatprep.subr.mxu0 0.0
        %4264 = vmatpush1.msra.mxu0 0.0
        %4265 = vmatprep.subr.mxu0 0.0
        %4266 = vmatpush1.msra.mxu0 0.0
        %4267 = vmatprep.subr.mxu0 0.0
        %4268 = vmatpush1.msra.mxu0 0.0
        %4269 = vmatprep.subr.mxu0 0.0
        %4270 = vmatpush1.msra.mxu0 0.0
        %4271 = vmatprep.subr.mxu0 0.0
        %4272 = vmatpush1.msra.mxu0 0.0
        %4273 = vmatprep.subr.mxu0 0.0
        %4274 = vmatpush1.msra.mxu0 0.0
        %4275 = vmatprep.subr.mxu0 0.0
        %4276 = vmatpush1.msra.mxu0 0.0
        %4277 = vmatprep.subr.mxu0 0.0
        %4278 = vmatpush1.msra.mxu0 0.0
        %4279 = vmatprep.subr.mxu0 0.0
        %4280 = vmatpush1.msra.mxu0 0.0
        %4281 = vmatprep.subr.mxu0 0.0
        %4282 = vmatpush1.msra.mxu0 0.0
        %4283 = vmatprep.subr.mxu0 0.0
        %4284 = vmatpush1.msra.mxu0 0.0
        %4285 = vmatprep.subr.mxu0 0.0
        %4286 = vmatpush1.msra.mxu0 0.0
        %4287 = vmatprep.subr.mxu0 0.0
        %4288 = vmatpush1.msra.mxu0 0.0
        %4289 = vmatprep.subr.mxu0 0.0
        %4290 = vmatpush1.msra.mxu0 0.0
        %4291 = vmatprep.subr.mxu0 0.0
        %4292 = vmatpush1.msra.mxu0 0.0
        %4293 = vmatprep.subr.mxu0 0.0
        %4294 = vmatpush1.msra.mxu0 0.0
        %4295 = vmatprep.subr.mxu0 0.0
        %4296 = vmatpush1.msra.mxu0 0.0
        %4297 = vmatprep.subr.mxu0 0.0
        %4298 = vmatpush1.msra.mxu0 0.0
        %4299 = vmatprep.subr.mxu0 0.0
        %4300 = vmatpush1.msra.mxu0 0.0
        %4301 = vmatprep.mubr.f32.mxu0 0.0
        %v4302 = vand.u32 %v3932, 4294901760
        %4303 = vmatmul.mubr.f32.gmra.mrb[0].mxu0 %v4302
        %v4304 = vpop.f32.mrb[0].mxu0
        %v4305 = vadd.f32 %v4231, %v4304
        %v4306 = vpop.f32.mrb[0].mxu0
        %4307 = vdwg.mxu0
        %4308 = vmatprep.subr.mxu0 0.0
        %v4309 = vand.u32 %v3929, 4294901760
        %4310 = vmatpush1.msra.mxu0 %v4309
        %4311 = vmatprep.subr.mxu0 0.0
        %4312 = vmatpush1.msra.mxu0 0.0
        %4313 = vmatprep.subr.mxu0 0.0
        %4314 = vmatpush1.msra.mxu0 0.0
        %4315 = vmatprep.subr.mxu0 0.0
        %4316 = vmatpush1.msra.mxu0 0.0
        %4317 = vmatprep.subr.mxu0 0.0
        %4318 = vmatpush1.msra.mxu0 0.0
        %4319 = vmatprep.subr.mxu0 0.0
        %4320 = vmatpush1.msra.mxu0 0.0
        %4321 = vmatprep.subr.mxu0 0.0
        %4322 = vmatpush1.msra.mxu0 0.0
        %4323 = vmatprep.subr.mxu0 0.0
        %4324 = vmatpush1.msra.mxu0 0.0
        %4325 = vmatprep.subr.mxu0 0.0
        %4326 = vmatpush1.msra.mxu0 0.0
        %4327 = vmatprep.subr.mxu0 0.0
        %4328 = vmatpush1.msra.mxu0 0.0
        %4329 = vmatprep.subr.mxu0 0.0
        %4330 = vmatpush1.msra.mxu0 0.0
        %4331 = vmatprep.subr.mxu0 0.0
        %4332 = vmatpush1.msra.mxu0 0.0
        %4333 = vmatprep.subr.mxu0 0.0
        %4334 = vmatpush1.msra.mxu0 0.0
        %4335 = vmatprep.subr.mxu0 0.0
        %4336 = vmatpush1.msra.mxu0 0.0
        %4337 = vmatprep.subr.mxu0 0.0
        %4338 = vmatpush1.msra.mxu0 0.0
        %4339 = vmatprep.subr.mxu0 0.0
        %4340 = vmatpush1.msra.mxu0 0.0
        %4341 = vmatprep.subr.mxu0 0.0
        %4342 = vmatpush1.msra.mxu0 0.0
        %4343 = vmatprep.subr.mxu0 0.0
        %4344 = vmatpush1.msra.mxu0 0.0
        %4345 = vmatprep.subr.mxu0 0.0
        %4346 = vmatpush1.msra.mxu0 0.0
        %4347 = vmatprep.subr.mxu0 0.0
        %4348 = vmatpush1.msra.mxu0 0.0
        %4349 = vmatprep.subr.mxu0 0.0
        %4350 = vmatpush1.msra.mxu0 0.0
        %4351 = vmatprep.subr.mxu0 0.0
        %4352 = vmatpush1.msra.mxu0 0.0
        %4353 = vmatprep.subr.mxu0 0.0
        %4354 = vmatpush1.msra.mxu0 0.0
        %4355 = vmatprep.subr.mxu0 0.0
        %4356 = vmatpush1.msra.mxu0 0.0
        %4357 = vmatprep.subr.mxu0 0.0
        %4358 = vmatpush1.msra.mxu0 0.0
        %4359 = vmatprep.subr.mxu0 0.0
        %4360 = vmatpush1.msra.mxu0 0.0
        %4361 = vmatprep.subr.mxu0 0.0
        %4362 = vmatpush1.msra.mxu0 0.0
        %4363 = vmatprep.subr.mxu0 0.0
        %4364 = vmatpush1.msra.mxu0 0.0
        %4365 = vmatprep.subr.mxu0 0.0
        %4366 = vmatpush1.msra.mxu0 0.0
        %4367 = vmatprep.subr.mxu0 0.0
        %4368 = vmatpush1.msra.mxu0 0.0
        %4369 = vmatprep.subr.mxu0 0.0
        %4370 = vmatpush1.msra.mxu0 0.0
        %4371 = vmatprep.subr.mxu0 0.0
        %4372 = vmatpush1.msra.mxu0 0.0
        %4373 = vmatprep.mubr.f32.mxu0 0.0
        %v4374 = vand.u32 %v3932, 4294901760
        %4375 = vmatmul.mubr.f32.gmra.mrb[0].mxu0 %v4374
        %v4376 = vpop.f32.mrb[0].mxu0
        %v4377 = vadd.f32 %v4305, %v4376
        %v4378 = vpop.f32.mrb[0].mxu0
        %4379 = vdwg.mxu0
        %4380 = vrot.lane.b32.xlu0 %v1139, 48
        %v4381 = vpop.permute.xlu0 %4380
        %v4384 = vsel %vm2067, %v3927, 0
        %4386 = vmatprep.subr.mxu0 0.0
        %v4387 = vand.u32 %v4381, 4294901760
        %4388 = vmatpush1.msra.mxu0 %v4387
        %4389 = vmatprep.subr.mxu0 0.0
        %4390 = vmatpush1.msra.mxu0 0.0
        %4391 = vmatprep.subr.mxu0 0.0
        %4392 = vmatpush1.msra.mxu0 0.0
        %4393 = vmatprep.subr.mxu0 0.0
        %4394 = vmatpush1.msra.mxu0 0.0
        %4395 = vmatprep.subr.mxu0 0.0
        %4396 = vmatpush1.msra.mxu0 0.0
        %4397 = vmatprep.subr.mxu0 0.0
        %4398 = vmatpush1.msra.mxu0 0.0
        %4399 = vmatprep.subr.mxu0 0.0
        %4400 = vmatpush1.msra.mxu0 0.0
        %4401 = vmatprep.subr.mxu0 0.0
        %4402 = vmatpush1.msra.mxu0 0.0
        %4403 = vmatprep.subr.mxu0 0.0
        %4404 = vmatpush1.msra.mxu0 0.0
        %4405 = vmatprep.subr.mxu0 0.0
        %4406 = vmatpush1.msra.mxu0 0.0
        %4407 = vmatprep.subr.mxu0 0.0
        %4408 = vmatpush1.msra.mxu0 0.0
        %4409 = vmatprep.subr.mxu0 0.0
        %4410 = vmatpush1.msra.mxu0 0.0
        %4411 = vmatprep.subr.mxu0 0.0
        %4412 = vmatpush1.msra.mxu0 0.0
        %4413 = vmatprep.subr.mxu0 0.0
        %4414 = vmatpush1.msra.mxu0 0.0
        %4415 = vmatprep.subr.mxu0 0.0
        %4416 = vmatpush1.msra.mxu0 0.0
        %4417 = vmatprep.subr.mxu0 0.0
        %4418 = vmatpush1.msra.mxu0 0.0
        %4419 = vmatprep.subr.mxu0 0.0
        %4420 = vmatpush1.msra.mxu0 0.0
        %4421 = vmatprep.subr.mxu0 0.0
        %4422 = vmatpush1.msra.mxu0 0.0
        %4423 = vmatprep.subr.mxu0 0.0
        %4424 = vmatpush1.msra.mxu0 0.0
        %4425 = vmatprep.subr.mxu0 0.0
        %4426 = vmatpush1.msra.mxu0 0.0
        %4427 = vmatprep.subr.mxu0 0.0
        %4428 = vmatpush1.msra.mxu0 0.0
        %4429 = vmatprep.subr.mxu0 0.0
        %4430 = vmatpush1.msra.mxu0 0.0
        %4431 = vmatprep.subr.mxu0 0.0
        %4432 = vmatpush1.msra.mxu0 0.0
        %4433 = vmatprep.subr.mxu0 0.0
        %4434 = vmatpush1.msra.mxu0 0.0
        %4435 = vmatprep.subr.mxu0 0.0
        %4436 = vmatpush1.msra.mxu0 0.0
        %4437 = vmatprep.subr.mxu0 0.0
        %4438 = vmatpush1.msra.mxu0 0.0
        %4439 = vmatprep.subr.mxu0 0.0
        %4440 = vmatpush1.msra.mxu0 0.0
        %4441 = vmatprep.subr.mxu0 0.0
        %4442 = vmatpush1.msra.mxu0 0.0
        %4443 = vmatprep.subr.mxu0 0.0
        %4444 = vmatpush1.msra.mxu0 0.0
        %4445 = vmatprep.subr.mxu0 0.0
        %4446 = vmatpush1.msra.mxu0 0.0
        %4447 = vmatprep.subr.mxu0 0.0
        %4448 = vmatpush1.msra.mxu0 0.0
        %4449 = vmatprep.subr.mxu0 0.0
        %4450 = vmatpush1.msra.mxu0 0.0
        %4451 = vmatprep.mubr.f32.mxu0 0.0
        %v4452 = vand.u32 %v4384, 4294901760
        %v4453 = vsub.f32 %v4384, %v4452
        %v4454 = vand.u32 %v4453, 4294901760
        %v4455 = vsub.f32 %v4453, %v4454
        %v4456 = vand.u32 %v4455, 4294901760
        %4457 = vmatmul.mubr.f32.gmra.mrb[0].mxu0 %v4456
        %v4458 = vpop.f32.mrb[0].mxu0
        %v4459 = vadd.f32 0.0, %v4458
        %v4460 = vpop.f32.mrb[0].mxu0
        %4461 = vdwg.mxu0
        %4462 = vmatprep.subr.mxu0 0.0
        %v4463 = vand.u32 %v4381, 4294901760
        %v4464 = vsub.f32 %v4381, %v4463
        %v4465 = vand.u32 %v4464, 4294901760
        %v4466 = vsub.f32 %v4464, %v4465
        %v4467 = vand.u32 %v4466, 4294901760
        %4468 = vmatpush1.msra.mxu0 %v4467
        %4469 = vmatprep.subr.mxu0 0.0
        %4470 = vmatpush1.msra.mxu0 0.0
        %4471 = vmatprep.subr.mxu0 0.0
        %4472 = vmatpush1.msra.mxu0 0.0
        %4473 = vmatprep.subr.mxu0 0.0
        %4474 = vmatpush1.msra.mxu0 0.0
        %4475 = vmatprep.subr.mxu0 0.0
        %4476 = vmatpush1.msra.mxu0 0.0
        %4477 = vmatprep.subr.mxu0 0.0
        %4478 = vmatpush1.msra.mxu0 0.0
        %4479 = vmatprep.subr.mxu0 0.0
        %4480 = vmatpush1.msra.mxu0 0.0
        %4481 = vmatprep.subr.mxu0 0.0
        %4482 = vmatpush1.msra.mxu0 0.0
        %4483 = vmatprep.subr.mxu0 0.0
        %4484 = vmatpush1.msra.mxu0 0.0
        %4485 = vmatprep.subr.mxu0 0.0
        %4486 = vmatpush1.msra.mxu0 0.0
        %4487 = vmatprep.subr.mxu0 0.0
        %4488 = vmatpush1.msra.mxu0 0.0
        %4489 = vmatprep.subr.mxu0 0.0
        %4490 = vmatpush1.msra.mxu0 0.0
        %4491 = vmatprep.subr.mxu0 0.0
        %4492 = vmatpush1.msra.mxu0 0.0
        %4493 = vmatprep.subr.mxu0 0.0
        %4494 = vmatpush1.msra.mxu0 0.0
        %4495 = vmatprep.subr.mxu0 0.0
        %4496 = vmatpush1.msra.mxu0 0.0
        %4497 = vmatprep.subr.mxu0 0.0
        %4498 = vmatpush1.msra.mxu0 0.0
        %4499 = vmatprep.subr.mxu0 0.0
        %4500 = vmatpush1.msra.mxu0 0.0
        %4501 = vmatprep.subr.mxu0 0.0
        %4502 = vmatpush1.msra.mxu0 0.0
        %4503 = vmatprep.subr.mxu0 0.0
        %4504 = vmatpush1.msra.mxu0 0.0
        %4505 = vmatprep.subr.mxu0 0.0
        %4506 = vmatpush1.msra.mxu0 0.0
        %4507 = vmatprep.subr.mxu0 0.0
        %4508 = vmatpush1.msra.mxu0 0.0
        %4509 = vmatprep.subr.mxu0 0.0
        %4510 = vmatpush1.msra.mxu0 0.0
        %4511 = vmatprep.subr.mxu0 0.0
        %4512 = vmatpush1.msra.mxu0 0.0
        %4513 = vmatprep.subr.mxu0 0.0
        %4514 = vmatpush1.msra.mxu0 0.0
        %4515 = vmatprep.subr.mxu0 0.0
        %4516 = vmatpush1.msra.mxu0 0.0
        %4517 = vmatprep.subr.mxu0 0.0
        %4518 = vmatpush1.msra.mxu0 0.0
        %4519 = vmatprep.subr.mxu0 0.0
        %4520 = vmatpush1.msra.mxu0 0.0
        %4521 = vmatprep.subr.mxu0 0.0
        %4522 = vmatpush1.msra.mxu0 0.0
        %4523 = vmatprep.subr.mxu0 0.0
        %4524 = vmatpush1.msra.mxu0 0.0
        %4525 = vmatprep.subr.mxu0 0.0
        %4526 = vmatpush1.msra.mxu0 0.0
        %4527 = vmatprep.subr.mxu0 0.0
        %4528 = vmatpush1.msra.mxu0 0.0
        %4529 = vmatprep.subr.mxu0 0.0
        %4530 = vmatpush1.msra.mxu0 0.0
        %4531 = vmatprep.mubr.f32.mxu0 0.0
        %v4532 = vand.u32 %v4384, 4294901760
        %4533 = vmatmul.mubr.f32.gmra.mrb[0].mxu0 %v4532
        %v4534 = vpop.f32.mrb[0].mxu0
        %v4535 = vadd.f32 %v4459, %v4534
        %v4536 = vpop.f32.mrb[0].mxu0
        %4537 = vdwg.mxu0
        %4538 = vmatprep.subr.mxu0 0.0
        %v4539 = vand.u32 %v4381, 4294901760
        %v4540 = vsub.f32 %v4381, %v4539
        %4541 = vmatpush1.msra.mxu0 %v4540
        %4542 = vmatprep.subr.mxu0 0.0
        %4543 = vmatpush1.msra.mxu0 0.0
        %4544 = vmatprep.subr.mxu0 0.0
        %4545 = vmatpush1.msra.mxu0 0.0
        %4546 = vmatprep.subr.mxu0 0.0
        %4547 = vmatpush1.msra.mxu0 0.0
        %4548 = vmatprep.subr.mxu0 0.0
        %4549 = vmatpush1.msra.mxu0 0.0
        %4550 = vmatprep.subr.mxu0 0.0
        %4551 = vmatpush1.msra.mxu0 0.0
        %4552 = vmatprep.subr.mxu0 0.0
        %4553 = vmatpush1.msra.mxu0 0.0
        %4554 = vmatprep.subr.mxu0 0.0
        %4555 = vmatpush1.msra.mxu0 0.0
        %4556 = vmatprep.subr.mxu0 0.0
        %4557 = vmatpush1.msra.mxu0 0.0
        %4558 = vmatprep.subr.mxu0 0.0
        %4559 = vmatpush1.msra.mxu0 0.0
        %4560 = vmatprep.subr.mxu0 0.0
        %4561 = vmatpush1.msra.mxu0 0.0
        %4562 = vmatprep.subr.mxu0 0.0
        %4563 = vmatpush1.msra.mxu0 0.0
        %4564 = vmatprep.subr.mxu0 0.0
        %4565 = vmatpush1.msra.mxu0 0.0
        %4566 = vmatprep.subr.mxu0 0.0
        %4567 = vmatpush1.msra.mxu0 0.0
        %4568 = vmatprep.subr.mxu0 0.0
        %4569 = vmatpush1.msra.mxu0 0.0
        %4570 = vmatprep.subr.mxu0 0.0
        %4571 = vmatpush1.msra.mxu0 0.0
        %4572 = vmatprep.subr.mxu0 0.0
        %4573 = vmatpush1.msra.mxu0 0.0
        %4574 = vmatprep.subr.mxu0 0.0
        %4575 = vmatpush1.msra.mxu0 0.0
        %4576 = vmatprep.subr.mxu0 0.0
        %4577 = vmatpush1.msra.mxu0 0.0
        %4578 = vmatprep.subr.mxu0 0.0
        %4579 = vmatpush1.msra.mxu0 0.0
        %4580 = vmatprep.subr.mxu0 0.0
        %4581 = vmatpush1.msra.mxu0 0.0
        %4582 = vmatprep.subr.mxu0 0.0
        %4583 = vmatpush1.msra.mxu0 0.0
        %4584 = vmatprep.subr.mxu0 0.0
        %4585 = vmatpush1.msra.mxu0 0.0
        %4586 = vmatprep.subr.mxu0 0.0
        %4587 = vmatpush1.msra.mxu0 0.0
        %4588 = vmatprep.subr.mxu0 0.0
        %4589 = vmatpush1.msra.mxu0 0.0
        %4590 = vmatprep.subr.mxu0 0.0
        %4591 = vmatpush1.msra.mxu0 0.0
        %4592 = vmatprep.subr.mxu0 0.0
        %4593 = vmatpush1.msra.mxu0 0.0
        %4594 = vmatprep.subr.mxu0 0.0
        %4595 = vmatpush1.msra.mxu0 0.0
        %4596 = vmatprep.subr.mxu0 0.0
        %4597 = vmatpush1.msra.mxu0 0.0
        %4598 = vmatprep.subr.mxu0 0.0
        %4599 = vmatpush1.msra.mxu0 0.0
        %4600 = vmatprep.subr.mxu0 0.0
        %4601 = vmatpush1.msra.mxu0 0.0
        %4602 = vmatprep.subr.mxu0 0.0
        %4603 = vmatpush1.msra.mxu0 0.0
        %4604 = vmatprep.mubr.f32.mxu0 0.0
        %v4605 = vand.u32 %v4384, 4294901760
        %v4606 = vsub.f32 %v4384, %v4605
        %4607 = vmatmul.mubr.f32.gmra.mrb[0].mxu0 %v4606
        %v4608 = vpop.f32.mrb[0].mxu0
        %v4609 = vadd.f32 %v4535, %v4608
        %v4610 = vpop.f32.mrb[0].mxu0
        %4611 = vdwg.mxu0
        %4612 = vmatprep.subr.mxu0 0.0
        %v4613 = vand.u32 %v4381, 4294901760
        %4614 = vmatpush1.msra.mxu0 %v4613
        %4615 = vmatprep.subr.mxu0 0.0
        %4616 = vmatpush1.msra.mxu0 0.0
        %4617 = vmatprep.subr.mxu0 0.0
        %4618 = vmatpush1.msra.mxu0 0.0
        %4619 = vmatprep.subr.mxu0 0.0
        %4620 = vmatpush1.msra.mxu0 0.0
        %4621 = vmatprep.subr.mxu0 0.0
        %4622 = vmatpush1.msra.mxu0 0.0
        %4623 = vmatprep.subr.mxu0 0.0
        %4624 = vmatpush1.msra.mxu0 0.0
        %4625 = vmatprep.subr.mxu0 0.0
        %4626 = vmatpush1.msra.mxu0 0.0
        %4627 = vmatprep.subr.mxu0 0.0
        %4628 = vmatpush1.msra.mxu0 0.0
        %4629 = vmatprep.subr.mxu0 0.0
        %4630 = vmatpush1.msra.mxu0 0.0
        %4631 = vmatprep.subr.mxu0 0.0
        %4632 = vmatpush1.msra.mxu0 0.0
        %4633 = vmatprep.subr.mxu0 0.0
        %4634 = vmatpush1.msra.mxu0 0.0
        %4635 = vmatprep.subr.mxu0 0.0
        %4636 = vmatpush1.msra.mxu0 0.0
        %4637 = vmatprep.subr.mxu0 0.0
        %4638 = vmatpush1.msra.mxu0 0.0
        %4639 = vmatprep.subr.mxu0 0.0
        %4640 = vmatpush1.msra.mxu0 0.0
        %4641 = vmatprep.subr.mxu0 0.0
        %4642 = vmatpush1.msra.mxu0 0.0
        %4643 = vmatprep.subr.mxu0 0.0
        %4644 = vmatpush1.msra.mxu0 0.0
        %4645 = vmatprep.subr.mxu0 0.0
        %4646 = vmatpush1.msra.mxu0 0.0
        %4647 = vmatprep.subr.mxu0 0.0
        %4648 = vmatpush1.msra.mxu0 0.0
        %4649 = vmatprep.subr.mxu0 0.0
        %4650 = vmatpush1.msra.mxu0 0.0
        %4651 = vmatprep.subr.mxu0 0.0
        %4652 = vmatpush1.msra.mxu0 0.0
        %4653 = vmatprep.subr.mxu0 0.0
        %4654 = vmatpush1.msra.mxu0 0.0
        %4655 = vmatprep.subr.mxu0 0.0
        %4656 = vmatpush1.msra.mxu0 0.0
        %4657 = vmatprep.subr.mxu0 0.0
        %4658 = vmatpush1.msra.mxu0 0.0
        %4659 = vmatprep.subr.mxu0 0.0
        %4660 = vmatpush1.msra.mxu0 0.0
        %4661 = vmatprep.subr.mxu0 0.0
        %4662 = vmatpush1.msra.mxu0 0.0
        %4663 = vmatprep.subr.mxu0 0.0
        %4664 = vmatpush1.msra.mxu0 0.0
        %4665 = vmatprep.subr.mxu0 0.0
        %4666 = vmatpush1.msra.mxu0 0.0
        %4667 = vmatprep.subr.mxu0 0.0
        %4668 = vmatpush1.msra.mxu0 0.0
        %4669 = vmatprep.subr.mxu0 0.0
        %4670 = vmatpush1.msra.mxu0 0.0
        %4671 = vmatprep.subr.mxu0 0.0
        %4672 = vmatpush1.msra.mxu0 0.0
        %4673 = vmatprep.subr.mxu0 0.0
        %4674 = vmatpush1.msra.mxu0 0.0
        %4675 = vmatprep.subr.mxu0 0.0
        %4676 = vmatpush1.msra.mxu0 0.0
        %4677 = vmatprep.mubr.f32.mxu0 0.0
        %v4678 = vand.u32 %v4384, 4294901760
        %v4679 = vsub.f32 %v4384, %v4678
        %v4680 = vand.u32 %v4679, 4294901760
        %4681 = vmatmul.mubr.f32.gmra.mrb[0].mxu0 %v4680
        %v4682 = vpop.f32.mrb[0].mxu0
        %v4683 = vadd.f32 %v4609, %v4682
        %v4684 = vpop.f32.mrb[0].mxu0
        %4685 = vdwg.mxu0
        %4686 = vmatprep.subr.mxu0 0.0
        %v4687 = vand.u32 %v4381, 4294901760
        %v4688 = vsub.f32 %v4381, %v4687
        %v4689 = vand.u32 %v4688, 4294901760
        %4690 = vmatpush1.msra.mxu0 %v4689
        %4691 = vmatprep.subr.mxu0 0.0
        %4692 = vmatpush1.msra.mxu0 0.0
        %4693 = vmatprep.subr.mxu0 0.0
        %4694 = vmatpush1.msra.mxu0 0.0
        %4695 = vmatprep.subr.mxu0 0.0
        %4696 = vmatpush1.msra.mxu0 0.0
        %4697 = vmatprep.subr.mxu0 0.0
        %4698 = vmatpush1.msra.mxu0 0.0
        %4699 = vmatprep.subr.mxu0 0.0
        %4700 = vmatpush1.msra.mxu0 0.0
        %4701 = vmatprep.subr.mxu0 0.0
        %4702 = vmatpush1.msra.mxu0 0.0
        %4703 = vmatprep.subr.mxu0 0.0
        %4704 = vmatpush1.msra.mxu0 0.0
        %4705 = vmatprep.subr.mxu0 0.0
        %4706 = vmatpush1.msra.mxu0 0.0
        %4707 = vmatprep.subr.mxu0 0.0
        %4708 = vmatpush1.msra.mxu0 0.0
        %4709 = vmatprep.subr.mxu0 0.0
        %4710 = vmatpush1.msra.mxu0 0.0
        %4711 = vmatprep.subr.mxu0 0.0
        %4712 = vmatpush1.msra.mxu0 0.0
        %4713 = vmatprep.subr.mxu0 0.0
        %4714 = vmatpush1.msra.mxu0 0.0
        %4715 = vmatprep.subr.mxu0 0.0
        %4716 = vmatpush1.msra.mxu0 0.0
        %4717 = vmatprep.subr.mxu0 0.0
        %4718 = vmatpush1.msra.mxu0 0.0
        %4719 = vmatprep.subr.mxu0 0.0
        %4720 = vmatpush1.msra.mxu0 0.0
        %4721 = vmatprep.subr.mxu0 0.0
        %4722 = vmatpush1.msra.mxu0 0.0
        %4723 = vmatprep.subr.mxu0 0.0
        %4724 = vmatpush1.msra.mxu0 0.0
        %4725 = vmatprep.subr.mxu0 0.0
        %4726 = vmatpush1.msra.mxu0 0.0
        %4727 = vmatprep.subr.mxu0 0.0
        %4728 = vmatpush1.msra.mxu0 0.0
        %4729 = vmatprep.subr.mxu0 0.0
        %4730 = vmatpush1.msra.mxu0 0.0
        %4731 = vmatprep.subr.mxu0 0.0
        %4732 = vmatpush1.msra.mxu0 0.0
        %4733 = vmatprep.subr.mxu0 0.0
        %4734 = vmatpush1.msra.mxu0 0.0
        %4735 = vmatprep.subr.mxu0 0.0
        %4736 = vmatpush1.msra.mxu0 0.0
        %4737 = vmatprep.subr.mxu0 0.0
        %4738 = vmatpush1.msra.mxu0 0.0
        %4739 = vmatprep.subr.mxu0 0.0
        %4740 = vmatpush1.msra.mxu0 0.0
        %4741 = vmatprep.subr.mxu0 0.0
        %4742 = vmatpush1.msra.mxu0 0.0
        %4743 = vmatprep.subr.mxu0 0.0
        %4744 = vmatpush1.msra.mxu0 0.0
        %4745 = vmatprep.subr.mxu0 0.0
        %4746 = vmatpush1.msra.mxu0 0.0
        %4747 = vmatprep.subr.mxu0 0.0
        %4748 = vmatpush1.msra.mxu0 0.0
        %4749 = vmatprep.subr.mxu0 0.0
        %4750 = vmatpush1.msra.mxu0 0.0
        %4751 = vmatprep.subr.mxu0 0.0
        %4752 = vmatpush1.msra.mxu0 0.0
        %4753 = vmatprep.mubr.f32.mxu0 0.0
        %v4754 = vand.u32 %v4384, 4294901760
        %4755 = vmatmul.mubr.f32.gmra.mrb[0].mxu0 %v4754
        %v4756 = vpop.f32.mrb[0].mxu0
        %v4757 = vadd.f32 %v4683, %v4756
        %v4758 = vpop.f32.mrb[0].mxu0
        %4759 = vdwg.mxu0
        %4760 = vmatprep.subr.mxu0 0.0
        %v4761 = vand.u32 %v4381, 4294901760
        %4762 = vmatpush1.msra.mxu0 %v4761
        %4763 = vmatprep.subr.mxu0 0.0
        %4764 = vmatpush1.msra.mxu0 0.0
        %4765 = vmatprep.subr.mxu0 0.0
        %4766 = vmatpush1.msra.mxu0 0.0
        %4767 = vmatprep.subr.mxu0 0.0
        %4768 = vmatpush1.msra.mxu0 0.0
        %4769 = vmatprep.subr.mxu0 0.0
        %4770 = vmatpush1.msra.mxu0 0.0
        %4771 = vmatprep.subr.mxu0 0.0
        %4772 = vmatpush1.msra.mxu0 0.0
        %4773 = vmatprep.subr.mxu0 0.0
        %4774 = vmatpush1.msra.mxu0 0.0
        %4775 = vmatprep.subr.mxu0 0.0
        %4776 = vmatpush1.msra.mxu0 0.0
        %4777 = vmatprep.subr.mxu0 0.0
        %4778 = vmatpush1.msra.mxu0 0.0
        %4779 = vmatprep.subr.mxu0 0.0
        %4780 = vmatpush1.msra.mxu0 0.0
        %4781 = vmatprep.subr.mxu0 0.0
        %4782 = vmatpush1.msra.mxu0 0.0
        %4783 = vmatprep.subr.mxu0 0.0
        %4784 = vmatpush1.msra.mxu0 0.0
        %4785 = vmatprep.subr.mxu0 0.0
        %4786 = vmatpush1.msra.mxu0 0.0
        %4787 = vmatprep.subr.mxu0 0.0
        %4788 = vmatpush1.msra.mxu0 0.0
        %4789 = vmatprep.subr.mxu0 0.0
        %4790 = vmatpush1.msra.mxu0 0.0
        %4791 = vmatprep.subr.mxu0 0.0
        %4792 = vmatpush1.msra.mxu0 0.0
        %4793 = vmatprep.subr.mxu0 0.0
        %4794 = vmatpush1.msra.mxu0 0.0
        %4795 = vmatprep.subr.mxu0 0.0
        %4796 = vmatpush1.msra.mxu0 0.0
        %4797 = vmatprep.subr.mxu0 0.0
        %4798 = vmatpush1.msra.mxu0 0.0
        %4799 = vmatprep.subr.mxu0 0.0
        %4800 = vmatpush1.msra.mxu0 0.0
        %4801 = vmatprep.subr.mxu0 0.0
        %4802 = vmatpush1.msra.mxu0 0.0
        %4803 = vmatprep.subr.mxu0 0.0
        %4804 = vmatpush1.msra.mxu0 0.0
        %4805 = vmatprep.subr.mxu0 0.0
        %4806 = vmatpush1.msra.mxu0 0.0
        %4807 = vmatprep.subr.mxu0 0.0
        %4808 = vmatpush1.msra.mxu0 0.0
        %4809 = vmatprep.subr.mxu0 0.0
        %4810 = vmatpush1.msra.mxu0 0.0
        %4811 = vmatprep.subr.mxu0 0.0
        %4812 = vmatpush1.msra.mxu0 0.0
        %4813 = vmatprep.subr.mxu0 0.0
        %4814 = vmatpush1.msra.mxu0 0.0
        %4815 = vmatprep.subr.mxu0 0.0
        %4816 = vmatpush1.msra.mxu0 0.0
        %4817 = vmatprep.subr.mxu0 0.0
        %4818 = vmatpush1.msra.mxu0 0.0
        %4819 = vmatprep.subr.mxu0 0.0
        %4820 = vmatpush1.msra.mxu0 0.0
        %4821 = vmatprep.subr.mxu0 0.0
        %4822 = vmatpush1.msra.mxu0 0.0
        %4823 = vmatprep.subr.mxu0 0.0
        %4824 = vmatpush1.msra.mxu0 0.0
        %4825 = vmatprep.mubr.f32.mxu0 0.0
        %v4826 = vand.u32 %v4384, 4294901760
        %4827 = vmatmul.mubr.f32.gmra.mrb[0].mxu0 %v4826
        %v4828 = vpop.f32.mrb[0].mxu0
        %v4829 = vadd.f32 %v4757, %v4828
        %v4830 = vpop.f32.mrb[0].mxu0
        %4831 = vdwg.mxu0
        %v4833 = vsel %vm1145, %v4377, 0
        %v4836 = vsel %vm1145, %v4829, 0
        %4838 = vmatprep.subr.mxu0 0.0
        %v4839 = vand.u32 %v468, 4294901760
        %4840 = vmatpush1.msra.mxu0 %v4839
        %4841 = vmatprep.subr.mxu0 0.0
        %v4842 = vand.u32 %v469, 4294901760
        %4843 = vmatpush1.msra.mxu0 %v4842
        %4844 = vmatprep.subr.mxu0 0.0
        %4845 = vmatpush1.msra.mxu0 0.0
        %4846 = vmatprep.subr.mxu0 0.0
        %4847 = vmatpush1.msra.mxu0 0.0
        %4848 = vmatprep.subr.mxu0 0.0
        %4849 = vmatpush1.msra.mxu0 0.0
        %4850 = vmatprep.subr.mxu0 0.0
        %4851 = vmatpush1.msra.mxu0 0.0
        %4852 = vmatprep.subr.mxu0 0.0
        %4853 = vmatpush1.msra.mxu0 0.0
        %4854 = vmatprep.subr.mxu0 0.0
        %4855 = vmatpush1.msra.mxu0 0.0
        %4856 = vmatprep.subr.mxu0 0.0
        %4857 = vmatpush1.msra.mxu0 0.0
        %4858 = vmatprep.subr.mxu0 0.0
        %4859 = vmatpush1.msra.mxu0 0.0
        %4860 = vmatprep.subr.mxu0 0.0
        %4861 = vmatpush1.msra.mxu0 0.0
        %4862 = vmatprep.subr.mxu0 0.0
        %4863 = vmatpush1.msra.mxu0 0.0
        %4864 = vmatprep.subr.mxu0 0.0
        %4865 = vmatpush1.msra.mxu0 0.0
        %4866 = vmatprep.subr.mxu0 0.0
        %4867 = vmatpush1.msra.mxu0 0.0
        %4868 = vmatprep.subr.mxu0 0.0
        %4869 = vmatpush1.msra.mxu0 0.0
        %4870 = vmatprep.subr.mxu0 0.0
        %4871 = vmatpush1.msra.mxu0 0.0
        %4872 = vmatprep.subr.mxu0 0.0
        %4873 = vmatpush1.msra.mxu0 0.0
        %4874 = vmatprep.subr.mxu0 0.0
        %4875 = vmatpush1.msra.mxu0 0.0
        %4876 = vmatprep.subr.mxu0 0.0
        %4877 = vmatpush1.msra.mxu0 0.0
        %4878 = vmatprep.subr.mxu0 0.0
        %4879 = vmatpush1.msra.mxu0 0.0
        %4880 = vmatprep.subr.mxu0 0.0
        %4881 = vmatpush1.msra.mxu0 0.0
        %4882 = vmatprep.subr.mxu0 0.0
        %4883 = vmatpush1.msra.mxu0 0.0
        %4884 = vmatprep.subr.mxu0 0.0
        %4885 = vmatpush1.msra.mxu0 0.0
        %4886 = vmatprep.subr.mxu0 0.0
        %4887 = vmatpush1.msra.mxu0 0.0
        %4888 = vmatprep.subr.mxu0 0.0
        %4889 = vmatpush1.msra.mxu0 0.0
        %4890 = vmatprep.subr.mxu0 0.0
        %4891 = vmatpush1.msra.mxu0 0.0
        %4892 = vmatprep.subr.mxu0 0.0
        %4893 = vmatpush1.msra.mxu0 0.0
        %4894 = vmatprep.subr.mxu0 0.0
        %4895 = vmatpush1.msra.mxu0 0.0
        %4896 = vmatprep.subr.mxu0 0.0
        %4897 = vmatpush1.msra.mxu0 0.0
        %4898 = vmatprep.subr.mxu0 0.0
        %4899 = vmatpush1.msra.mxu0 0.0
        %4900 = vmatprep.subr.mxu0 0.0
        %4901 = vmatpush1.msra.mxu0 0.0
        %4902 = vmatprep.subr.mxu0 0.0
        %4903 = vmatpush1.msra.mxu0 0.0
        %4904 = vmatprep.mubr.f32.mxu0 0.0
        %v4905 = vand.u32 %v4833, 4294901760
        %v4906 = vsub.f32 %v4833, %v4905
        %v4907 = vand.u32 %v4906, 4294901760
        %v4908 = vsub.f32 %v4906, %v4907
        %v4909 = vand.u32 %v4908, 4294901760
        %4910 = vmatmul.mubr.f32.gmra.mrb[0].mxu0 %v4909
        %v4911 = vpop.f32.mrb[0].mxu0
        %v4912 = vadd.f32 0.0, %v4911
        %v4913 = vpop.f32.mrb[0].mxu0
        %4914 = vmatprep.mubr.f32.mxu0 0.0
        %v4915 = vand.u32 %v4836, 4294901760
        %v4916 = vsub.f32 %v4836, %v4915
        %v4917 = vand.u32 %v4916, 4294901760
        %v4918 = vsub.f32 %v4916, %v4917
        %v4919 = vand.u32 %v4918, 4294901760
        %4920 = vmatmul.mubr.f32.gmra.mrb[0].mxu0 %v4919
        %v4921 = vpop.f32.mrb[0].mxu0
        %v4922 = vadd.f32 0.0, %v4921
        %v4923 = vpop.f32.mrb[0].mxu0
        %4924 = vdwg.mxu0
        %4925 = vmatprep.subr.mxu0 0.0
        %v4926 = vand.u32 %v468, 4294901760
        %v4927 = vsub.f32 %v468, %v4926
        %v4928 = vand.u32 %v4927, 4294901760
        %v4929 = vsub.f32 %v4927, %v4928
        %v4930 = vand.u32 %v4929, 4294901760
        %4931 = vmatpush1.msra.mxu0 %v4930
        %4932 = vmatprep.subr.mxu0 0.0
        %v4933 = vand.u32 %v469, 4294901760
        %v4934 = vsub.f32 %v469, %v4933
        %v4935 = vand.u32 %v4934, 4294901760
        %v4936 = vsub.f32 %v4934, %v4935
        %v4937 = vand.u32 %v4936, 4294901760
        %4938 = vmatpush1.msra.mxu0 %v4937
        %4939 = vmatprep.subr.mxu0 0.0
        %4940 = vmatpush1.msra.mxu0 0.0
        %4941 = vmatprep.subr.mxu0 0.0
        %4942 = vmatpush1.msra.mxu0 0.0
        %4943 = vmatprep.subr.mxu0 0.0
        %4944 = vmatpush1.msra.mxu0 0.0
        %4945 = vmatprep.subr.mxu0 0.0
        %4946 = vmatpush1.msra.mxu0 0.0
        %4947 = vmatprep.subr.mxu0 0.0
        %4948 = vmatpush1.msra.mxu0 0.0
        %4949 = vmatprep.subr.mxu0 0.0
        %4950 = vmatpush1.msra.mxu0 0.0
        %4951 = vmatprep.subr.mxu0 0.0
        %4952 = vmatpush1.msra.mxu0 0.0
        %4953 = vmatprep.subr.mxu0 0.0
        %4954 = vmatpush1.msra.mxu0 0.0
        %4955 = vmatprep.subr.mxu0 0.0
        %4956 = vmatpush1.msra.mxu0 0.0
        %4957 = vmatprep.subr.mxu0 0.0
        %4958 = vmatpush1.msra.mxu0 0.0
        %4959 = vmatprep.subr.mxu0 0.0
        %4960 = vmatpush1.msra.mxu0 0.0
        %4961 = vmatprep.subr.mxu0 0.0
        %4962 = vmatpush1.msra.mxu0 0.0
        %4963 = vmatprep.subr.mxu0 0.0
        %4964 = vmatpush1.msra.mxu0 0.0
        %4965 = vmatprep.subr.mxu0 0.0
        %4966 = vmatpush1.msra.mxu0 0.0
        %4967 = vmatprep.subr.mxu0 0.0
        %4968 = vmatpush1.msra.mxu0 0.0
        %4969 = vmatprep.subr.mxu0 0.0
        %4970 = vmatpush1.msra.mxu0 0.0
        %4971 = vmatprep.subr.mxu0 0.0
        %4972 = vmatpush1.msra.mxu0 0.0
        %4973 = vmatprep.subr.mxu0 0.0
        %4974 = vmatpush1.msra.mxu0 0.0
        %4975 = vmatprep.subr.mxu0 0.0
        %4976 = vmatpush1.msra.mxu0 0.0
        %4977 = vmatprep.subr.mxu0 0.0
        %4978 = vmatpush1.msra.mxu0 0.0
        %4979 = vmatprep.subr.mxu0 0.0
        %4980 = vmatpush1.msra.mxu0 0.0
        %4981 = vmatprep.subr.mxu0 0.0
        %4982 = vmatpush1.msra.mxu0 0.0
        %4983 = vmatprep.subr.mxu0 0.0
        %4984 = vmatpush1.msra.mxu0 0.0
        %4985 = vmatprep.subr.mxu0 0.0
        %4986 = vmatpush1.msra.mxu0 0.0
        %4987 = vmatprep.subr.mxu0 0.0
        %4988 = vmatpush1.msra.mxu0 0.0
        %4989 = vmatprep.subr.mxu0 0.0
        %4990 = vmatpush1.msra.mxu0 0.0
        %4991 = vmatprep.subr.mxu0 0.0
        %4992 = vmatpush1.msra.mxu0 0.0
        %4993 = vmatprep.subr.mxu0 0.0
        %4994 = vmatpush1.msra.mxu0 0.0
        %4995 = vmatprep.subr.mxu0 0.0
        %4996 = vmatpush1.msra.mxu0 0.0
        %4997 = vmatprep.subr.mxu0 0.0
        %4998 = vmatpush1.msra.mxu0 0.0
        %4999 = vmatprep.mubr.f32.mxu0 0.0
        %v5000 = vand.u32 %v4833, 4294901760
        %5001 = vmatmul.mubr.f32.gmra.mrb[0].mxu0 %v5000
        %v5002 = vpop.f32.mrb[0].mxu0
        %v5003 = vadd.f32 %v4912, %v5002
        %v5004 = vpop.f32.mrb[0].mxu0
        %5005 = vmatprep.mubr.f32.mxu0 0.0
        %v5006 = vand.u32 %v4836, 4294901760
        %5007 = vmatmul.mubr.f32.gmra.mrb[0].mxu0 %v5006
        %v5008 = vpop.f32.mrb[0].mxu0
        %v5009 = vadd.f32 %v4922, %v5008
        %v5010 = vpop.f32.mrb[0].mxu0
        %5011 = vdwg.mxu0
        %5012 = vmatprep.subr.mxu0 0.0
        %v5013 = vand.u32 %v468, 4294901760
        %v5014 = vsub.f32 %v468, %v5013
        %5015 = vmatpush1.msra.mxu0 %v5014
        %5016 = vmatprep.subr.mxu0 0.0
        %v5017 = vand.u32 %v469, 4294901760
        %v5018 = vsub.f32 %v469, %v5017
        %5019 = vmatpush1.msra.mxu0 %v5018
        %5020 = vmatprep.subr.mxu0 0.0
        %5021 = vmatpush1.msra.mxu0 0.0
        %5022 = vmatprep.subr.mxu0 0.0
        %5023 = vmatpush1.msra.mxu0 0.0
        %5024 = vmatprep.subr.mxu0 0.0
        %5025 = vmatpush1.msra.mxu0 0.0
        %5026 = vmatprep.subr.mxu0 0.0
        %5027 = vmatpush1.msra.mxu0 0.0
        %5028 = vmatprep.subr.mxu0 0.0
        %5029 = vmatpush1.msra.mxu0 0.0
        %5030 = vmatprep.subr.mxu0 0.0
        %5031 = vmatpush1.msra.mxu0 0.0
        %5032 = vmatprep.subr.mxu0 0.0
        %5033 = vmatpush1.msra.mxu0 0.0
        %5034 = vmatprep.subr.mxu0 0.0
        %5035 = vmatpush1.msra.mxu0 0.0
        %5036 = vmatprep.subr.mxu0 0.0
        %5037 = vmatpush1.msra.mxu0 0.0
        %5038 = vmatprep.subr.mxu0 0.0
        %5039 = vmatpush1.msra.mxu0 0.0
        %5040 = vmatprep.subr.mxu0 0.0
        %5041 = vmatpush1.msra.mxu0 0.0
        %5042 = vmatprep.subr.mxu0 0.0
        %5043 = vmatpush1.msra.mxu0 0.0
        %5044 = vmatprep.subr.mxu0 0.0
        %5045 = vmatpush1.msra.mxu0 0.0
        %5046 = vmatprep.subr.mxu0 0.0
        %5047 = vmatpush1.msra.mxu0 0.0
        %5048 = vmatprep.subr.mxu0 0.0
        %5049 = vmatpush1.msra.mxu0 0.0
        %5050 = vmatprep.subr.mxu0 0.0
        %5051 = vmatpush1.msra.mxu0 0.0
        %5052 = vmatprep.subr.mxu0 0.0
        %5053 = vmatpush1.msra.mxu0 0.0
        %5054 = vmatprep.subr.mxu0 0.0
        %5055 = vmatpush1.msra.mxu0 0.0
        %5056 = vmatprep.subr.mxu0 0.0
        %5057 = vmatpush1.msra.mxu0 0.0
        %5058 = vmatprep.subr.mxu0 0.0
        %5059 = vmatpush1.msra.mxu0 0.0
        %5060 = vmatprep.subr.mxu0 0.0
        %5061 = vmatpush1.msra.mxu0 0.0
        %5062 = vmatprep.subr.mxu0 0.0
        %5063 = vmatpush1.msra.mxu0 0.0
        %5064 = vmatprep.subr.mxu0 0.0
        %5065 = vmatpush1.msra.mxu0 0.0
        %5066 = vmatprep.subr.mxu0 0.0
        %5067 = vmatpush1.msra.mxu0 0.0
        %5068 = vmatprep.subr.mxu0 0.0
        %5069 = vmatpush1.msra.mxu0 0.0
        %5070 = vmatprep.subr.mxu0 0.0
        %5071 = vmatpush1.msra.mxu0 0.0
        %5072 = vmatprep.subr.mxu0 0.0
        %5073 = vmatpush1.msra.mxu0 0.0
        %5074 = vmatprep.subr.mxu0 0.0
        %5075 = vmatpush1.msra.mxu0 0.0
        %5076 = vmatprep.subr.mxu0 0.0
        %5077 = vmatpush1.msra.mxu0 0.0
        %5078 = vmatprep.subr.mxu0 0.0
        %5079 = vmatpush1.msra.mxu0 0.0
        %5080 = vmatprep.mubr.f32.mxu0 0.0
        %v5081 = vand.u32 %v4833, 4294901760
        %v5082 = vsub.f32 %v4833, %v5081
        %5083 = vmatmul.mubr.f32.gmra.mrb[0].mxu0 %v5082
        %v5084 = vpop.f32.mrb[0].mxu0
        %v5085 = vadd.f32 %v5003, %v5084
        %v5086 = vpop.f32.mrb[0].mxu0
        %5087 = vmatprep.mubr.f32.mxu0 0.0
        %v5088 = vand.u32 %v4836, 4294901760
        %v5089 = vsub.f32 %v4836, %v5088
        %5090 = vmatmul.mubr.f32.gmra.mrb[0].mxu0 %v5089
        %v5091 = vpop.f32.mrb[0].mxu0
        %v5092 = vadd.f32 %v5009, %v5091
        %v5093 = vpop.f32.mrb[0].mxu0
        %5094 = vdwg.mxu0
        %5095 = vmatprep.subr.mxu0 0.0
        %v5096 = vand.u32 %v468, 4294901760
        %5097 = vmatpush1.msra.mxu0 %v5096
        %5098 = vmatprep.subr.mxu0 0.0
        %v5099 = vand.u32 %v469, 4294901760
        %5100 = vmatpush1.msra.mxu0 %v5099
        %5101 = vmatprep.subr.mxu0 0.0
        %5102 = vmatpush1.msra.mxu0 0.0
        %5103 = vmatprep.subr.mxu0 0.0
        %5104 = vmatpush1.msra.mxu0 0.0
        %5105 = vmatprep.subr.mxu0 0.0
        %5106 = vmatpush1.msra.mxu0 0.0
        %5107 = vmatprep.subr.mxu0 0.0
        %5108 = vmatpush1.msra.mxu0 0.0
        %5109 = vmatprep.subr.mxu0 0.0
        %5110 = vmatpush1.msra.mxu0 0.0
        %5111 = vmatprep.subr.mxu0 0.0
        %5112 = vmatpush1.msra.mxu0 0.0
        %5113 = vmatprep.subr.mxu0 0.0
        %5114 = vmatpush1.msra.mxu0 0.0
        %5115 = vmatprep.subr.mxu0 0.0
        %5116 = vmatpush1.msra.mxu0 0.0
        %5117 = vmatprep.subr.mxu0 0.0
        %5118 = vmatpush1.msra.mxu0 0.0
        %5119 = vmatprep.subr.mxu0 0.0
        %5120 = vmatpush1.msra.mxu0 0.0
        %5121 = vmatprep.subr.mxu0 0.0
        %5122 = vmatpush1.msra.mxu0 0.0
        %5123 = vmatprep.subr.mxu0 0.0
        %5124 = vmatpush1.msra.mxu0 0.0
        %5125 = vmatprep.subr.mxu0 0.0
        %5126 = vmatpush1.msra.mxu0 0.0
        %5127 = vmatprep.subr.mxu0 0.0
        %5128 = vmatpush1.msra.mxu0 0.0
        %5129 = vmatprep.subr.mxu0 0.0
        %5130 = vmatpush1.msra.mxu0 0.0
        %5131 = vmatprep.subr.mxu0 0.0
        %5132 = vmatpush1.msra.mxu0 0.0
        %5133 = vmatprep.subr.mxu0 0.0
        %5134 = vmatpush1.msra.mxu0 0.0
        %5135 = vmatprep.subr.mxu0 0.0
        %5136 = vmatpush1.msra.mxu0 0.0
        %5137 = vmatprep.subr.mxu0 0.0
        %5138 = vmatpush1.msra.mxu0 0.0
        %5139 = vmatprep.subr.mxu0 0.0
        %5140 = vmatpush1.msra.mxu0 0.0
        %5141 = vmatprep.subr.mxu0 0.0
        %5142 = vmatpush1.msra.mxu0 0.0
        %5143 = vmatprep.subr.mxu0 0.0
        %5144 = vmatpush1.msra.mxu0 0.0
        %5145 = vmatprep.subr.mxu0 0.0
        %5146 = vmatpush1.msra.mxu0 0.0
        %5147 = vmatprep.subr.mxu0 0.0
        %5148 = vmatpush1.msra.mxu0 0.0
        %5149 = vmatprep.subr.mxu0 0.0
        %5150 = vmatpush1.msra.mxu0 0.0
        %5151 = vmatprep.subr.mxu0 0.0
        %5152 = vmatpush1.msra.mxu0 0.0
        %5153 = vmatprep.subr.mxu0 0.0
        %5154 = vmatpush1.msra.mxu0 0.0
        %5155 = vmatprep.subr.mxu0 0.0
        %5156 = vmatpush1.msra.mxu0 0.0
        %5157 = vmatprep.subr.mxu0 0.0
        %5158 = vmatpush1.msra.mxu0 0.0
        %5159 = vmatprep.subr.mxu0 0.0
        %5160 = vmatpush1.msra.mxu0 0.0
        %5161 = vmatprep.mubr.f32.mxu0 0.0
        %v5162 = vand.u32 %v4833, 4294901760
        %v5163 = vsub.f32 %v4833, %v5162
        %v5164 = vand.u32 %v5163, 4294901760
        %5165 = vmatmul.mubr.f32.gmra.mrb[0].mxu0 %v5164
        %v5166 = vpop.f32.mrb[0].mxu0
        %v5167 = vadd.f32 %v5085, %v5166
        %v5168 = vpop.f32.mrb[0].mxu0
        %5169 = vmatprep.mubr.f32.mxu0 0.0
        %v5170 = vand.u32 %v4836, 4294901760
        %v5171 = vsub.f32 %v4836, %v5170
        %v5172 = vand.u32 %v5171, 4294901760
        %5173 = vmatmul.mubr.f32.gmra.mrb[0].mxu0 %v5172
        %v5174 = vpop.f32.mrb[0].mxu0
        %v5175 = vadd.f32 %v5092, %v5174
        %v5176 = vpop.f32.mrb[0].mxu0
        %5177 = vdwg.mxu0
        %5178 = vmatprep.subr.mxu0 0.0
        %v5179 = vand.u32 %v468, 4294901760
        %v5180 = vsub.f32 %v468, %v5179
        %v5181 = vand.u32 %v5180, 4294901760
        %5182 = vmatpush1.msra.mxu0 %v5181
        %5183 = vmatprep.subr.mxu0 0.0
        %v5184 = vand.u32 %v469, 4294901760
        %v5185 = vsub.f32 %v469, %v5184
        %v5186 = vand.u32 %v5185, 4294901760
        %5187 = vmatpush1.msra.mxu0 %v5186
        %5188 = vmatprep.subr.mxu0 0.0
        %5189 = vmatpush1.msra.mxu0 0.0
        %5190 = vmatprep.subr.mxu0 0.0
        %5191 = vmatpush1.msra.mxu0 0.0
        %5192 = vmatprep.subr.mxu0 0.0
        %5193 = vmatpush1.msra.mxu0 0.0
        %5194 = vmatprep.subr.mxu0 0.0
        %5195 = vmatpush1.msra.mxu0 0.0
        %5196 = vmatprep.subr.mxu0 0.0
        %5197 = vmatpush1.msra.mxu0 0.0
        %5198 = vmatprep.subr.mxu0 0.0
        %5199 = vmatpush1.msra.mxu0 0.0
        %5200 = vmatprep.subr.mxu0 0.0
        %5201 = vmatpush1.msra.mxu0 0.0
        %5202 = vmatprep.subr.mxu0 0.0
        %5203 = vmatpush1.msra.mxu0 0.0
        %5204 = vmatprep.subr.mxu0 0.0
        %5205 = vmatpush1.msra.mxu0 0.0
        %5206 = vmatprep.subr.mxu0 0.0
        %5207 = vmatpush1.msra.mxu0 0.0
        %5208 = vmatprep.subr.mxu0 0.0
        %5209 = vmatpush1.msra.mxu0 0.0
        %5210 = vmatprep.subr.mxu0 0.0
        %5211 = vmatpush1.msra.mxu0 0.0
        %5212 = vmatprep.subr.mxu0 0.0
        %5213 = vmatpush1.msra.mxu0 0.0
        %5214 = vmatprep.subr.mxu0 0.0
        %5215 = vmatpush1.msra.mxu0 0.0
        %5216 = vmatprep.subr.mxu0 0.0
        %5217 = vmatpush1.msra.mxu0 0.0
        %5218 = vmatprep.subr.mxu0 0.0
        %5219 = vmatpush1.msra.mxu0 0.0
        %5220 = vmatprep.subr.mxu0 0.0
        %5221 = vmatpush1.msra.mxu0 0.0
        %5222 = vmatprep.subr.mxu0 0.0
        %5223 = vmatpush1.msra.mxu0 0.0
        %5224 = vmatprep.subr.mxu0 0.0
        %5225 = vmatpush1.msra.mxu0 0.0
        %5226 = vmatprep.subr.mxu0 0.0
        %5227 = vmatpush1.msra.mxu0 0.0
        %5228 = vmatprep.subr.mxu0 0.0
        %5229 = vmatpush1.msra.mxu0 0.0
        %5230 = vmatprep.subr.mxu0 0.0
        %5231 = vmatpush1.msra.mxu0 0.0
        %5232 = vmatprep.subr.mxu0 0.0
        %5233 = vmatpush1.msra.mxu0 0.0
        %5234 = vmatprep.subr.mxu0 0.0
        %5235 = vmatpush1.msra.mxu0 0.0
        %5236 = vmatprep.subr.mxu0 0.0
        %5237 = vmatpush1.msra.mxu0 0.0
        %5238 = vmatprep.subr.mxu0 0.0
        %5239 = vmatpush1.msra.mxu0 0.0
        %5240 = vmatprep.subr.mxu0 0.0
        %5241 = vmatpush1.msra.mxu0 0.0
        %5242 = vmatprep.subr.mxu0 0.0
        %5243 = vmatpush1.msra.mxu0 0.0
        %5244 = vmatprep.subr.mxu0 0.0
        %5245 = vmatpush1.msra.mxu0 0.0
        %5246 = vmatprep.subr.mxu0 0.0
        %5247 = vmatpush1.msra.mxu0 0.0
        %5248 = vmatprep.mubr.f32.mxu0 0.0
        %v5249 = vand.u32 %v4833, 4294901760
        %5250 = vmatmul.mubr.f32.gmra.mrb[0].mxu0 %v5249
        %v5251 = vpop.f32.mrb[0].mxu0
        %v5252 = vadd.f32 %v5167, %v5251
        %v5253 = vpop.f32.mrb[0].mxu0
        %5254 = vmatprep.mubr.f32.mxu0 0.0
        %v5255 = vand.u32 %v4836, 4294901760
        %5256 = vmatmul.mubr.f32.gmra.mrb[0].mxu0 %v5255
        %v5257 = vpop.f32.mrb[0].mxu0
        %v5258 = vadd.f32 %v5175, %v5257
        %v5259 = vpop.f32.mrb[0].mxu0
        %5260 = vdwg.mxu0
        %5261 = vmatprep.subr.mxu0 0.0
        %v5262 = vand.u32 %v468, 4294901760
        %5263 = vmatpush1.msra.mxu0 %v5262
        %5264 = vmatprep.subr.mxu0 0.0
        %v5265 = vand.u32 %v469, 4294901760
        %5266 = vmatpush1.msra.mxu0 %v5265
        %5267 = vmatprep.subr.mxu0 0.0
        %5268 = vmatpush1.msra.mxu0 0.0
        %5269 = vmatprep.subr.mxu0 0.0
        %5270 = vmatpush1.msra.mxu0 0.0
        %5271 = vmatprep.subr.mxu0 0.0
        %5272 = vmatpush1.msra.mxu0 0.0
        %5273 = vmatprep.subr.mxu0 0.0
        %5274 = vmatpush1.msra.mxu0 0.0
        %5275 = vmatprep.subr.mxu0 0.0
        %5276 = vmatpush1.msra.mxu0 0.0
        %5277 = vmatprep.subr.mxu0 0.0
        %5278 = vmatpush1.msra.mxu0 0.0
        %5279 = vmatprep.subr.mxu0 0.0
        %5280 = vmatpush1.msra.mxu0 0.0
        %5281 = vmatprep.subr.mxu0 0.0
        %5282 = vmatpush1.msra.mxu0 0.0
        %5283 = vmatprep.subr.mxu0 0.0
        %5284 = vmatpush1.msra.mxu0 0.0
        %5285 = vmatprep.subr.mxu0 0.0
        %5286 = vmatpush1.msra.mxu0 0.0
        %5287 = vmatprep.subr.mxu0 0.0
        %5288 = vmatpush1.msra.mxu0 0.0
        %5289 = vmatprep.subr.mxu0 0.0
        %5290 = vmatpush1.msra.mxu0 0.0
        %5291 = vmatprep.subr.mxu0 0.0
        %5292 = vmatpush1.msra.mxu0 0.0
        %5293 = vmatprep.subr.mxu0 0.0
        %5294 = vmatpush1.msra.mxu0 0.0
        %5295 = vmatprep.subr.mxu0 0.0
        %5296 = vmatpush1.msra.mxu0 0.0
        %5297 = vmatprep.subr.mxu0 0.0
        %5298 = vmatpush1.msra.mxu0 0.0
        %5299 = vmatprep.subr.mxu0 0.0
        %5300 = vmatpush1.msra.mxu0 0.0
        %5301 = vmatprep.subr.mxu0 0.0
        %5302 = vmatpush1.msra.mxu0 0.0
        %5303 = vmatprep.subr.mxu0 0.0
        %5304 = vmatpush1.msra.mxu0 0.0
        %5305 = vmatprep.subr.mxu0 0.0
        %5306 = vmatpush1.msra.mxu0 0.0
        %5307 = vmatprep.subr.mxu0 0.0
        %5308 = vmatpush1.msra.mxu0 0.0
        %5309 = vmatprep.subr.mxu0 0.0
        %5310 = vmatpush1.msra.mxu0 0.0
        %5311 = vmatprep.subr.mxu0 0.0
        %5312 = vmatpush1.msra.mxu0 0.0
        %5313 = vmatprep.subr.mxu0 0.0
        %5314 = vmatpush1.msra.mxu0 0.0
        %5315 = vmatprep.subr.mxu0 0.0
        %5316 = vmatpush1.msra.mxu0 0.0
        %5317 = vmatprep.subr.mxu0 0.0
        %5318 = vmatpush1.msra.mxu0 0.0
        %5319 = vmatprep.subr.mxu0 0.0
        %5320 = vmatpush1.msra.mxu0 0.0
        %5321 = vmatprep.subr.mxu0 0.0
        %5322 = vmatpush1.msra.mxu0 0.0
        %5323 = vmatprep.subr.mxu0 0.0
        %5324 = vmatpush1.msra.mxu0 0.0
        %5325 = vmatprep.subr.mxu0 0.0
        %5326 = vmatpush1.msra.mxu0 0.0
        %5327 = vmatprep.mubr.f32.mxu0 0.0
        %v5328 = vand.u32 %v4833, 4294901760
        %5329 = vmatmul.mubr.f32.gmra.mrb[0].mxu0 %v5328
        %v5330 = vpop.f32.mrb[0].mxu0
        %v5331 = vadd.f32 %v5252, %v5330
        %v5332 = vpop.f32.mrb[0].mxu0
        %5333 = vmatprep.mubr.f32.mxu0 0.0
        %v5334 = vand.u32 %v4836, 4294901760
        %5335 = vmatmul.mubr.f32.gmra.mrb[0].mxu0 %v5334
        %v5336 = vpop.f32.mrb[0].mxu0
        %v5337 = vadd.f32 %v5258, %v5336
        %v5338 = vpop.f32.mrb[0].mxu0
        %5339 = vdwg.mxu0
        %v5341 = vsel %vm1145, %v2539, 0
        %v5344 = vsel %vm1145, %v2991, 0
        %5346 = vmatprep.subr.mxu0 0.0
        %v5347 = vand.u32 %v466, 4294901760
        %5348 = vmatpush1.msra.mxu0 %v5347
        %5349 = vmatprep.subr.mxu0 0.0
        %v5350 = vand.u32 %v467, 4294901760
        %5351 = vmatpush1.msra.mxu0 %v5350
        %5352 = vmatprep.subr.mxu0 0.0
        %5353 = vmatpush1.msra.mxu0 0.0
        %5354 = vmatprep.subr.mxu0 0.0
        %5355 = vmatpush1.msra.mxu0 0.0
        %5356 = vmatprep.subr.mxu0 0.0
        %5357 = vmatpush1.msra.mxu0 0.0
        %5358 = vmatprep.subr.mxu0 0.0
        %5359 = vmatpush1.msra.mxu0 0.0
        %5360 = vmatprep.subr.mxu0 0.0
        %5361 = vmatpush1.msra.mxu0 0.0
        %5362 = vmatprep.subr.mxu0 0.0
        %5363 = vmatpush1.msra.mxu0 0.0
        %5364 = vmatprep.subr.mxu0 0.0
        %5365 = vmatpush1.msra.mxu0 0.0
        %5366 = vmatprep.subr.mxu0 0.0
        %5367 = vmatpush1.msra.mxu0 0.0
        %5368 = vmatprep.subr.mxu0 0.0
        %5369 = vmatpush1.msra.mxu0 0.0
        %5370 = vmatprep.subr.mxu0 0.0
        %5371 = vmatpush1.msra.mxu0 0.0
        %5372 = vmatprep.subr.mxu0 0.0
        %5373 = vmatpush1.msra.mxu0 0.0
        %5374 = vmatprep.subr.mxu0 0.0
        %5375 = vmatpush1.msra.mxu0 0.0
        %5376 = vmatprep.subr.mxu0 0.0
        %5377 = vmatpush1.msra.mxu0 0.0
        %5378 = vmatprep.subr.mxu0 0.0
        %5379 = vmatpush1.msra.mxu0 0.0
        %5380 = vmatprep.subr.mxu0 0.0
        %5381 = vmatpush1.msra.mxu0 0.0
        %5382 = vmatprep.subr.mxu0 0.0
        %5383 = vmatpush1.msra.mxu0 0.0
        %5384 = vmatprep.subr.mxu0 0.0
        %5385 = vmatpush1.msra.mxu0 0.0
        %5386 = vmatprep.subr.mxu0 0.0
        %5387 = vmatpush1.msra.mxu0 0.0
        %5388 = vmatprep.subr.mxu0 0.0
        %5389 = vmatpush1.msra.mxu0 0.0
        %5390 = vmatprep.subr.mxu0 0.0
        %5391 = vmatpush1.msra.mxu0 0.0
        %5392 = vmatprep.subr.mxu0 0.0
        %5393 = vmatpush1.msra.mxu0 0.0
        %5394 = vmatprep.subr.mxu0 0.0
        %5395 = vmatpush1.msra.mxu0 0.0
        %5396 = vmatprep.subr.mxu0 0.0
        %5397 = vmatpush1.msra.mxu0 0.0
        %5398 = vmatprep.subr.mxu0 0.0
        %5399 = vmatpush1.msra.mxu0 0.0
        %5400 = vmatprep.subr.mxu0 0.0
        %5401 = vmatpush1.msra.mxu0 0.0
        %5402 = vmatprep.subr.mxu0 0.0
        %5403 = vmatpush1.msra.mxu0 0.0
        %5404 = vmatprep.subr.mxu0 0.0
        %5405 = vmatpush1.msra.mxu0 0.0
        %5406 = vmatprep.subr.mxu0 0.0
        %5407 = vmatpush1.msra.mxu0 0.0
        %5408 = vmatprep.subr.mxu0 0.0
        %5409 = vmatpush1.msra.mxu0 0.0
        %5410 = vmatprep.subr.mxu0 0.0
        %5411 = vmatpush1.msra.mxu0 0.0
        %5412 = vmatprep.mubr.f32.mxu0 0.0
        %v5413 = vand.u32 %v5341, 4294901760
        %v5414 = vsub.f32 %v5341, %v5413
        %v5415 = vand.u32 %v5414, 4294901760
        %v5416 = vsub.f32 %v5414, %v5415
        %v5417 = vand.u32 %v5416, 4294901760
        %5418 = vmatmul.mubr.f32.gmra.mrb[0].mxu0 %v5417
        %v5419 = vpop.f32.mrb[0].mxu0
        %v5420 = vadd.f32 %v5331, %v5419
        %v5421 = vpop.f32.mrb[0].mxu0
        %5422 = vmatprep.mubr.f32.mxu0 0.0
        %v5423 = vand.u32 %v5344, 4294901760
        %v5424 = vsub.f32 %v5344, %v5423
        %v5425 = vand.u32 %v5424, 4294901760
        %v5426 = vsub.f32 %v5424, %v5425
        %v5427 = vand.u32 %v5426, 4294901760
        %5428 = vmatmul.mubr.f32.gmra.mrb[0].mxu0 %v5427
        %v5429 = vpop.f32.mrb[0].mxu0
        %v5430 = vadd.f32 %v5337, %v5429
        %v5431 = vpop.f32.mrb[0].mxu0
        %5432 = vdwg.mxu0
        %5433 = vmatprep.subr.mxu0 0.0
        %v5434 = vand.u32 %v466, 4294901760
        %v5435 = vsub.f32 %v466, %v5434
        %v5436 = vand.u32 %v5435, 4294901760
        %v5437 = vsub.f32 %v5435, %v5436
        %v5438 = vand.u32 %v5437, 4294901760
        %5439 = vmatpush1.msra.mxu0 %v5438
        %5440 = vmatprep.subr.mxu0 0.0
        %v5441 = vand.u32 %v467, 4294901760
        %v5442 = vsub.f32 %v467, %v5441
        %v5443 = vand.u32 %v5442, 4294901760
        %v5444 = vsub.f32 %v5442, %v5443
        %v5445 = vand.u32 %v5444, 4294901760
        %5446 = vmatpush1.msra.mxu0 %v5445
        %5447 = vmatprep.subr.mxu0 0.0
        %5448 = vmatpush1.msra.mxu0 0.0
        %5449 = vmatprep.subr.mxu0 0.0
        %5450 = vmatpush1.msra.mxu0 0.0
        %5451 = vmatprep.subr.mxu0 0.0
        %5452 = vmatpush1.msra.mxu0 0.0
        %5453 = vmatprep.subr.mxu0 0.0
        %5454 = vmatpush1.msra.mxu0 0.0
        %5455 = vmatprep.subr.mxu0 0.0
        %5456 = vmatpush1.msra.mxu0 0.0
        %5457 = vmatprep.subr.mxu0 0.0
        %5458 = vmatpush1.msra.mxu0 0.0
        %5459 = vmatprep.subr.mxu0 0.0
        %5460 = vmatpush1.msra.mxu0 0.0
        %5461 = vmatprep.subr.mxu0 0.0
        %5462 = vmatpush1.msra.mxu0 0.0
        %5463 = vmatprep.subr.mxu0 0.0
        %5464 = vmatpush1.msra.mxu0 0.0
        %5465 = vmatprep.subr.mxu0 0.0
        %5466 = vmatpush1.msra.mxu0 0.0
        %5467 = vmatprep.subr.mxu0 0.0
        %5468 = vmatpush1.msra.mxu0 0.0
        %5469 = vmatprep.subr.mxu0 0.0
        %5470 = vmatpush1.msra.mxu0 0.0
        %5471 = vmatprep.subr.mxu0 0.0
        %5472 = vmatpush1.msra.mxu0 0.0
        %5473 = vmatprep.subr.mxu0 0.0
        %5474 = vmatpush1.msra.mxu0 0.0
        %5475 = vmatprep.subr.mxu0 0.0
        %5476 = vmatpush1.msra.mxu0 0.0
        %5477 = vmatprep.subr.mxu0 0.0
        %5478 = vmatpush1.msra.mxu0 0.0
        %5479 = vmatprep.subr.mxu0 0.0
        %5480 = vmatpush1.msra.mxu0 0.0
        %5481 = vmatprep.subr.mxu0 0.0
        %5482 = vmatpush1.msra.mxu0 0.0
        %5483 = vmatprep.subr.mxu0 0.0
        %5484 = vmatpush1.msra.mxu0 0.0
        %5485 = vmatprep.subr.mxu0 0.0
        %5486 = vmatpush1.msra.mxu0 0.0
        %5487 = vmatprep.subr.mxu0 0.0
        %5488 = vmatpush1.msra.mxu0 0.0
        %5489 = vmatprep.subr.mxu0 0.0
        %5490 = vmatpush1.msra.mxu0 0.0
        %5491 = vmatprep.subr.mxu0 0.0
        %5492 = vmatpush1.msra.mxu0 0.0
        %5493 = vmatprep.subr.mxu0 0.0
        %5494 = vmatpush1.msra.mxu0 0.0
        %5495 = vmatprep.subr.mxu0 0.0
        %5496 = vmatpush1.msra.mxu0 0.0
        %5497 = vmatprep.subr.mxu0 0.0
        %5498 = vmatpush1.msra.mxu0 0.0
        %5499 = vmatprep.subr.mxu0 0.0
        %5500 = vmatpush1.msra.mxu0 0.0
        %5501 = vmatprep.subr.mxu0 0.0
        %5502 = vmatpush1.msra.mxu0 0.0
        %5503 = vmatprep.subr.mxu0 0.0
        %5504 = vmatpush1.msra.mxu0 0.0
        %5505 = vmatprep.subr.mxu0 0.0
        %5506 = vmatpush1.msra.mxu0 0.0
        %5507 = vmatprep.mubr.f32.mxu0 0.0
        %v5508 = vand.u32 %v5341, 4294901760
        %5509 = vmatmul.mubr.f32.gmra.mrb[0].mxu0 %v5508
        %v5510 = vpop.f32.mrb[0].mxu0
        %v5511 = vadd.f32 %v5420, %v5510
        %v5512 = vpop.f32.mrb[0].mxu0
        %5513 = vmatprep.mubr.f32.mxu0 0.0
        %v5514 = vand.u32 %v5344, 4294901760
        %5515 = vmatmul.mubr.f32.gmra.mrb[0].mxu0 %v5514
        %v5516 = vpop.f32.mrb[0].mxu0
        %v5517 = vadd.f32 %v5430, %v5516
        %v5518 = vpop.f32.mrb[0].mxu0
        %5519 = vdwg.mxu0
        %5520 = vmatprep.subr.mxu0 0.0
        %v5521 = vand.u32 %v466, 4294901760
        %v5522 = vsub.f32 %v466, %v5521
        %5523 = vmatpush1.msra.mxu0 %v5522
        %5524 = vmatprep.subr.mxu0 0.0
        %v5525 = vand.u32 %v467, 4294901760
        %v5526 = vsub.f32 %v467, %v5525
        %5527 = vmatpush1.msra.mxu0 %v5526
        %5528 = vmatprep.subr.mxu0 0.0
        %5529 = vmatpush1.msra.mxu0 0.0
        %5530 = vmatprep.subr.mxu0 0.0
        %5531 = vmatpush1.msra.mxu0 0.0
        %5532 = vmatprep.subr.mxu0 0.0
        %5533 = vmatpush1.msra.mxu0 0.0
        %5534 = vmatprep.subr.mxu0 0.0
        %5535 = vmatpush1.msra.mxu0 0.0
        %5536 = vmatprep.subr.mxu0 0.0
        %5537 = vmatpush1.msra.mxu0 0.0
        %5538 = vmatprep.subr.mxu0 0.0
        %5539 = vmatpush1.msra.mxu0 0.0
        %5540 = vmatprep.subr.mxu0 0.0
        %5541 = vmatpush1.msra.mxu0 0.0
        %5542 = vmatprep.subr.mxu0 0.0
        %5543 = vmatpush1.msra.mxu0 0.0
        %5544 = vmatprep.subr.mxu0 0.0
        %5545 = vmatpush1.msra.mxu0 0.0
        %5546 = vmatprep.subr.mxu0 0.0
        %5547 = vmatpush1.msra.mxu0 0.0
        %5548 = vmatprep.subr.mxu0 0.0
        %5549 = vmatpush1.msra.mxu0 0.0
        %5550 = vmatprep.subr.mxu0 0.0
        %5551 = vmatpush1.msra.mxu0 0.0
        %5552 = vmatprep.subr.mxu0 0.0
        %5553 = vmatpush1.msra.mxu0 0.0
        %5554 = vmatprep.subr.mxu0 0.0
        %5555 = vmatpush1.msra.mxu0 0.0
        %5556 = vmatprep.subr.mxu0 0.0
        %5557 = vmatpush1.msra.mxu0 0.0
        %5558 = vmatprep.subr.mxu0 0.0
        %5559 = vmatpush1.msra.mxu0 0.0
        %5560 = vmatprep.subr.mxu0 0.0
        %5561 = vmatpush1.msra.mxu0 0.0
        %5562 = vmatprep.subr.mxu0 0.0
        %5563 = vmatpush1.msra.mxu0 0.0
        %5564 = vmatprep.subr.mxu0 0.0
        %5565 = vmatpush1.msra.mxu0 0.0
        %5566 = vmatprep.subr.mxu0 0.0
        %5567 = vmatpush1.msra.mxu0 0.0
        %5568 = vmatprep.subr.mxu0 0.0
        %5569 = vmatpush1.msra.mxu0 0.0
        %5570 = vmatprep.subr.mxu0 0.0
        %5571 = vmatpush1.msra.mxu0 0.0
        %5572 = vmatprep.subr.mxu0 0.0
        %5573 = vmatpush1.msra.mxu0 0.0
        %5574 = vmatprep.subr.mxu0 0.0
        %5575 = vmatpush1.msra.mxu0 0.0
        %5576 = vmatprep.subr.mxu0 0.0
        %5577 = vmatpush1.msra.mxu0 0.0
        %5578 = vmatprep.subr.mxu0 0.0
        %5579 = vmatpush1.msra.mxu0 0.0
        %5580 = vmatprep.subr.mxu0 0.0
        %5581 = vmatpush1.msra.mxu0 0.0
        %5582 = vmatprep.subr.mxu0 0.0
        %5583 = vmatpush1.msra.mxu0 0.0
        %5584 = vmatprep.subr.mxu0 0.0
        %5585 = vmatpush1.msra.mxu0 0.0
        %5586 = vmatprep.subr.mxu0 0.0
        %5587 = vmatpush1.msra.mxu0 0.0
        %5588 = vmatprep.mubr.f32.mxu0 0.0
        %v5589 = vand.u32 %v5341, 4294901760
        %v5590 = vsub.f32 %v5341, %v5589
        %5591 = vmatmul.mubr.f32.gmra.mrb[0].mxu0 %v5590
        %v5592 = vpop.f32.mrb[0].mxu0
        %v5593 = vadd.f32 %v5511, %v5592
        %v5594 = vpop.f32.mrb[0].mxu0
        %5595 = vmatprep.mubr.f32.mxu0 0.0
        %v5596 = vand.u32 %v5344, 4294901760
        %v5597 = vsub.f32 %v5344, %v5596
        %5598 = vmatmul.mubr.f32.gmra.mrb[0].mxu0 %v5597
        %v5599 = vpop.f32.mrb[0].mxu0
        %v5600 = vadd.f32 %v5517, %v5599
        %v5601 = vpop.f32.mrb[0].mxu0
        %5602 = vdwg.mxu0
        %5603 = vmatprep.subr.mxu0 0.0
        %v5604 = vand.u32 %v466, 4294901760
        %5605 = vmatpush1.msra.mxu0 %v5604
        %5606 = vmatprep.subr.mxu0 0.0
        %v5607 = vand.u32 %v467, 4294901760
        %5608 = vmatpush1.msra.mxu0 %v5607
        %5609 = vmatprep.subr.mxu0 0.0
        %5610 = vmatpush1.msra.mxu0 0.0
        %5611 = vmatprep.subr.mxu0 0.0
        %5612 = vmatpush1.msra.mxu0 0.0
        %5613 = vmatprep.subr.mxu0 0.0
        %5614 = vmatpush1.msra.mxu0 0.0
        %5615 = vmatprep.subr.mxu0 0.0
        %5616 = vmatpush1.msra.mxu0 0.0
        %5617 = vmatprep.subr.mxu0 0.0
        %5618 = vmatpush1.msra.mxu0 0.0
        %5619 = vmatprep.subr.mxu0 0.0
        %5620 = vmatpush1.msra.mxu0 0.0
        %5621 = vmatprep.subr.mxu0 0.0
        %5622 = vmatpush1.msra.mxu0 0.0
        %5623 = vmatprep.subr.mxu0 0.0
        %5624 = vmatpush1.msra.mxu0 0.0
        %5625 = vmatprep.subr.mxu0 0.0
        %5626 = vmatpush1.msra.mxu0 0.0
        %5627 = vmatprep.subr.mxu0 0.0
        %5628 = vmatpush1.msra.mxu0 0.0
        %5629 = vmatprep.subr.mxu0 0.0
        %5630 = vmatpush1.msra.mxu0 0.0
        %5631 = vmatprep.subr.mxu0 0.0
        %5632 = vmatpush1.msra.mxu0 0.0
        %5633 = vmatprep.subr.mxu0 0.0
        %5634 = vmatpush1.msra.mxu0 0.0
        %5635 = vmatprep.subr.mxu0 0.0
        %5636 = vmatpush1.msra.mxu0 0.0
        %5637 = vmatprep.subr.mxu0 0.0
        %5638 = vmatpush1.msra.mxu0 0.0
        %5639 = vmatprep.subr.mxu0 0.0
        %5640 = vmatpush1.msra.mxu0 0.0
        %5641 = vmatprep.subr.mxu0 0.0
        %5642 = vmatpush1.msra.mxu0 0.0
        %5643 = vmatprep.subr.mxu0 0.0
        %5644 = vmatpush1.msra.mxu0 0.0
        %5645 = vmatprep.subr.mxu0 0.0
        %5646 = vmatpush1.msra.mxu0 0.0
        %5647 = vmatprep.subr.mxu0 0.0
        %5648 = vmatpush1.msra.mxu0 0.0
        %5649 = vmatprep.subr.mxu0 0.0
        %5650 = vmatpush1.msra.mxu0 0.0
        %5651 = vmatprep.subr.mxu0 0.0
        %5652 = vmatpush1.msra.mxu0 0.0
        %5653 = vmatprep.subr.mxu0 0.0
        %5654 = vmatpush1.msra.mxu0 0.0
        %5655 = vmatprep.subr.mxu0 0.0
        %5656 = vmatpush1.msra.mxu0 0.0
        %5657 = vmatprep.subr.mxu0 0.0
        %5658 = vmatpush1.msra.mxu0 0.0
        %5659 = vmatprep.subr.mxu0 0.0
        %5660 = vmatpush1.msra.mxu0 0.0
        %5661 = vmatprep.subr.mxu0 0.0
        %5662 = vmatpush1.msra.mxu0 0.0
        %5663 = vmatprep.subr.mxu0 0.0
        %5664 = vmatpush1.msra.mxu0 0.0
        %5665 = vmatprep.subr.mxu0 0.0
        %5666 = vmatpush1.msra.mxu0 0.0
        %5667 = vmatprep.subr.mxu0 0.0
        %5668 = vmatpush1.msra.mxu0 0.0
        %5669 = vmatprep.mubr.f32.mxu0 0.0
        %v5670 = vand.u32 %v5341, 4294901760
        %v5671 = vsub.f32 %v5341, %v5670
        %v5672 = vand.u32 %v5671, 4294901760
        %5673 = vmatmul.mubr.f32.gmra.mrb[0].mxu0 %v5672
        %v5674 = vpop.f32.mrb[0].mxu0
        %v5675 = vadd.f32 %v5593, %v5674
        %v5676 = vpop.f32.mrb[0].mxu0
        %5677 = vmatprep.mubr.f32.mxu0 0.0
        %v5678 = vand.u32 %v5344, 4294901760
        %v5679 = vsub.f32 %v5344, %v5678
        %v5680 = vand.u32 %v5679, 4294901760
        %5681 = vmatmul.mubr.f32.gmra.mrb[0].mxu0 %v5680
        %v5682 = vpop.f32.mrb[0].mxu0
        %v5683 = vadd.f32 %v5600, %v5682
        %v5684 = vpop.f32.mrb[0].mxu0
        %5685 = vdwg.mxu0
        %5686 = vmatprep.subr.mxu0 0.0
        %v5687 = vand.u32 %v466, 4294901760
        %v5688 = vsub.f32 %v466, %v5687
        %v5689 = vand.u32 %v5688, 4294901760
        %5690 = vmatpush1.msra.mxu0 %v5689
        %5691 = vmatprep.subr.mxu0 0.0
        %v5692 = vand.u32 %v467, 4294901760
        %v5693 = vsub.f32 %v467, %v5692
        %v5694 = vand.u32 %v5693, 4294901760
        %5695 = vmatpush1.msra.mxu0 %v5694
        %5696 = vmatprep.subr.mxu0 0.0
        %5697 = vmatpush1.msra.mxu0 0.0
        %5698 = vmatprep.subr.mxu0 0.0
        %5699 = vmatpush1.msra.mxu0 0.0
        %5700 = vmatprep.subr.mxu0 0.0
        %5701 = vmatpush1.msra.mxu0 0.0
        %5702 = vmatprep.subr.mxu0 0.0
        %5703 = vmatpush1.msra.mxu0 0.0
        %5704 = vmatprep.subr.mxu0 0.0
        %5705 = vmatpush1.msra.mxu0 0.0
        %5706 = vmatprep.subr.mxu0 0.0
        %5707 = vmatpush1.msra.mxu0 0.0
        %5708 = vmatprep.subr.mxu0 0.0
        %5709 = vmatpush1.msra.mxu0 0.0
        %5710 = vmatprep.subr.mxu0 0.0
        %5711 = vmatpush1.msra.mxu0 0.0
        %5712 = vmatprep.subr.mxu0 0.0
        %5713 = vmatpush1.msra.mxu0 0.0
        %5714 = vmatprep.subr.mxu0 0.0
        %5715 = vmatpush1.msra.mxu0 0.0
        %5716 = vmatprep.subr.mxu0 0.0
        %5717 = vmatpush1.msra.mxu0 0.0
        %5718 = vmatprep.subr.mxu0 0.0
        %5719 = vmatpush1.msra.mxu0 0.0
        %5720 = vmatprep.subr.mxu0 0.0
        %5721 = vmatpush1.msra.mxu0 0.0
        %5722 = vmatprep.subr.mxu0 0.0
        %5723 = vmatpush1.msra.mxu0 0.0
        %5724 = vmatprep.subr.mxu0 0.0
        %5725 = vmatpush1.msra.mxu0 0.0
        %5726 = vmatprep.subr.mxu0 0.0
        %5727 = vmatpush1.msra.mxu0 0.0
        %5728 = vmatprep.subr.mxu0 0.0
        %5729 = vmatpush1.msra.mxu0 0.0
        %5730 = vmatprep.subr.mxu0 0.0
        %5731 = vmatpush1.msra.mxu0 0.0
        %5732 = vmatprep.subr.mxu0 0.0
        %5733 = vmatpush1.msra.mxu0 0.0
        %5734 = vmatprep.subr.mxu0 0.0
        %5735 = vmatpush1.msra.mxu0 0.0
        %5736 = vmatprep.subr.mxu0 0.0
        %5737 = vmatpush1.msra.mxu0 0.0
        %5738 = vmatprep.subr.mxu0 0.0
        %5739 = vmatpush1.msra.mxu0 0.0
        %5740 = vmatprep.subr.mxu0 0.0
        %5741 = vmatpush1.msra.mxu0 0.0
        %5742 = vmatprep.subr.mxu0 0.0
        %5743 = vmatpush1.msra.mxu0 0.0
        %5744 = vmatprep.subr.mxu0 0.0
        %5745 = vmatpush1.msra.mxu0 0.0
        %5746 = vmatprep.subr.mxu0 0.0
        %5747 = vmatpush1.msra.mxu0 0.0
        %5748 = vmatprep.subr.mxu0 0.0
        %5749 = vmatpush1.msra.mxu0 0.0
        %5750 = vmatprep.subr.mxu0 0.0
        %5751 = vmatpush1.msra.mxu0 0.0
        %5752 = vmatprep.subr.mxu0 0.0
        %5753 = vmatpush1.msra.mxu0 0.0
        %5754 = vmatprep.subr.mxu0 0.0
        %5755 = vmatpush1.msra.mxu0 0.0
        %5756 = vmatprep.mubr.f32.mxu0 0.0
        %v5757 = vand.u32 %v5341, 4294901760
        %5758 = vmatmul.mubr.f32.gmra.mrb[0].mxu0 %v5757
        %v5759 = vpop.f32.mrb[0].mxu0
        %v5760 = vadd.f32 %v5675, %v5759
        %v5761 = vpop.f32.mrb[0].mxu0
        %5762 = vmatprep.mubr.f32.mxu0 0.0
        %v5763 = vand.u32 %v5344, 4294901760
        %5764 = vmatmul.mubr.f32.gmra.mrb[0].mxu0 %v5763
        %v5765 = vpop.f32.mrb[0].mxu0
        %v5766 = vadd.f32 %v5683, %v5765
        %v5767 = vpop.f32.mrb[0].mxu0
        %5768 = vdwg.mxu0
        %5769 = vmatprep.subr.mxu0 0.0
        %v5770 = vand.u32 %v466, 4294901760
        %5771 = vmatpush1.msra.mxu0 %v5770
        %5772 = vmatprep.subr.mxu0 0.0
        %v5773 = vand.u32 %v467, 4294901760
        %5774 = vmatpush1.msra.mxu0 %v5773
        %5775 = vmatprep.subr.mxu0 0.0
        %5776 = vmatpush1.msra.mxu0 0.0
        %5777 = vmatprep.subr.mxu0 0.0
        %5778 = vmatpush1.msra.mxu0 0.0
        %5779 = vmatprep.subr.mxu0 0.0
        %5780 = vmatpush1.msra.mxu0 0.0
        %5781 = vmatprep.subr.mxu0 0.0
        %5782 = vmatpush1.msra.mxu0 0.0
        %5783 = vmatprep.subr.mxu0 0.0
        %5784 = vmatpush1.msra.mxu0 0.0
        %5785 = vmatprep.subr.mxu0 0.0
        %5786 = vmatpush1.msra.mxu0 0.0
        %5787 = vmatprep.subr.mxu0 0.0
        %5788 = vmatpush1.msra.mxu0 0.0
        %5789 = vmatprep.subr.mxu0 0.0
        %5790 = vmatpush1.msra.mxu0 0.0
        %5791 = vmatprep.subr.mxu0 0.0
        %5792 = vmatpush1.msra.mxu0 0.0
        %5793 = vmatprep.subr.mxu0 0.0
        %5794 = vmatpush1.msra.mxu0 0.0
        %5795 = vmatprep.subr.mxu0 0.0
        %5796 = vmatpush1.msra.mxu0 0.0
        %5797 = vmatprep.subr.mxu0 0.0
        %5798 = vmatpush1.msra.mxu0 0.0
        %5799 = vmatprep.subr.mxu0 0.0
        %5800 = vmatpush1.msra.mxu0 0.0
        %5801 = vmatprep.subr.mxu0 0.0
        %5802 = vmatpush1.msra.mxu0 0.0
        %5803 = vmatprep.subr.mxu0 0.0
        %5804 = vmatpush1.msra.mxu0 0.0
        %5805 = vmatprep.subr.mxu0 0.0
        %5806 = vmatpush1.msra.mxu0 0.0
        %5807 = vmatprep.subr.mxu0 0.0
        %5808 = vmatpush1.msra.mxu0 0.0
        %5809 = vmatprep.subr.mxu0 0.0
        %5810 = vmatpush1.msra.mxu0 0.0
        %5811 = vmatprep.subr.mxu0 0.0
        %5812 = vmatpush1.msra.mxu0 0.0
        %5813 = vmatprep.subr.mxu0 0.0
        %5814 = vmatpush1.msra.mxu0 0.0
        %5815 = vmatprep.subr.mxu0 0.0
        %5816 = vmatpush1.msra.mxu0 0.0
        %5817 = vmatprep.subr.mxu0 0.0
        %5818 = vmatpush1.msra.mxu0 0.0
        %5819 = vmatprep.subr.mxu0 0.0
        %5820 = vmatpush1.msra.mxu0 0.0
        %5821 = vmatprep.subr.mxu0 0.0
        %5822 = vmatpush1.msra.mxu0 0.0
        %5823 = vmatprep.subr.mxu0 0.0
        %5824 = vmatpush1.msra.mxu0 0.0
        %5825 = vmatprep.subr.mxu0 0.0
        %5826 = vmatpush1.msra.mxu0 0.0
        %5827 = vmatprep.subr.mxu0 0.0
        %5828 = vmatpush1.msra.mxu0 0.0
        %5829 = vmatprep.subr.mxu0 0.0
        %5830 = vmatpush1.msra.mxu0 0.0
        %5831 = vmatprep.subr.mxu0 0.0
        %5832 = vmatpush1.msra.mxu0 0.0
        %5833 = vmatprep.subr.mxu0 0.0
        %5834 = vmatpush1.msra.mxu0 0.0
        %5835 = vmatprep.mubr.f32.mxu0 0.0
        %v5836 = vand.u32 %v5341, 4294901760
        %5837 = vmatmul.mubr.f32.gmra.mrb[0].mxu0 %v5836
        %v5838 = vpop.f32.mrb[0].mxu0
        %v5839 = vadd.f32 %v5760, %v5838
        %v5840 = vpop.f32.mrb[0].mxu0
        %5841 = vmatprep.mubr.f32.mxu0 0.0
        %v5842 = vand.u32 %v5344, 4294901760
        %5843 = vmatmul.mubr.f32.gmra.mrb[0].mxu0 %v5842
        %v5844 = vpop.f32.mrb[0].mxu0
        %v5845 = vadd.f32 %v5766, %v5844
        %v5846 = vpop.f32.mrb[0].mxu0
        %5847 = vdwg.mxu0
        %v5848 = vadd.f32 %v5839, %v454
        %v5849 = vadd.f32 %v5845, %v455
        %v5852 = vrot.slane %v5849, 7
        %vm5853 = vcmask 1041409
        %v5854 = vsel %vm5853, %v5852, %v5848
        %v5856 = vrot.slane %v5848, 1
        %v5857 = vsel %vm5853, %v5849, %v5856
        %5858 = vrot.lane.b32.xlu0 %v5857, 32
        %v5859 = vpop.permute.xlu0 %5858
        %v5861 = vrot.slane %v5848, 2
        %v5862 = vrot.slane %v5849, 1
        %v5863 = vsel %vm5853, %v5862, %v5861
        %5864 = vrot.lane.b32.xlu0 %v5863, 64
        %v5865 = vpop.permute.xlu0 %5864
        %v5867 = vrot.slane %v5848, 3
        %v5868 = vrot.slane %v5849, 2
        %v5869 = vsel %vm5853, %v5868, %v5867
        %5870 = vrot.lane.b32.xlu0 %v5869, 96
        %v5871 = vpop.permute.xlu0 %5870
        %v5873 = vrot.slane %v5848, 4
        %v5874 = vrot.slane %v5849, 3
        %v5875 = vsel %vm5853, %v5874, %v5873
        %v5877 = vrot.slane %v5848, 5
        %v5878 = vrot.slane %v5849, 4
        %v5879 = vsel %vm5853, %v5878, %v5877
        %5880 = vrot.lane.b32.xlu0 %v5879, 32
        %v5881 = vpop.permute.xlu0 %5880
        %v5883 = vrot.slane %v5848, 6
        %v5884 = vrot.slane %v5849, 5
        %v5885 = vsel %vm5853, %v5884, %v5883
        %5886 = vrot.lane.b32.xlu0 %v5885, 64
        %v5887 = vpop.permute.xlu0 %5886
        %v5889 = vrot.slane %v5848, 7
        %v5890 = vrot.slane %v5849, 6
        %v5891 = vsel %vm5853, %v5890, %v5889
        %5892 = vrot.lane.b32.xlu0 %v5891, 96
        %v5893 = vpop.permute.xlu0 %5892
        %v5895 = vsel %vm472, %v5854, %v5859
        %vm5896 = vcmask 523264
        %v5897 = vsel %vm5896, %v5895, %v5865
        %vm5898 = vcmask 785408
        %v5899 = vsel %vm5898, %v5897, %v5871
        %v5900 = vsel %vm472, %v5875, %v5881
        %v5901 = vsel %vm5896, %v5900, %v5887
        %v5902 = vsel %vm5898, %v5901, %v5893
        %v5905 = vcombine.low %v5899, %v5902
        %v5907 = vunpack.c.l.s4 1983009808
        %v5908 = vunpack.c.0.s8 %v5907
        %v5909 = vlaneseq
        %v5910 = vshrl.u32 %v5909, 7
        %v5911 = vsub.s32 %v5908, %v5910
        %v5912 = vrot.slane %v5905, %v5911
        %5914 = vst [vmem:[%s447] sm:$0xf] %v5912
        %s5915 = sand.u32 %s213, 1
        %s5916 = scalar_lea.sflag [#allocation4], %s5915
        %s5917 = sand.u32 %s213, 1
        %s5918 = smul.addr %s5917, 4
        %s5919 = scalar_lea.vmem [#allocation11], %s5918
        // Predicated region
        $region69: #{tpu_custom_call.1} parent=47 // pred_check
          %p5920 = pneg %p223
        $region70: #{tpu_custom_call.1} parent=47 // pred_check_branch
          %5922 = sbr.rel (%p5920) target = $region72
        $region71: #{tpu_custom_call.1} parent=47 // pred_region
          %s5924 = ssub.s32 64, 64
          %5925 = vsyncadd %s5916, %s5924
          %s5926 = smul.addr %s28, 2
          %s5927 = smul.addr %s5926, 32
          %s5928 = scalar_lea.hbm %s7, %s5927
          %s5930 = sshll.u32 %s5919, 4
          %s5931 = int_to_ptr.vmem [resolvable:$true] %s5930
          %5933 = dma.vmem_to_hbm [thread:$0]  %s5931, 64, %s5928, %s5916
        $region72: #{tpu_custom_call.1} parent=47 // pred_fallthru
          _
      $region48: #{tpu_custom_call.1} parent=5 // pred_fallthru
        _
      %p5934 = scmp.le.s32.totalorder 2, %s23
      // Predicated region
      $region73: #{tpu_custom_call.1} parent=5 // pred_check
        %p5935 = pneg %p5934
      $region74: #{tpu_custom_call.1} parent=5 // pred_check_branch
        %5937 = sbr.rel (%p5935) target = $region76
      $region75: #{tpu_custom_call.1} parent=5 // pred_region
        %s5938 = ssub.s32 %s23, 2
        // Predicated region
        $region77: #{tpu_custom_call.1} parent=75 // pred_check
          %p5939 = pneg %p229
        $region78: #{tpu_custom_call.1} parent=75 // pred_check_branch
          %5941 = sbr.rel (%p5939) target = $region80
        $region79: #{tpu_custom_call.1} parent=75 // pred_region
          %s5942 = sand.u32 %s214, 1
          %s5943 = scalar_lea.sflag [#allocation4], %s5942
          %s5944 = sand.u32 %s214, 1
          %s5945 = smul.addr %s5944, 4
          %s5946 = scalar_lea.vmem [#allocation11], %s5945
          %5947 = dma.done %s5943, 64
        $region80: #{tpu_custom_call.1} parent=75 // pred_fallthru
          _
      $region76: #{tpu_custom_call.1} parent=5 // pred_fallthru
        _
    $region6: #{tpu_custom_call.1} parent=1 // loop_footer
      %s27 = sadd.s32 1, %s23
    $region7: #{tpu_custom_call.1} parent=1 // loop_footer_branch
      %22 = sbr.rel target = $region3
    $region8: #{tpu_custom_call.1} parent=1 // loop_exit
      _
    %5948 = vsyncpa [#allocation3], 1
    %s5949 = scalar_lea.sflag [#allocation3], 1
    %5950 = vsyncpa %s5949, 1
    %5951 = vsyncpa [#allocation6], 1
    %s5952 = scalar_lea.sflag [#allocation6], 1
    %5953 = vsyncpa %s5952, 1
    %5954 = vsyncpa [#allocation9], 1
    %s5955 = scalar_lea.sflag [#allocation9], 1
    %5956 = vsyncpa %s5955, 1
    %5957 = vsyncpa [#allocation4], 1
    %s5958 = scalar_lea.sflag [#allocation4], 1
    %5959 = vsyncpa %s5958, 1

</llo_original>
